<compile_context>
chip_gen: v5e
topology: v5e:2x2
jax: 0.10.0
libtpu: 0.0.40
codegen_flags: <defaults>
</compile_context>

<pallas_src>
import functools

import jax
import jax.numpy as jnp
from jax.experimental import pallas as pl
from jax.experimental.pallas import tpu as pltpu


def _round_up(x, m):
    return ((x + m - 1) // m) * m


def _local_stats_kernel(x_ref, w1_ref, w2_ref, aux_ref, o_ref, *, vpu_layer1):
    # x_ref  : (1, C, tm)  float32  (raw NCHW slab; cast in-kernel if needed)
    # w1_ref : (512, C)    float32 if vpu_layer1 else bfloat16
    # w2_ref : (512, 512)  bfloat16
    # aux_ref: (512, 4)    float32  columns = [b1 | b2 | w3 | b3 (replicated)]
    # o_ref  : (1, 1, tm)  float32  (lane-dense output block)
    x = x_ref[0]                          # (C, tm)
    C, tm = x.shape
    hid = w2_ref.shape[0]

    b1 = aux_ref[:, 0:1]                  # (hid, 1)
    b2 = aux_ref[:, 1:2]                  # (hid, 1)
    w3 = aux_ref[:, 2:3]                  # (hid, 1)
    b3 = aux_ref[0:1, 3:4]                # (1, 1)

    if vpu_layer1:
        # Layer 1 on the VPU: C unrolled broadcast-FMAs fused with the bias.
        # Avoids padding the MXU contraction dim from K=C up to 128/256.
        w1 = w1_ref[...]                  # (hid, C) f32
        h = b1 + w1[:, 0:1] * x[0:1, :]
        for c in range(1, C):
            h = h + w1[:, c:c + 1] * x[c:c + 1, :]
    else:
        # Layer 1 on the MXU for larger C: bf16 operands, f32 accumulation.
        h = jnp.dot(w1_ref[...], x.astype(w1_ref.dtype),
                    preferred_element_type=jnp.float32) + b1
    h = jnp.maximum(h, 0.0)

    # Layer 2 (512 x 512) on the MXU — the dominant cost. bf16 operands, f32 acc.
    h = jnp.dot(w2_ref[...], h.astype(jnp.bfloat16),
                preferred_element_type=jnp.float32) + b2
    h = jnp.maximum(h, 0.0)

    # Layer 3 (512 -> 1): VPU broadcast-multiply + sublane reduction; a 1-wide
    # MXU matmul would spend full weight-tile passes on the binding unit.
    out = jnp.sum(h * w3, axis=0, keepdims=True) + b3          # (1, tm)
    o_ref[...] = out.reshape(o_ref.shape).astype(o_ref.dtype)


def local_statistics_network(x_nchw, params, *, tm=2048):
    """x_nchw: (B, C, H, W) float32. Returns (B, 1, H, W) float32.

    params: Conv2d-style (out, in) weights and (out,) biases:
      w1 (512, C), b1 (512,), w2 (512, 512), b2 (512,), w3 (1, 512), b3 (1,)
    """
    w1, b1, w2, b2, w3, b3 = params
    B, C, H, W = x_nchw.shape
    hid = w1.shape[0]
    HW = H * W

    # NCHW is already feature-major per batch element; this reshape is free
    # (no transpose / pad / cast copies of x in HBM outside the kernel).
    x3d = x_nchw.reshape(B, C, HW).astype(jnp.float32)

    # Column tile: large to amortize the ~0.35us per-grid-step overhead, capped
    # at 2048 so per-step intermediates (~5 MB / 1024 cols) fit a 48 MB VMEM
    # budget (v7x has 64 MiB physical), and shrunk for small inputs so the grid
    # keeps >= ~8 steps (DMA/compute overlap, megacore split on v7x).
    tm = min(tm, 2048)
    steps_per_batch = max(1, -(-8 // B))                       # ceil(8 / B)
    tm = min(tm, max(128, _round_up(-(-HW // steps_per_batch), 128)))
    n_tiles = pl.cdiv(HW, tm)

    # Tiny contraction dim -> do layer 1 on the VPU to avoid MXU K-padding.
    vpu_layer1 = C <= 8

    w1c = w1.astype(jnp.float32 if vpu_layer1 else jnp.bfloat16)   # (hid, C)
    w2c = w2.astype(jnp.bfloat16)                                  # (hid, hid)
    # Pack the four tiny column operands into a single (hid, 4) f32 tile: one
    # DMA + one lane-padded VMEM tile instead of four separate (hid,1)/(1,1).
    aux = jnp.stack(
        [b1.reshape(hid).astype(jnp.float32),
         b2.reshape(hid).astype(jnp.float32),
         w3.reshape(hid).astype(jnp.float32),
         jnp.broadcast_to(b3.reshape(1).astype(jnp.float32), (hid,))],
        axis=1)                                                    # (hid, 4)

    M = B * HW
    flops = 2 * M * (hid * C + hid * hid + hid)
    bytes_accessed = (x3d.size * 4 + M * 4
                      + w1c.size * (4 if vpu_layer1 else 2)
                      + w2c.size * 2 + aux.size * 4)
    cost = pl.CostEstimate(flops=flops, transcendentals=0,
                           bytes_accessed=bytes_accessed)

    kernel = functools.partial(_local_stats_kernel, vpu_layer1=vpu_layer1)

    # NOTE: the grid-invariant operands (w1, w2, aux) could additionally use
    # pipeline_mode=pl.Buffered(1) to drop their second VMEM buffer (~1 MB);
    # left at the default since VMEM is not the binding resource at tm <= 2048.
    out3d = pl.pallas_call(
        kernel,
        out_shape=jax.ShapeDtypeStruct((B, 1, HW), jnp.float32),
        grid_spec=pltpu.PrefetchScalarGridSpec(
            num_scalar_prefetch=0,
            grid=(B, n_tiles),
            in_specs=[
                pl.BlockSpec((1, C, tm), lambda b, j: (b, 0, j)),   # x slab
                pl.BlockSpec((hid, C), lambda b, j: (0, 0)),        # W1 (full)
                pl.BlockSpec((hid, hid), lambda b, j: (0, 0)),      # W2 (full)
                pl.BlockSpec((hid, 4), lambda b, j: (0, 0)),        # b1|b2|w3|b3
            ],
            out_specs=pl.BlockSpec((1, 1, tm), lambda b, j: (b, 0, j)),
        ),
        compiler_params=pltpu.CompilerParams(
            dimension_semantics=("parallel", "parallel"),
            vmem_limit_bytes=48 * 1024 * 1024,
        ),
        cost_estimate=cost,
    )(x3d, w1c, w2c, aux)

    return out3d.reshape(B, 1, H, W)


def init_params(key, img_feature_channels, hidden=512):
    """Deterministic synthetic parameters matching the Conv2d(1x1) shapes
    (weight (out, in, 1, 1) squeezed to (out, in), bias (out,))."""
    k1, k2, k3, k4, k5, k6 = jax.random.split(key, 6)
    w1 = jax.random.normal(k1, (hidden, img_feature_channels), jnp.float32) * 0.05
    b1 = jax.random.normal(k2, (hidden,), jnp.float32) * 0.05
    w2 = jax.random.normal(k3, (hidden, hidden), jnp.float32) * 0.05
    b2 = jax.random.normal(k4, (hidden,), jnp.float32) * 0.05
    w3 = jax.random.normal(k5, (1, hidden), jnp.float32) * 0.05
    b3 = jax.random.normal(k6, (1,), jnp.float32) * 0.05
    return (w1, b1, w2, b2, w3, b3)


def _reference(x_nchw, params):
    """Pure-JAX f32 reference of the PyTorch forward (1x1 convs as matmuls)."""
    w1, b1, w2, b2, w3, b3 = params
    B, C, H, W = x_nchw.shape
    x = x_nchw.reshape(B, C, H * W)
    h = jnp.maximum(jnp.einsum('oc,bcm->bom', w1, x) + b1[None, :, None], 0.0)
    h = jnp.maximum(jnp.einsum('oc,bcm->bom', w2, h) + b2[None, :, None], 0.0)
    y = jnp.einsum('oc,bcm->bom', w3, h) + b3[None, :, None]
    return y.reshape(B, 1, H, W)


if __name__ == "__main__":
    key = jax.random.PRNGKey(0)
    kx, kp = jax.random.split(key)

    B, C, H, W = 2, 4, 16, 16   # H*W = 256 -> tm=128, grid (2, 2)
    x = jax.random.normal(kx, (B, C, H, W), jnp.float32)
    params = init_params(kp, img_feature_channels=C)

    out = local_statistics_network(x, params)
    out = jax.block_until_ready(out)

    ref = _reference(x, params)
    assert out.shape == (B, 1, H, W)
    # Layer 1 is exact f32 (VPU path); layer 2 uses bf16 MXU operands with f32
    # accumulation -> small drift vs the f32 reference.
    assert jnp.allclose(out, ref, atol=2e-2, rtol=2e-2), float(
        jnp.max(jnp.abs(out - ref)))

    print("KERNEL_OK")
</pallas_src>

<mosaic_0001>
module attributes {stable_mosaic.version = 11 : i64} {
  func.func @_local_stats_kernel(%arg0: i32, %arg1: i32, %arg2: memref<1x4x128xf32, #tpu.memory_space<vmem>>, %arg3: memref<512x4xf32, #tpu.memory_space<vmem>>, %arg4: memref<512x512xbf16, #tpu.memory_space<vmem>>, %arg5: memref<512x4xf32, #tpu.memory_space<vmem>>, %arg6: memref<1x1x128xf32, #tpu.memory_space<vmem>>) attributes {dimension_semantics = [#tpu.dimension_semantics<parallel>, #tpu.dimension_semantics<parallel>], iteration_bounds = array<i64: 2, 2>, scalar_prefetch = 0 : i64, scratch_operands = 0 : i64, tpu.core_type = #tpu.core_type<tc>, window_params = [{transform_indices = @transform_0, window_bounds = array<i64: 1, 4, 128>}, {pipeline_mode = #tpu.pipeline_mode<synchronous>, transform_indices = @transform_1, window_bounds = array<i64: 512, 4>}, {pipeline_mode = #tpu.pipeline_mode<synchronous>, transform_indices = @transform_2, window_bounds = array<i64: 512, 512>}, {pipeline_mode = #tpu.pipeline_mode<synchronous>, transform_indices = @transform_3, window_bounds = array<i64: 512, 4>}, {transform_indices = @transform_4, window_bounds = array<i64: 1, 1, 128>}]} {
    %c0 = arith.constant 0 : index
    %c0_0 = arith.constant 0 : index
    %c0_1 = arith.constant 0 : index
    %0 = vector.load %arg2[%c0, %c0_0, %c0_1] : memref<1x4x128xf32, #tpu.memory_space<vmem>>, vector<1x4x128xf32>
    %1 = vector.shape_cast %0 : vector<1x4x128xf32> to vector<4x128xf32>
    %c0_2 = arith.constant 0 : index
    %c0_3 = arith.constant 0 : index
    %2 = vector.load %arg5[%c0_2, %c0_3] : memref<512x4xf32, #tpu.memory_space<vmem>>, vector<512x1xf32>
    %c0_4 = arith.constant 0 : index
    %c1 = arith.constant 1 : index
    %3 = vector.load %arg5[%c0_4, %c1] : memref<512x4xf32, #tpu.memory_space<vmem>>, vector<512x1xf32>
    %c0_5 = arith.constant 0 : index
    %c2 = arith.constant 2 : index
    %4 = vector.load %arg5[%c0_5, %c2] : memref<512x4xf32, #tpu.memory_space<vmem>>, vector<512x1xf32>
    %c0_6 = arith.constant 0 : index
    %c3 = arith.constant 3 : index
    %5 = vector.load %arg5[%c0_6, %c3] : memref<512x4xf32, #tpu.memory_space<vmem>>, vector<1x1xf32>
    %c0_7 = arith.constant 0 : index
    %c0_8 = arith.constant 0 : index
    %6 = vector.load %arg3[%c0_7, %c0_8] : memref<512x4xf32, #tpu.memory_space<vmem>>, vector<512x4xf32>
    %7 = vector.extract_strided_slice %6 {offsets = [0, 0], sizes = [512, 1], strides = [1, 1]} : vector<512x4xf32> to vector<512x1xf32>
    %8 = vector.extract_strided_slice %1 {offsets = [0, 0], sizes = [1, 128], strides = [1, 1]} : vector<4x128xf32> to vector<1x128xf32>
    %9 = vector.broadcast %7 : vector<512x1xf32> to vector<512x128xf32>
    %10 = vector.broadcast %8 : vector<1x128xf32> to vector<512x128xf32>
    %11 = arith.mulf %9, %10 : vector<512x128xf32>
    %12 = vector.broadcast %2 : vector<512x1xf32> to vector<512x128xf32>
    %13 = arith.addf %12, %11 : vector<512x128xf32>
    %14 = vector.extract_strided_slice %6 {offsets = [0, 1], sizes = [512, 1], strides = [1, 1]} : vector<512x4xf32> to vector<512x1xf32>
    %15 = vector.extract_strided_slice %1 {offsets = [1, 0], sizes = [1, 128], strides = [1, 1]} : vector<4x128xf32> to vector<1x128xf32>
    %16 = vector.broadcast %14 : vector<512x1xf32> to vector<512x128xf32>
    %17 = vector.broadcast %15 : vector<1x128xf32> to vector<512x128xf32>
    %18 = arith.mulf %16, %17 : vector<512x128xf32>
    %19 = arith.addf %13, %18 : vector<512x128xf32>
    %20 = vector.extract_strided_slice %6 {offsets = [0, 2], sizes = [512, 1], strides = [1, 1]} : vector<512x4xf32> to vector<512x1xf32>
    %21 = vector.extract_strided_slice %1 {offsets = [2, 0], sizes = [1, 128], strides = [1, 1]} : vector<4x128xf32> to vector<1x128xf32>
    %22 = vector.broadcast %20 : vector<512x1xf32> to vector<512x128xf32>
    %23 = vector.broadcast %21 : vector<1x128xf32> to vector<512x128xf32>
    %24 = arith.mulf %22, %23 : vector<512x128xf32>
    %25 = arith.addf %19, %24 : vector<512x128xf32>
    %26 = vector.extract_strided_slice %6 {offsets = [0, 3], sizes = [512, 1], strides = [1, 1]} : vector<512x4xf32> to vector<512x1xf32>
    %27 = vector.extract_strided_slice %1 {offsets = [3, 0], sizes = [1, 128], strides = [1, 1]} : vector<4x128xf32> to vector<1x128xf32>
    %28 = vector.broadcast %26 : vector<512x1xf32> to vector<512x128xf32>
    %29 = vector.broadcast %27 : vector<1x128xf32> to vector<512x128xf32>
    %30 = arith.mulf %28, %29 : vector<512x128xf32>
    %31 = arith.addf %25, %30 : vector<512x128xf32>
    %cst = arith.constant 0.000000e+00 : f32
    %32 = vector.broadcast %cst : f32 to vector<512x128xf32>
    %33 = arith.maximumf %31, %32 : vector<512x128xf32>
    %c0_9 = arith.constant 0 : index
    %c0_10 = arith.constant 0 : index
    %34 = vector.load %arg4[%c0_9, %c0_10] : memref<512x512xbf16, #tpu.memory_space<vmem>>, vector<512x512xbf16>
    %35 = arith.truncf %33 : vector<512x128xf32> to vector<512x128xbf16>
    %cst_11 = arith.constant dense<0.000000e+00> : vector<512x128xf32>
    %36 = tpu.matmul %34, %35, %cst_11 {dimension_numbers = #tpu.dot_dimension_numbers<[1], [0], [0], [1], [0, 0, 1, 1], [], []>} : vector<512x512xbf16>, vector<512x128xbf16>, vector<512x128xf32> -> vector<512x128xf32>
    %37 = vector.broadcast %3 : vector<512x1xf32> to vector<512x128xf32>
    %38 = arith.addf %36, %37 : vector<512x128xf32>
    %cst_12 = arith.constant 0.000000e+00 : f32
    %39 = vector.broadcast %cst_12 : f32 to vector<512x128xf32>
    %40 = arith.maximumf %38, %39 : vector<512x128xf32>
    %41 = vector.broadcast %4 : vector<512x1xf32> to vector<512x128xf32>
    %42 = arith.mulf %40, %41 : vector<512x128xf32>
    %cst_13 = arith.constant dense<0.000000e+00> : vector<128xf32>
    %43 = vector.multi_reduction <add>, %42, %cst_13 [0] : vector<512x128xf32> to vector<128xf32>
    %44 = vector.shape_cast %43 : vector<128xf32> to vector<1x128xf32>
    %45 = vector.broadcast %5 : vector<1x1xf32> to vector<1x128xf32>
    %46 = arith.addf %44, %45 : vector<1x128xf32>
    %47 = vector.shape_cast %46 : vector<1x128xf32> to vector<1x1x128xf32>
    %c0_14 = arith.constant 0 : index
    %c0_15 = arith.constant 0 : index
    %c0_16 = arith.constant 0 : index
    %48 = vector.load %arg6[%c0_14, %c0_15, %c0_16] : memref<1x1x128xf32, #tpu.memory_space<vmem>>, vector<1x1x128xf32>
    tpu.vector_store %arg6[%c0_14, %c0_15, %c0_16], %47 {strides = array<i32>} : memref<1x1x128xf32, #tpu.memory_space<vmem>>, vector<1x1x128xf32>,
    return
  }
  func.func @transform_0(%arg0: i32, %arg1: i32) -> (i32, i32, i32) {
    %c0_i32 = arith.constant 0 : i32
    %c0_i32_0 = arith.constant 0 : i32
    return %arg0, %c0_i32, %arg1 : i32, i32, i32
  }
  func.func @transform_1(%arg0: i32, %arg1: i32) -> (i32, i32) {
    %c0_i32 = arith.constant 0 : i32
    %c0_i32_0 = arith.constant 0 : i32
    %c0_i32_1 = arith.constant 0 : i32
    return %c0_i32, %c0_i32_0 : i32, i32
  }
  func.func @transform_2(%arg0: i32, %arg1: i32) -> (i32, i32) {
    %c0_i32 = arith.constant 0 : i32
    %c0_i32_0 = arith.constant 0 : i32
    %c0_i32_1 = arith.constant 0 : i32
    return %c0_i32, %c0_i32_0 : i32, i32
  }
  func.func @transform_3(%arg0: i32, %arg1: i32) -> (i32, i32) {
    %c0_i32 = arith.constant 0 : i32
    %c0_i32_0 = arith.constant 0 : i32
    %c0_i32_1 = arith.constant 0 : i32
    return %c0_i32, %c0_i32_0 : i32, i32
  }
  func.func @transform_4(%arg0: i32, %arg1: i32) -> (i32, i32, i32) {
    %c0_i32 = arith.constant 0 : i32
    %c0_i32_0 = arith.constant 0 : i32
    return %arg0, %c0_i32, %arg1 : i32, i32, i32
  }
}

</mosaic_0001>

<llo_original>
// kernel: tpu_custom_call.1
$region0: #{tpu_custom_call.1}
  #allocation0 [shape = 'u32[]', space=smem, size = 0x4, offset = 0x4, fixed_abs, tag = 'smem constant byte address 0x4 - core index']
  #allocation1 [shape = 'u32[72,128]{1,0:T(1,128)}', space=vmem, size = 0x9000, scoped, tag = 'internal scratch']
  %s0 = inlined_call_operand.vmem [shape: f32[2,4,256], index: 0, kind: input, shape index: {}]
  %s1 = inlined_call_operand.vmem [shape: f32[512,4], index: 1, kind: input, shape index: {}]
  %s2 = inlined_call_operand.vmem [shape: bf16[512,512], index: 2, kind: input, shape index: {}]
  %s3 = inlined_call_operand.vmem [shape: f32[512,4], index: 3, kind: input, shape index: {}]
  %s4 = inlined_call_operand.hbm [shape: f32[2,1,256], index: 4, kind: output, shape index: {}]
  %s5 = sld [smem:[#allocation0]]
  $region49: #{tpu_custom_call.1} parent=0
    _
  %s7 = ssub.s32 1, %s5
  %s8 = scalar_select 0, %s7, %s5
  $region1: #{tpu_custom_call.1} parent=0
    #allocation2 [shape = 'u8[1024]{0}', space=vmem, size = 0x400, scoped, tag = 'output window, operand 0']
    #allocation3 [shape = 's32[2]{0}', space=sflag, size = 0x8, scoped, tag = 'scoped memory for tpu_custom_call.1']
    %9 = vsyncpa [#allocation3], 0
    %s10 = scalar_lea.sflag [#allocation3], 1
    %11 = vsyncpa %s10, 0
    loop: start=0, step=1, limit=6
    $region2: #{tpu_custom_call.1} parent=1 // loop_pre_header
      _
    $region3: #{tpu_custom_call.1} parent=1 // loop_header
      %s13 = sphi 0, %s17
      %p14 = scmp.ge.s32.totalorder %s13, 6
      %s20 = sphi 0, %s32
      %s21 = sphi 0, %s28
      %s22 = sphi 0, %s20
      %s23 = sphi 0, %s21
      %s24 = sphi 0, %s22
      %s25 = sphi 0, %s23
      %s37 = sphi 0, %s39
      %s40 = sphi 0, %s37
      %s41 = sphi 0, %s40
      %s57 = sphi 0, %s41
      %s61 = sphi 0, %s61
      %s63 = sphi 0, %s61
      %s64 = sphi 0, %s63
      %s78 = sphi 0, %s64
      %s82 = sphi 0, %s82
      %s84 = sphi 0, %s82
      %s85 = sphi 0, %s84
      %s99 = sphi 0, %s85
      %s103 = sphi 0, %s103
      %s105 = sphi 0, %s103
      %s106 = sphi 0, %s105
      %s120 = sphi 0, %s106
      %s128 = sphi 0, %s130
      %s131 = sphi 0, %s128
      %s132 = sphi 0, %s131
      %s148 = sphi 0, %s132
    $region4: #{tpu_custom_call.1} parent=1 // loop_header_branch
      %16 = sbr.rel (%p14) target = $region8
    $region5: #{tpu_custom_call.1} parent=1 // loop_body
      %s18 = ssub.s32 %s13, 1
      %s19 = ssub.s32 %s13, 2
      %s26 = sadd.s32 1, %s21
      %p27 = scmp.ge.s32.totalorder %s26, 2
      %s28 = scalar_select %p27, 0, %s26
      %s29 = sadd.s32 1, %s20
      %s30 = scalar_select %p27, %s29, %s20
      %p31 = scmp.ge.s32.totalorder %s30, 2
      %s32 = scalar_select %p31, 0, %s30
      %s33 = ssub.s32 %s20, %s32
      %s34 = ssub.s32 %s21, %s28
      %s35 = sor.u32 %s33, %s34
      %p36 = scmp.eq.s32.totalorder %s35, 0
      %s38 = sadd.s32 %s37, 1
      %s39 = scalar_select %p36, %s37, %s38
      %p42 = pneg %p36
      %p43 = scmp.eq.s32.totalorder %s13, 3
      %p44 = por %p42, %p43
      %p45 = scmp.ne.s32.totalorder %s37, %s40
      %p46 = scmp.eq.s32.totalorder %s13, 0
      %p47 = por %p45, %p46
      %p48 = scmp.ne.s32.totalorder %s37, %s40
      %p49 = scmp.eq.s32.totalorder %s18, 3
      %p50 = por %p48, %p49
      %p51 = scmp.ne.s32.totalorder %s40, %s41
      %p52 = scmp.eq.s32.totalorder %s18, 0
      %p53 = por %p51, %p52
      %p54 = scmp.ne.s32.totalorder %s40, %s41
      %p55 = scmp.eq.s32.totalorder %s19, 3
      %p56 = por %p54, %p55
      %p58 = scmp.ne.s32.totalorder %s41, %s57
      %p59 = scmp.eq.s32.totalorder %s19, 0
      %p60 = por %p58, %p59
      %s62 = sadd.s32 %s61, 1
      %p65 = scmp.eq.s32.totalorder %s13, 3
      %p66 = scmp.ne.s32.totalorder %s61, %s63
      %p67 = scmp.eq.s32.totalorder %s13, 0
      %p68 = por %p66, %p67
      %p69 = scmp.ne.s32.totalorder %s61, %s63
      %p70 = scmp.eq.s32.totalorder %s18, 3
      %p71 = por %p69, %p70
      %p72 = scmp.ne.s32.totalorder %s63, %s64
      %p73 = scmp.eq.s32.totalorder %s18, 0
      %p74 = por %p72, %p73
      %p75 = scmp.ne.s32.totalorder %s63, %s64
      %p76 = scmp.eq.s32.totalorder %s19, 3
      %p77 = por %p75, %p76
      %p79 = scmp.ne.s32.totalorder %s64, %s78
      %p80 = scmp.eq.s32.totalorder %s19, 0
      %p81 = por %p79, %p80
      %s83 = sadd.s32 %s82, 1
      %p86 = scmp.eq.s32.totalorder %s13, 3
      %p87 = scmp.ne.s32.totalorder %s82, %s84
      %p88 = scmp.eq.s32.totalorder %s13, 0
      %p89 = por %p87, %p88
      %p90 = scmp.ne.s32.totalorder %s82, %s84
      %p91 = scmp.eq.s32.totalorder %s18, 3
      %p92 = por %p90, %p91
      %p93 = scmp.ne.s32.totalorder %s84, %s85
      %p94 = scmp.eq.s32.totalorder %s18, 0
      %p95 = por %p93, %p94
      %p96 = scmp.ne.s32.totalorder %s84, %s85
      %p97 = scmp.eq.s32.totalorder %s19, 3
      %p98 = por %p96, %p97
      %p100 = scmp.ne.s32.totalorder %s85, %s99
      %p101 = scmp.eq.s32.totalorder %s19, 0
      %p102 = por %p100, %p101
      %s104 = sadd.s32 %s103, 1
      %p107 = scmp.eq.s32.totalorder %s13, 3
      %p108 = scmp.ne.s32.totalorder %s103, %s105
      %p109 = scmp.eq.s32.totalorder %s13, 0
      %p110 = por %p108, %p109
      %p111 = scmp.ne.s32.totalorder %s103, %s105
      %p112 = scmp.eq.s32.totalorder %s18, 3
      %p113 = por %p111, %p112
      %p114 = scmp.ne.s32.totalorder %s105, %s106
      %p115 = scmp.eq.s32.totalorder %s18, 0
      %p116 = por %p114, %p115
      %p117 = scmp.ne.s32.totalorder %s105, %s106
      %p118 = scmp.eq.s32.totalorder %s19, 3
      %p119 = por %p117, %p118
      %p121 = scmp.ne.s32.totalorder %s106, %s120
      %p122 = scmp.eq.s32.totalorder %s19, 0
      %p123 = por %p121, %p122
      %s124 = ssub.s32 %s20, %s32
      %s125 = ssub.s32 %s21, %s28
      %s126 = sor.u32 %s124, %s125
      %p127 = scmp.eq.s32.totalorder %s126, 0
      %s129 = sadd.s32 %s128, 1
      %s130 = scalar_select %p127, %s128, %s129
      %p133 = pneg %p127
      %p134 = scmp.eq.s32.totalorder %s13, 3
      %p135 = por %p133, %p134
      %p136 = scmp.ne.s32.totalorder %s128, %s131
      %p137 = scmp.eq.s32.totalorder %s13, 0
      %p138 = por %p136, %p137
      %p139 = scmp.ne.s32.totalorder %s128, %s131
      %p140 = scmp.eq.s32.totalorder %s18, 3
      %p141 = por %p139, %p140
      %p142 = scmp.ne.s32.totalorder %s131, %s132
      %p143 = scmp.eq.s32.totalorder %s18, 0
      %p144 = por %p142, %p143
      %p145 = scmp.ne.s32.totalorder %s131, %s132
      %p146 = scmp.eq.s32.totalorder %s19, 3
      %p147 = por %p145, %p146
      %p149 = scmp.ne.s32.totalorder %s132, %s148
      %p150 = scmp.eq.s32.totalorder %s19, 0
      %p151 = por %p149, %p150
      %p152 = scmp.le.s32.totalorder 1, %s13
      %p153 = scmp.lt.s32.totalorder %s13, 5
      %p154 = pnand %p152, %p153
      %p155 = pneg %p154
      // Predicated region
      $region9: #{tpu_custom_call.1} parent=5 // pred_check
        _
      $region10: #{tpu_custom_call.1} parent=5 // pred_check_branch
        %157 = sbr.rel (%p154) target = $region12
      $region11: #{tpu_custom_call.1} parent=5 // pred_region
        %s158 = ssub.s32 %s13, 1
        // Predicated region
        $region13: #{tpu_custom_call.1} parent=11 // pred_check
          %p159 = pneg %p74
        $region14: #{tpu_custom_call.1} parent=11 // pred_check_branch
          %161 = sbr.rel (%p159) target = $region16
        $region15: #{tpu_custom_call.1} parent=11 // pred_region
          _
        $region16: #{tpu_custom_call.1} parent=11 // pred_fallthru
          _
        // Predicated region
        $region17: #{tpu_custom_call.1} parent=11 // pred_check
          %p162 = pneg %p95
        $region18: #{tpu_custom_call.1} parent=11 // pred_check_branch
          %164 = sbr.rel (%p162) target = $region20
        $region19: #{tpu_custom_call.1} parent=11 // pred_region
          _
        $region20: #{tpu_custom_call.1} parent=11 // pred_fallthru
          _
        // Predicated region
        $region21: #{tpu_custom_call.1} parent=11 // pred_check
          %p165 = pneg %p116
        $region22: #{tpu_custom_call.1} parent=11 // pred_check_branch
          %167 = sbr.rel (%p165) target = $region24
        $region23: #{tpu_custom_call.1} parent=11 // pred_region
          _
        $region24: #{tpu_custom_call.1} parent=11 // pred_fallthru
          _
      $region12: #{tpu_custom_call.1} parent=5 // pred_fallthru
        _
      %p168 = scmp.lt.s32.totalorder %s13, 4
      // Predicated region
      $region25: #{tpu_custom_call.1} parent=5 // pred_check
        %p169 = pneg %p168
      $region26: #{tpu_custom_call.1} parent=5 // pred_check_branch
        %171 = sbr.rel (%p169) target = $region28
      $region27: #{tpu_custom_call.1} parent=5 // pred_region
        // Predicated region
        $region29: #{tpu_custom_call.1} parent=27 // pred_check
          %p172 = pneg %p47
        $region30: #{tpu_custom_call.1} parent=27 // pred_check_branch
          %174 = sbr.rel (%p172) target = $region32
        $region31: #{tpu_custom_call.1} parent=27 // pred_region
          %p175 = scmp.lt.s32.totalorder %s20, 1
          %s176 = scalar_select %p175, %s20, 1
          %p177 = scmp.lt.s32.totalorder %s21, 1
          %s178 = scalar_select %p177, %s21, 1
          %s179 = smul.addr %s176, 2
          %s180 = sadd.s32 %s178, %s179
          %s181 = smul.addr %s180, 4
          %s182 = scalar_lea.vmem %s0, %s181
        $region32: #{tpu_custom_call.1} parent=27 // pred_fallthru
          _
      $region28: #{tpu_custom_call.1} parent=5 // pred_fallthru
        _
      %p183 = scmp.le.s32.totalorder 1, %s13
      %p184 = scmp.lt.s32.totalorder %s13, 5
      %p185 = pnand %p183, %p184
      %p186 = pneg %p185
      // Predicated region
      $region33: #{tpu_custom_call.1} parent=5 // pred_check
        _
      $region34: #{tpu_custom_call.1} parent=5 // pred_check_branch
        %188 = sbr.rel (%p185) target = $region36
      $region35: #{tpu_custom_call.1} parent=5 // pred_region
        %s189 = ssub.s32 %s13, 1
        %p190 = scmp.lt.s32.totalorder %s22, 1
        %s191 = scalar_select %p190, %s22, 1
        %p192 = scmp.lt.s32.totalorder %s23, 1
        %s193 = scalar_select %p192, %s23, 1
        %s194 = smul.addr %s191, 2
        %s195 = sadd.s32 %s193, %s194
        %s196 = smul.addr %s195, 4
        %s197 = scalar_lea.vmem %s0, %s196
        %p198 = pneg %p53
        %p199 = pneg %p50
        %p200 = pneg %p74
        %p201 = pneg %p71
        %p202 = pneg %p95
        %p203 = pneg %p92
        %p204 = pneg %p116
        %p205 = pneg %p113
        %p206 = pneg %p144
        %p207 = pneg %p141
        %s208 = sand.u32 %s131, 1
        %s209 = scalar_lea.sflag [#allocation3], %s208
        %s210 = sand.u32 %s131, 1
        %s211 = scalar_lea.vmem [#allocation2], %s210
        %p212 = scmp.lt.s32.totalorder %s22, 1
        %s213 = scalar_select %p212, %s22, 1
        %p214 = scmp.lt.s32.totalorder %s23, 1
        %s215 = scalar_select %p214, %s23, 1
        %s216 = smul.addr %s213, 2
        %s217 = sadd.s32 %s215, %s216
        %s218 = smul.addr %s217, 4
        %s219 = scalar_lea.vmem %s0, %s218
        %v220 = vld [vmem:[%s219] sm:$0xf]
        %v221 = vld [vmem:[%s3] sm:$0xff]
        %v222 = vld [vmem:[%s3 + $0x8] sm:$0xff]
        %v223 = vld [vmem:[%s3 + $0x10] sm:$0xff]
        %v224 = vld [vmem:[%s3 + $0x18] sm:$0xff]
        %v225 = vld [vmem:[%s3 + $0x20] sm:$0xff]
        %v226 = vld [vmem:[%s3 + $0x28] sm:$0xff]
        %v227 = vld [vmem:[%s3 + $0x30] sm:$0xff]
        %v228 = vld [vmem:[%s3 + $0x38] sm:$0xff]
        %v229 = vld [vmem:[%s3 + $0x40] sm:$0xff]
        %v230 = vld [vmem:[%s3 + $0x48] sm:$0xff]
        %v231 = vld [vmem:[%s3 + $0x50] sm:$0xff]
        %v232 = vld [vmem:[%s3 + $0x58] sm:$0xff]
        %v233 = vld [vmem:[%s3 + $0x60] sm:$0xff]
        %v234 = vld [vmem:[%s3 + $0x68] sm:$0xff]
        %v235 = vld [vmem:[%s3 + $0x70] sm:$0xff]
        %v236 = vld [vmem:[%s3 + $0x78] sm:$0xff]
        %v237 = vld [vmem:[%s3 + $0x80] sm:$0xff]
        %v238 = vld [vmem:[%s3 + $0x88] sm:$0xff]
        %v239 = vld [vmem:[%s3 + $0x90] sm:$0xff]
        %v240 = vld [vmem:[%s3 + $0x98] sm:$0xff]
        %v241 = vld [vmem:[%s3 + $0xa0] sm:$0xff]
        %v242 = vld [vmem:[%s3 + $0xa8] sm:$0xff]
        %v243 = vld [vmem:[%s3 + $0xb0] sm:$0xff]
        %v244 = vld [vmem:[%s3 + $0xb8] sm:$0xff]
        %v245 = vld [vmem:[%s3 + $0xc0] sm:$0xff]
        %v246 = vld [vmem:[%s3 + $0xc8] sm:$0xff]
        %v247 = vld [vmem:[%s3 + $0xd0] sm:$0xff]
        %v248 = vld [vmem:[%s3 + $0xd8] sm:$0xff]
        %v249 = vld [vmem:[%s3 + $0xe0] sm:$0xff]
        %v250 = vld [vmem:[%s3 + $0xe8] sm:$0xff]
        %v251 = vld [vmem:[%s3 + $0xf0] sm:$0xff]
        %v252 = vld [vmem:[%s3 + $0xf8] sm:$0xff]
        %v253 = vld [vmem:[%s3 + $0x100] sm:$0xff]
        %v254 = vld [vmem:[%s3 + $0x108] sm:$0xff]
        %v255 = vld [vmem:[%s3 + $0x110] sm:$0xff]
        %v256 = vld [vmem:[%s3 + $0x118] sm:$0xff]
        %v257 = vld [vmem:[%s3 + $0x120] sm:$0xff]
        %v258 = vld [vmem:[%s3 + $0x128] sm:$0xff]
        %v259 = vld [vmem:[%s3 + $0x130] sm:$0xff]
        %v260 = vld [vmem:[%s3 + $0x138] sm:$0xff]
        %v261 = vld [vmem:[%s3 + $0x140] sm:$0xff]
        %v262 = vld [vmem:[%s3 + $0x148] sm:$0xff]
        %v263 = vld [vmem:[%s3 + $0x150] sm:$0xff]
        %v264 = vld [vmem:[%s3 + $0x158] sm:$0xff]
        %v265 = vld [vmem:[%s3 + $0x160] sm:$0xff]
        %v266 = vld [vmem:[%s3 + $0x168] sm:$0xff]
        %v267 = vld [vmem:[%s3 + $0x170] sm:$0xff]
        %v268 = vld [vmem:[%s3 + $0x178] sm:$0xff]
        %v269 = vld [vmem:[%s3 + $0x180] sm:$0xff]
        %v270 = vld [vmem:[%s3 + $0x188] sm:$0xff]
        %v271 = vld [vmem:[%s3 + $0x190] sm:$0xff]
        %v272 = vld [vmem:[%s3 + $0x198] sm:$0xff]
        %v273 = vld [vmem:[%s3 + $0x1a0] sm:$0xff]
        %v274 = vld [vmem:[%s3 + $0x1a8] sm:$0xff]
        %v275 = vld [vmem:[%s3 + $0x1b0] sm:$0xff]
        %v276 = vld [vmem:[%s3 + $0x1b8] sm:$0xff]
        %v277 = vld [vmem:[%s3 + $0x1c0] sm:$0xff]
        %v278 = vld [vmem:[%s3 + $0x1c8] sm:$0xff]
        %v279 = vld [vmem:[%s3 + $0x1d0] sm:$0xff]
        %v280 = vld [vmem:[%s3 + $0x1d8] sm:$0xff]
        %v281 = vld [vmem:[%s3 + $0x1e0] sm:$0xff]
        %v282 = vld [vmem:[%s3 + $0x1e8] sm:$0xff]
        %v283 = vld [vmem:[%s3 + $0x1f0] sm:$0xff]
        %v284 = vld [vmem:[%s3 + $0x1f8] sm:$0xff]
        %v285 = vld [vmem:[%s3] sm:$0x1]
        %v286 = vld [vmem:[%s1] sm:$0xff]
        %v287 = vld [vmem:[%s1 + $0x8] sm:$0xff]
        %v288 = vld [vmem:[%s1 + $0x10] sm:$0xff]
        %v289 = vld [vmem:[%s1 + $0x18] sm:$0xff]
        %v290 = vld [vmem:[%s1 + $0x20] sm:$0xff]
        %v291 = vld [vmem:[%s1 + $0x28] sm:$0xff]
        %v292 = vld [vmem:[%s1 + $0x30] sm:$0xff]
        %v293 = vld [vmem:[%s1 + $0x38] sm:$0xff]
        %v294 = vld [vmem:[%s1 + $0x40] sm:$0xff]
        %v295 = vld [vmem:[%s1 + $0x48] sm:$0xff]
        %v296 = vld [vmem:[%s1 + $0x50] sm:$0xff]
        %v297 = vld [vmem:[%s1 + $0x58] sm:$0xff]
        %v298 = vld [vmem:[%s1 + $0x60] sm:$0xff]
        %v299 = vld [vmem:[%s1 + $0x68] sm:$0xff]
        %v300 = vld [vmem:[%s1 + $0x70] sm:$0xff]
        %v301 = vld [vmem:[%s1 + $0x78] sm:$0xff]
        %v302 = vld [vmem:[%s1 + $0x80] sm:$0xff]
        %v303 = vld [vmem:[%s1 + $0x88] sm:$0xff]
        %v304 = vld [vmem:[%s1 + $0x90] sm:$0xff]
        %v305 = vld [vmem:[%s1 + $0x98] sm:$0xff]
        %v306 = vld [vmem:[%s1 + $0xa0] sm:$0xff]
        %v307 = vld [vmem:[%s1 + $0xa8] sm:$0xff]
        %v308 = vld [vmem:[%s1 + $0xb0] sm:$0xff]
        %v309 = vld [vmem:[%s1 + $0xb8] sm:$0xff]
        %v310 = vld [vmem:[%s1 + $0xc0] sm:$0xff]
        %v311 = vld [vmem:[%s1 + $0xc8] sm:$0xff]
        %v312 = vld [vmem:[%s1 + $0xd0] sm:$0xff]
        %v313 = vld [vmem:[%s1 + $0xd8] sm:$0xff]
        %v314 = vld [vmem:[%s1 + $0xe0] sm:$0xff]
        %v315 = vld [vmem:[%s1 + $0xe8] sm:$0xff]
        %v316 = vld [vmem:[%s1 + $0xf0] sm:$0xff]
        %v317 = vld [vmem:[%s1 + $0xf8] sm:$0xff]
        %v318 = vld [vmem:[%s1 + $0x100] sm:$0xff]
        %v319 = vld [vmem:[%s1 + $0x108] sm:$0xff]
        %v320 = vld [vmem:[%s1 + $0x110] sm:$0xff]
        %v321 = vld [vmem:[%s1 + $0x118] sm:$0xff]
        %v322 = vld [vmem:[%s1 + $0x120] sm:$0xff]
        %v323 = vld [vmem:[%s1 + $0x128] sm:$0xff]
        %v324 = vld [vmem:[%s1 + $0x130] sm:$0xff]
        %v325 = vld [vmem:[%s1 + $0x138] sm:$0xff]
        %v326 = vld [vmem:[%s1 + $0x140] sm:$0xff]
        %v327 = vld [vmem:[%s1 + $0x148] sm:$0xff]
        %v328 = vld [vmem:[%s1 + $0x150] sm:$0xff]
        %v329 = vld [vmem:[%s1 + $0x158] sm:$0xff]
        %v330 = vld [vmem:[%s1 + $0x160] sm:$0xff]
        %v331 = vld [vmem:[%s1 + $0x168] sm:$0xff]
        %v332 = vld [vmem:[%s1 + $0x170] sm:$0xff]
        %v333 = vld [vmem:[%s1 + $0x178] sm:$0xff]
        %v334 = vld [vmem:[%s1 + $0x180] sm:$0xff]
        %v335 = vld [vmem:[%s1 + $0x188] sm:$0xff]
        %v336 = vld [vmem:[%s1 + $0x190] sm:$0xff]
        %v337 = vld [vmem:[%s1 + $0x198] sm:$0xff]
        %v338 = vld [vmem:[%s1 + $0x1a0] sm:$0xff]
        %v339 = vld [vmem:[%s1 + $0x1a8] sm:$0xff]
        %v340 = vld [vmem:[%s1 + $0x1b0] sm:$0xff]
        %v341 = vld [vmem:[%s1 + $0x1b8] sm:$0xff]
        %v342 = vld [vmem:[%s1 + $0x1c0] sm:$0xff]
        %v343 = vld [vmem:[%s1 + $0x1c8] sm:$0xff]
        %v344 = vld [vmem:[%s1 + $0x1d0] sm:$0xff]
        %v345 = vld [vmem:[%s1 + $0x1d8] sm:$0xff]
        %v346 = vld [vmem:[%s1 + $0x1e0] sm:$0xff]
        %v347 = vld [vmem:[%s1 + $0x1e8] sm:$0xff]
        %v348 = vld [vmem:[%s1 + $0x1f0] sm:$0xff]
        %v349 = vld [vmem:[%s1 + $0x1f8] sm:$0xff]
        %351 = vset.pattern.permute.xlu0 0
        %352 = vperm.xlu0 %351, %v286
        %v353 = vpop.permute.xlu0 %352
        %356 = vset.pattern.permute.xlu0 0
        %357 = vperm.xlu0 %356, %v287
        %v358 = vpop.permute.xlu0 %357
        %361 = vset.pattern.permute.xlu0 0
        %362 = vperm.xlu0 %361, %v288
        %v363 = vpop.permute.xlu0 %362
        %366 = vset.pattern.permute.xlu0 0
        %367 = vperm.xlu0 %366, %v289
        %v368 = vpop.permute.xlu0 %367
        %371 = vset.pattern.permute.xlu0 0
        %372 = vperm.xlu0 %371, %v290
        %v373 = vpop.permute.xlu0 %372
        %376 = vset.pattern.permute.xlu0 0
        %377 = vperm.xlu0 %376, %v291
        %v378 = vpop.permute.xlu0 %377
        %381 = vset.pattern.permute.xlu0 0
        %382 = vperm.xlu0 %381, %v292
        %v383 = vpop.permute.xlu0 %382
        %386 = vset.pattern.permute.xlu0 0
        %387 = vperm.xlu0 %386, %v293
        %v388 = vpop.permute.xlu0 %387
        %391 = vset.pattern.permute.xlu0 0
        %392 = vperm.xlu0 %391, %v294
        %v393 = vpop.permute.xlu0 %392
        %396 = vset.pattern.permute.xlu0 0
        %397 = vperm.xlu0 %396, %v295
        %v398 = vpop.permute.xlu0 %397
        %401 = vset.pattern.permute.xlu0 0
        %402 = vperm.xlu0 %401, %v296
        %v403 = vpop.permute.xlu0 %402
        %406 = vset.pattern.permute.xlu0 0
        %407 = vperm.xlu0 %406, %v297
        %v408 = vpop.permute.xlu0 %407
        %411 = vset.pattern.permute.xlu0 0
        %412 = vperm.xlu0 %411, %v298
        %v413 = vpop.permute.xlu0 %412
        %416 = vset.pattern.permute.xlu0 0
        %417 = vperm.xlu0 %416, %v299
        %v418 = vpop.permute.xlu0 %417
        %421 = vset.pattern.permute.xlu0 0
        %422 = vperm.xlu0 %421, %v300
        %v423 = vpop.permute.xlu0 %422
        %426 = vset.pattern.permute.xlu0 0
        %427 = vperm.xlu0 %426, %v301
        %v428 = vpop.permute.xlu0 %427
        %431 = vset.pattern.permute.xlu0 0
        %432 = vperm.xlu0 %431, %v302
        %v433 = vpop.permute.xlu0 %432
        %436 = vset.pattern.permute.xlu0 0
        %437 = vperm.xlu0 %436, %v303
        %v438 = vpop.permute.xlu0 %437
        %441 = vset.pattern.permute.xlu0 0
        %442 = vperm.xlu0 %441, %v304
        %v443 = vpop.permute.xlu0 %442
        %446 = vset.pattern.permute.xlu0 0
        %447 = vperm.xlu0 %446, %v305
        %v448 = vpop.permute.xlu0 %447
        %451 = vset.pattern.permute.xlu0 0
        %452 = vperm.xlu0 %451, %v306
        %v453 = vpop.permute.xlu0 %452
        %456 = vset.pattern.permute.xlu0 0
        %457 = vperm.xlu0 %456, %v307
        %v458 = vpop.permute.xlu0 %457
        %461 = vset.pattern.permute.xlu0 0
        %462 = vperm.xlu0 %461, %v308
        %v463 = vpop.permute.xlu0 %462
        %466 = vset.pattern.permute.xlu0 0
        %467 = vperm.xlu0 %466, %v309
        %v468 = vpop.permute.xlu0 %467
        %471 = vset.pattern.permute.xlu0 0
        %472 = vperm.xlu0 %471, %v310
        %v473 = vpop.permute.xlu0 %472
        %476 = vset.pattern.permute.xlu0 0
        %477 = vperm.xlu0 %476, %v311
        %v478 = vpop.permute.xlu0 %477
        %481 = vset.pattern.permute.xlu0 0
        %482 = vperm.xlu0 %481, %v312
        %v483 = vpop.permute.xlu0 %482
        %486 = vset.pattern.permute.xlu0 0
        %487 = vperm.xlu0 %486, %v313
        %v488 = vpop.permute.xlu0 %487
        %491 = vset.pattern.permute.xlu0 0
        %492 = vperm.xlu0 %491, %v314
        %v493 = vpop.permute.xlu0 %492
        %496 = vset.pattern.permute.xlu0 0
        %497 = vperm.xlu0 %496, %v315
        %v498 = vpop.permute.xlu0 %497
        %501 = vset.pattern.permute.xlu0 0
        %502 = vperm.xlu0 %501, %v316
        %v503 = vpop.permute.xlu0 %502
        %506 = vset.pattern.permute.xlu0 0
        %507 = vperm.xlu0 %506, %v317
        %v508 = vpop.permute.xlu0 %507
        %511 = vset.pattern.permute.xlu0 0
        %512 = vperm.xlu0 %511, %v318
        %v513 = vpop.permute.xlu0 %512
        %516 = vset.pattern.permute.xlu0 0
        %517 = vperm.xlu0 %516, %v319
        %v518 = vpop.permute.xlu0 %517
        %521 = vset.pattern.permute.xlu0 0
        %522 = vperm.xlu0 %521, %v320
        %v523 = vpop.permute.xlu0 %522
        %526 = vset.pattern.permute.xlu0 0
        %527 = vperm.xlu0 %526, %v321
        %v528 = vpop.permute.xlu0 %527
        %531 = vset.pattern.permute.xlu0 0
        %532 = vperm.xlu0 %531, %v322
        %v533 = vpop.permute.xlu0 %532
        %536 = vset.pattern.permute.xlu0 0
        %537 = vperm.xlu0 %536, %v323
        %v538 = vpop.permute.xlu0 %537
        %541 = vset.pattern.permute.xlu0 0
        %542 = vperm.xlu0 %541, %v324
        %v543 = vpop.permute.xlu0 %542
        %546 = vset.pattern.permute.xlu0 0
        %547 = vperm.xlu0 %546, %v325
        %v548 = vpop.permute.xlu0 %547
        %551 = vset.pattern.permute.xlu0 0
        %552 = vperm.xlu0 %551, %v326
        %v553 = vpop.permute.xlu0 %552
        %556 = vset.pattern.permute.xlu0 0
        %557 = vperm.xlu0 %556, %v327
        %v558 = vpop.permute.xlu0 %557
        %561 = vset.pattern.permute.xlu0 0
        %562 = vperm.xlu0 %561, %v328
        %v563 = vpop.permute.xlu0 %562
        %566 = vset.pattern.permute.xlu0 0
        %567 = vperm.xlu0 %566, %v329
        %v568 = vpop.permute.xlu0 %567
        %571 = vset.pattern.permute.xlu0 0
        %572 = vperm.xlu0 %571, %v330
        %v573 = vpop.permute.xlu0 %572
        %576 = vset.pattern.permute.xlu0 0
        %577 = vperm.xlu0 %576, %v331
        %v578 = vpop.permute.xlu0 %577
        %581 = vset.pattern.permute.xlu0 0
        %582 = vperm.xlu0 %581, %v332
        %v583 = vpop.permute.xlu0 %582
        %586 = vset.pattern.permute.xlu0 0
        %587 = vperm.xlu0 %586, %v333
        %v588 = vpop.permute.xlu0 %587
        %591 = vset.pattern.permute.xlu0 0
        %592 = vperm.xlu0 %591, %v334
        %v593 = vpop.permute.xlu0 %592
        %596 = vset.pattern.permute.xlu0 0
        %597 = vperm.xlu0 %596, %v335
        %v598 = vpop.permute.xlu0 %597
        %601 = vset.pattern.permute.xlu0 0
        %602 = vperm.xlu0 %601, %v336
        %v603 = vpop.permute.xlu0 %602
        %606 = vset.pattern.permute.xlu0 0
        %607 = vperm.xlu0 %606, %v337
        %v608 = vpop.permute.xlu0 %607
        %611 = vset.pattern.permute.xlu0 0
        %612 = vperm.xlu0 %611, %v338
        %v613 = vpop.permute.xlu0 %612
        %616 = vset.pattern.permute.xlu0 0
        %617 = vperm.xlu0 %616, %v339
        %v618 = vpop.permute.xlu0 %617
        %621 = vset.pattern.permute.xlu0 0
        %622 = vperm.xlu0 %621, %v340
        %v623 = vpop.permute.xlu0 %622
        %626 = vset.pattern.permute.xlu0 0
        %627 = vperm.xlu0 %626, %v341
        %v628 = vpop.permute.xlu0 %627
        %631 = vset.pattern.permute.xlu0 0
        %632 = vperm.xlu0 %631, %v342
        %v633 = vpop.permute.xlu0 %632
        %636 = vset.pattern.permute.xlu0 0
        %637 = vperm.xlu0 %636, %v343
        %v638 = vpop.permute.xlu0 %637
        %641 = vset.pattern.permute.xlu0 0
        %642 = vperm.xlu0 %641, %v344
        %v643 = vpop.permute.xlu0 %642
        %646 = vset.pattern.permute.xlu0 0
        %647 = vperm.xlu0 %646, %v345
        %v648 = vpop.permute.xlu0 %647
        %651 = vset.pattern.permute.xlu0 0
        %652 = vperm.xlu0 %651, %v346
        %v653 = vpop.permute.xlu0 %652
        %656 = vset.pattern.permute.xlu0 0
        %657 = vperm.xlu0 %656, %v347
        %v658 = vpop.permute.xlu0 %657
        %661 = vset.pattern.permute.xlu0 0
        %662 = vperm.xlu0 %661, %v348
        %v663 = vpop.permute.xlu0 %662
        %666 = vset.pattern.permute.xlu0 0
        %667 = vperm.xlu0 %666, %v349
        %v668 = vpop.permute.xlu0 %667
        %v670 = vperm.slane %v220, 0
        %v671 = vmul.f32 %v353, %v670
        %v672 = vmul.f32 %v358, %v670
        %v673 = vmul.f32 %v363, %v670
        %v674 = vmul.f32 %v368, %v670
        %v675 = vmul.f32 %v373, %v670
        %v676 = vmul.f32 %v378, %v670
        %v677 = vmul.f32 %v383, %v670
        %v678 = vmul.f32 %v388, %v670
        %v679 = vmul.f32 %v393, %v670
        %v680 = vmul.f32 %v398, %v670
        %v681 = vmul.f32 %v403, %v670
        %v682 = vmul.f32 %v408, %v670
        %v683 = vmul.f32 %v413, %v670
        %v684 = vmul.f32 %v418, %v670
        %v685 = vmul.f32 %v423, %v670
        %v686 = vmul.f32 %v428, %v670
        %v687 = vmul.f32 %v433, %v670
        %v688 = vmul.f32 %v438, %v670
        %v689 = vmul.f32 %v443, %v670
        %v690 = vmul.f32 %v448, %v670
        %v691 = vmul.f32 %v453, %v670
        %v692 = vmul.f32 %v458, %v670
        %v693 = vmul.f32 %v463, %v670
        %v694 = vmul.f32 %v468, %v670
        %v695 = vmul.f32 %v473, %v670
        %v696 = vmul.f32 %v478, %v670
        %v697 = vmul.f32 %v483, %v670
        %v698 = vmul.f32 %v488, %v670
        %v699 = vmul.f32 %v493, %v670
        %v700 = vmul.f32 %v498, %v670
        %v701 = vmul.f32 %v503, %v670
        %v702 = vmul.f32 %v508, %v670
        %v703 = vmul.f32 %v513, %v670
        %v704 = vmul.f32 %v518, %v670
        %v705 = vmul.f32 %v523, %v670
        %v706 = vmul.f32 %v528, %v670
        %v707 = vmul.f32 %v533, %v670
        %v708 = vmul.f32 %v538, %v670
        %v709 = vmul.f32 %v543, %v670
        %v710 = vmul.f32 %v548, %v670
        %v711 = vmul.f32 %v553, %v670
        %v712 = vmul.f32 %v558, %v670
        %v713 = vmul.f32 %v563, %v670
        %v714 = vmul.f32 %v568, %v670
        %v715 = vmul.f32 %v573, %v670
        %v716 = vmul.f32 %v578, %v670
        %v717 = vmul.f32 %v583, %v670
        %v718 = vmul.f32 %v588, %v670
        %v719 = vmul.f32 %v593, %v670
        %v720 = vmul.f32 %v598, %v670
        %v721 = vmul.f32 %v603, %v670
        %v722 = vmul.f32 %v608, %v670
        %v723 = vmul.f32 %v613, %v670
        %v724 = vmul.f32 %v618, %v670
        %v725 = vmul.f32 %v623, %v670
        %v726 = vmul.f32 %v628, %v670
        %v727 = vmul.f32 %v633, %v670
        %v728 = vmul.f32 %v638, %v670
        %v729 = vmul.f32 %v643, %v670
        %v730 = vmul.f32 %v648, %v670
        %v731 = vmul.f32 %v653, %v670
        %v732 = vmul.f32 %v658, %v670
        %v733 = vmul.f32 %v663, %v670
        %v734 = vmul.f32 %v668, %v670
        %736 = vset.pattern.permute.xlu0 0
        %737 = vperm.xlu0 %736, %v221
        %v738 = vpop.permute.xlu0 %737
        %741 = vset.pattern.permute.xlu0 0
        %742 = vperm.xlu0 %741, %v222
        %v743 = vpop.permute.xlu0 %742
        %746 = vset.pattern.permute.xlu0 0
        %747 = vperm.xlu0 %746, %v223
        %v748 = vpop.permute.xlu0 %747
        %751 = vset.pattern.permute.xlu0 0
        %752 = vperm.xlu0 %751, %v224
        %v753 = vpop.permute.xlu0 %752
        %756 = vset.pattern.permute.xlu0 0
        %757 = vperm.xlu0 %756, %v225
        %v758 = vpop.permute.xlu0 %757
        %761 = vset.pattern.permute.xlu0 0
        %762 = vperm.xlu0 %761, %v226
        %v763 = vpop.permute.xlu0 %762
        %766 = vset.pattern.permute.xlu0 0
        %767 = vperm.xlu0 %766, %v227
        %v768 = vpop.permute.xlu0 %767
        %771 = vset.pattern.permute.xlu0 0
        %772 = vperm.xlu0 %771, %v228
        %v773 = vpop.permute.xlu0 %772
        %776 = vset.pattern.permute.xlu0 0
        %777 = vperm.xlu0 %776, %v229
        %v778 = vpop.permute.xlu0 %777
        %781 = vset.pattern.permute.xlu0 0
        %782 = vperm.xlu0 %781, %v230
        %v783 = vpop.permute.xlu0 %782
        %786 = vset.pattern.permute.xlu0 0
        %787 = vperm.xlu0 %786, %v231
        %v788 = vpop.permute.xlu0 %787
        %791 = vset.pattern.permute.xlu0 0
        %792 = vperm.xlu0 %791, %v232
        %v793 = vpop.permute.xlu0 %792
        %796 = vset.pattern.permute.xlu0 0
        %797 = vperm.xlu0 %796, %v233
        %v798 = vpop.permute.xlu0 %797
        %801 = vset.pattern.permute.xlu0 0
        %802 = vperm.xlu0 %801, %v234
        %v803 = vpop.permute.xlu0 %802
        %806 = vset.pattern.permute.xlu0 0
        %807 = vperm.xlu0 %806, %v235
        %v808 = vpop.permute.xlu0 %807
        %811 = vset.pattern.permute.xlu0 0
        %812 = vperm.xlu0 %811, %v236
        %v813 = vpop.permute.xlu0 %812
        %816 = vset.pattern.permute.xlu0 0
        %817 = vperm.xlu0 %816, %v237
        %v818 = vpop.permute.xlu0 %817
        %821 = vset.pattern.permute.xlu0 0
        %822 = vperm.xlu0 %821, %v238
        %v823 = vpop.permute.xlu0 %822
        %826 = vset.pattern.permute.xlu0 0
        %827 = vperm.xlu0 %826, %v239
        %v828 = vpop.permute.xlu0 %827
        %831 = vset.pattern.permute.xlu0 0
        %832 = vperm.xlu0 %831, %v240
        %v833 = vpop.permute.xlu0 %832
        %836 = vset.pattern.permute.xlu0 0
        %837 = vperm.xlu0 %836, %v241
        %v838 = vpop.permute.xlu0 %837
        %841 = vset.pattern.permute.xlu0 0
        %842 = vperm.xlu0 %841, %v242
        %v843 = vpop.permute.xlu0 %842
        %846 = vset.pattern.permute.xlu0 0
        %847 = vperm.xlu0 %846, %v243
        %v848 = vpop.permute.xlu0 %847
        %851 = vset.pattern.permute.xlu0 0
        %852 = vperm.xlu0 %851, %v244
        %v853 = vpop.permute.xlu0 %852
        %856 = vset.pattern.permute.xlu0 0
        %857 = vperm.xlu0 %856, %v245
        %v858 = vpop.permute.xlu0 %857
        %861 = vset.pattern.permute.xlu0 0
        %862 = vperm.xlu0 %861, %v246
        %v863 = vpop.permute.xlu0 %862
        %866 = vset.pattern.permute.xlu0 0
        %867 = vperm.xlu0 %866, %v247
        %v868 = vpop.permute.xlu0 %867
        %871 = vset.pattern.permute.xlu0 0
        %872 = vperm.xlu0 %871, %v248
        %v873 = vpop.permute.xlu0 %872
        %876 = vset.pattern.permute.xlu0 0
        %877 = vperm.xlu0 %876, %v249
        %v878 = vpop.permute.xlu0 %877
        %881 = vset.pattern.permute.xlu0 0
        %882 = vperm.xlu0 %881, %v250
        %v883 = vpop.permute.xlu0 %882
        %886 = vset.pattern.permute.xlu0 0
        %887 = vperm.xlu0 %886, %v251
        %v888 = vpop.permute.xlu0 %887
        %891 = vset.pattern.permute.xlu0 0
        %892 = vperm.xlu0 %891, %v252
        %v893 = vpop.permute.xlu0 %892
        %896 = vset.pattern.permute.xlu0 0
        %897 = vperm.xlu0 %896, %v253
        %v898 = vpop.permute.xlu0 %897
        %901 = vset.pattern.permute.xlu0 0
        %902 = vperm.xlu0 %901, %v254
        %v903 = vpop.permute.xlu0 %902
        %906 = vset.pattern.permute.xlu0 0
        %907 = vperm.xlu0 %906, %v255
        %v908 = vpop.permute.xlu0 %907
        %911 = vset.pattern.permute.xlu0 0
        %912 = vperm.xlu0 %911, %v256
        %v913 = vpop.permute.xlu0 %912
        %916 = vset.pattern.permute.xlu0 0
        %917 = vperm.xlu0 %916, %v257
        %v918 = vpop.permute.xlu0 %917
        %921 = vset.pattern.permute.xlu0 0
        %922 = vperm.xlu0 %921, %v258
        %v923 = vpop.permute.xlu0 %922
        %926 = vset.pattern.permute.xlu0 0
        %927 = vperm.xlu0 %926, %v259
        %v928 = vpop.permute.xlu0 %927
        %931 = vset.pattern.permute.xlu0 0
        %932 = vperm.xlu0 %931, %v260
        %v933 = vpop.permute.xlu0 %932
        %936 = vset.pattern.permute.xlu0 0
        %937 = vperm.xlu0 %936, %v261
        %v938 = vpop.permute.xlu0 %937
        %941 = vset.pattern.permute.xlu0 0
        %942 = vperm.xlu0 %941, %v262
        %v943 = vpop.permute.xlu0 %942
        %946 = vset.pattern.permute.xlu0 0
        %947 = vperm.xlu0 %946, %v263
        %v948 = vpop.permute.xlu0 %947
        %951 = vset.pattern.permute.xlu0 0
        %952 = vperm.xlu0 %951, %v264
        %v953 = vpop.permute.xlu0 %952
        %956 = vset.pattern.permute.xlu0 0
        %957 = vperm.xlu0 %956, %v265
        %v958 = vpop.permute.xlu0 %957
        %961 = vset.pattern.permute.xlu0 0
        %962 = vperm.xlu0 %961, %v266
        %v963 = vpop.permute.xlu0 %962
        %966 = vset.pattern.permute.xlu0 0
        %967 = vperm.xlu0 %966, %v267
        %v968 = vpop.permute.xlu0 %967
        %971 = vset.pattern.permute.xlu0 0
        %972 = vperm.xlu0 %971, %v268
        %v973 = vpop.permute.xlu0 %972
        %976 = vset.pattern.permute.xlu0 0
        %977 = vperm.xlu0 %976, %v269
        %v978 = vpop.permute.xlu0 %977
        %981 = vset.pattern.permute.xlu0 0
        %982 = vperm.xlu0 %981, %v270
        %v983 = vpop.permute.xlu0 %982
        %986 = vset.pattern.permute.xlu0 0
        %987 = vperm.xlu0 %986, %v271
        %v988 = vpop.permute.xlu0 %987
        %991 = vset.pattern.permute.xlu0 0
        %992 = vperm.xlu0 %991, %v272
        %v993 = vpop.permute.xlu0 %992
        %996 = vset.pattern.permute.xlu0 0
        %997 = vperm.xlu0 %996, %v273
        %v998 = vpop.permute.xlu0 %997
        %1001 = vset.pattern.permute.xlu0 0
        %1002 = vperm.xlu0 %1001, %v274
        %v1003 = vpop.permute.xlu0 %1002
        %1006 = vset.pattern.permute.xlu0 0
        %1007 = vperm.xlu0 %1006, %v275
        %v1008 = vpop.permute.xlu0 %1007
        %1011 = vset.pattern.permute.xlu0 0
        %1012 = vperm.xlu0 %1011, %v276
        %v1013 = vpop.permute.xlu0 %1012
        %1016 = vset.pattern.permute.xlu0 0
        %1017 = vperm.xlu0 %1016, %v277
        %v1018 = vpop.permute.xlu0 %1017
        %1021 = vset.pattern.permute.xlu0 0
        %1022 = vperm.xlu0 %1021, %v278
        %v1023 = vpop.permute.xlu0 %1022
        %1026 = vset.pattern.permute.xlu0 0
        %1027 = vperm.xlu0 %1026, %v279
        %v1028 = vpop.permute.xlu0 %1027
        %1031 = vset.pattern.permute.xlu0 0
        %1032 = vperm.xlu0 %1031, %v280
        %v1033 = vpop.permute.xlu0 %1032
        %1036 = vset.pattern.permute.xlu0 0
        %1037 = vperm.xlu0 %1036, %v281
        %v1038 = vpop.permute.xlu0 %1037
        %1041 = vset.pattern.permute.xlu0 0
        %1042 = vperm.xlu0 %1041, %v282
        %v1043 = vpop.permute.xlu0 %1042
        %1046 = vset.pattern.permute.xlu0 0
        %1047 = vperm.xlu0 %1046, %v283
        %v1048 = vpop.permute.xlu0 %1047
        %1051 = vset.pattern.permute.xlu0 0
        %1052 = vperm.xlu0 %1051, %v284
        %v1053 = vpop.permute.xlu0 %1052
        %v1055 = vadd.f32 %v738, %v671
        %v1056 = vadd.f32 %v743, %v672
        %v1057 = vadd.f32 %v748, %v673
        %v1058 = vadd.f32 %v753, %v674
        %v1059 = vadd.f32 %v758, %v675
        %v1060 = vadd.f32 %v763, %v676
        %v1061 = vadd.f32 %v768, %v677
        %v1062 = vadd.f32 %v773, %v678
        %v1063 = vadd.f32 %v778, %v679
        %v1064 = vadd.f32 %v783, %v680
        %v1065 = vadd.f32 %v788, %v681
        %v1066 = vadd.f32 %v793, %v682
        %v1067 = vadd.f32 %v798, %v683
        %v1068 = vadd.f32 %v803, %v684
        %v1069 = vadd.f32 %v808, %v685
        %v1070 = vadd.f32 %v813, %v686
        %v1071 = vadd.f32 %v818, %v687
        %v1072 = vadd.f32 %v823, %v688
        %v1073 = vadd.f32 %v828, %v689
        %v1074 = vadd.f32 %v833, %v690
        %v1075 = vadd.f32 %v838, %v691
        %v1076 = vadd.f32 %v843, %v692
        %v1077 = vadd.f32 %v848, %v693
        %v1078 = vadd.f32 %v853, %v694
        %v1079 = vadd.f32 %v858, %v695
        %v1080 = vadd.f32 %v863, %v696
        %v1081 = vadd.f32 %v868, %v697
        %v1082 = vadd.f32 %v873, %v698
        %v1083 = vadd.f32 %v878, %v699
        %v1084 = vadd.f32 %v883, %v700
        %v1085 = vadd.f32 %v888, %v701
        %v1086 = vadd.f32 %v893, %v702
        %v1087 = vadd.f32 %v898, %v703
        %v1088 = vadd.f32 %v903, %v704
        %v1089 = vadd.f32 %v908, %v705
        %v1090 = vadd.f32 %v913, %v706
        %v1091 = vadd.f32 %v918, %v707
        %v1092 = vadd.f32 %v923, %v708
        %v1093 = vadd.f32 %v928, %v709
        %v1094 = vadd.f32 %v933, %v710
        %v1095 = vadd.f32 %v938, %v711
        %v1096 = vadd.f32 %v943, %v712
        %v1097 = vadd.f32 %v948, %v713
        %v1098 = vadd.f32 %v953, %v714
        %v1099 = vadd.f32 %v958, %v715
        %v1100 = vadd.f32 %v963, %v716
        %v1101 = vadd.f32 %v968, %v717
        %v1102 = vadd.f32 %v973, %v718
        %v1103 = vadd.f32 %v978, %v719
        %v1104 = vadd.f32 %v983, %v720
        %v1105 = vadd.f32 %v988, %v721
        %v1106 = vadd.f32 %v993, %v722
        %v1107 = vadd.f32 %v998, %v723
        %v1108 = vadd.f32 %v1003, %v724
        %v1109 = vadd.f32 %v1008, %v725
        %v1110 = vadd.f32 %v1013, %v726
        %v1111 = vadd.f32 %v1018, %v727
        %v1112 = vadd.f32 %v1023, %v728
        %v1113 = vadd.f32 %v1028, %v729
        %v1114 = vadd.f32 %v1033, %v730
        %v1115 = vadd.f32 %v1038, %v731
        %v1116 = vadd.f32 %v1043, %v732
        %v1117 = vadd.f32 %v1048, %v733
        %v1118 = vadd.f32 %v1053, %v734
        %1119 = vset.pattern.permute.xlu0 1
        %1120 = vperm.xlu0 %1119, %v286
        %v1121 = vpop.permute.xlu0 %1120
        %1123 = vset.pattern.permute.xlu0 1
        %1124 = vperm.xlu0 %1123, %v287
        %v1125 = vpop.permute.xlu0 %1124
        %1127 = vset.pattern.permute.xlu0 1
        %1128 = vperm.xlu0 %1127, %v288
        %v1129 = vpop.permute.xlu0 %1128
        %1131 = vset.pattern.permute.xlu0 1
        %1132 = vperm.xlu0 %1131, %v289
        %v1133 = vpop.permute.xlu0 %1132
        %1135 = vset.pattern.permute.xlu0 1
        %1136 = vperm.xlu0 %1135, %v290
        %v1137 = vpop.permute.xlu0 %1136
        %1139 = vset.pattern.permute.xlu0 1
        %1140 = vperm.xlu0 %1139, %v291
        %v1141 = vpop.permute.xlu0 %1140
        %1143 = vset.pattern.permute.xlu0 1
        %1144 = vperm.xlu0 %1143, %v292
        %v1145 = vpop.permute.xlu0 %1144
        %1147 = vset.pattern.permute.xlu0 1
        %1148 = vperm.xlu0 %1147, %v293
        %v1149 = vpop.permute.xlu0 %1148
        %1151 = vset.pattern.permute.xlu0 1
        %1152 = vperm.xlu0 %1151, %v294
        %v1153 = vpop.permute.xlu0 %1152
        %1155 = vset.pattern.permute.xlu0 1
        %1156 = vperm.xlu0 %1155, %v295
        %v1157 = vpop.permute.xlu0 %1156
        %1159 = vset.pattern.permute.xlu0 1
        %1160 = vperm.xlu0 %1159, %v296
        %v1161 = vpop.permute.xlu0 %1160
        %1163 = vset.pattern.permute.xlu0 1
        %1164 = vperm.xlu0 %1163, %v297
        %v1165 = vpop.permute.xlu0 %1164
        %1167 = vset.pattern.permute.xlu0 1
        %1168 = vperm.xlu0 %1167, %v298
        %v1169 = vpop.permute.xlu0 %1168
        %1171 = vset.pattern.permute.xlu0 1
        %1172 = vperm.xlu0 %1171, %v299
        %v1173 = vpop.permute.xlu0 %1172
        %1175 = vset.pattern.permute.xlu0 1
        %1176 = vperm.xlu0 %1175, %v300
        %v1177 = vpop.permute.xlu0 %1176
        %1179 = vset.pattern.permute.xlu0 1
        %1180 = vperm.xlu0 %1179, %v301
        %v1181 = vpop.permute.xlu0 %1180
        %1183 = vset.pattern.permute.xlu0 1
        %1184 = vperm.xlu0 %1183, %v302
        %v1185 = vpop.permute.xlu0 %1184
        %1187 = vset.pattern.permute.xlu0 1
        %1188 = vperm.xlu0 %1187, %v303
        %v1189 = vpop.permute.xlu0 %1188
        %1191 = vset.pattern.permute.xlu0 1
        %1192 = vperm.xlu0 %1191, %v304
        %v1193 = vpop.permute.xlu0 %1192
        %1195 = vset.pattern.permute.xlu0 1
        %1196 = vperm.xlu0 %1195, %v305
        %v1197 = vpop.permute.xlu0 %1196
        %1199 = vset.pattern.permute.xlu0 1
        %1200 = vperm.xlu0 %1199, %v306
        %v1201 = vpop.permute.xlu0 %1200
        %1203 = vset.pattern.permute.xlu0 1
        %1204 = vperm.xlu0 %1203, %v307
        %v1205 = vpop.permute.xlu0 %1204
        %1207 = vset.pattern.permute.xlu0 1
        %1208 = vperm.xlu0 %1207, %v308
        %v1209 = vpop.permute.xlu0 %1208
        %1211 = vset.pattern.permute.xlu0 1
        %1212 = vperm.xlu0 %1211, %v309
        %v1213 = vpop.permute.xlu0 %1212
        %1215 = vset.pattern.permute.xlu0 1
        %1216 = vperm.xlu0 %1215, %v310
        %v1217 = vpop.permute.xlu0 %1216
        %1219 = vset.pattern.permute.xlu0 1
        %1220 = vperm.xlu0 %1219, %v311
        %v1221 = vpop.permute.xlu0 %1220
        %1223 = vset.pattern.permute.xlu0 1
        %1224 = vperm.xlu0 %1223, %v312
        %v1225 = vpop.permute.xlu0 %1224
        %1227 = vset.pattern.permute.xlu0 1
        %1228 = vperm.xlu0 %1227, %v313
        %v1229 = vpop.permute.xlu0 %1228
        %1231 = vset.pattern.permute.xlu0 1
        %1232 = vperm.xlu0 %1231, %v314
        %v1233 = vpop.permute.xlu0 %1232
        %1235 = vset.pattern.permute.xlu0 1
        %1236 = vperm.xlu0 %1235, %v315
        %v1237 = vpop.permute.xlu0 %1236
        %1239 = vset.pattern.permute.xlu0 1
        %1240 = vperm.xlu0 %1239, %v316
        %v1241 = vpop.permute.xlu0 %1240
        %1243 = vset.pattern.permute.xlu0 1
        %1244 = vperm.xlu0 %1243, %v317
        %v1245 = vpop.permute.xlu0 %1244
        %1247 = vset.pattern.permute.xlu0 1
        %1248 = vperm.xlu0 %1247, %v318
        %v1249 = vpop.permute.xlu0 %1248
        %1251 = vset.pattern.permute.xlu0 1
        %1252 = vperm.xlu0 %1251, %v319
        %v1253 = vpop.permute.xlu0 %1252
        %1255 = vset.pattern.permute.xlu0 1
        %1256 = vperm.xlu0 %1255, %v320
        %v1257 = vpop.permute.xlu0 %1256
        %1259 = vset.pattern.permute.xlu0 1
        %1260 = vperm.xlu0 %1259, %v321
        %v1261 = vpop.permute.xlu0 %1260
        %1263 = vset.pattern.permute.xlu0 1
        %1264 = vperm.xlu0 %1263, %v322
        %v1265 = vpop.permute.xlu0 %1264
        %1267 = vset.pattern.permute.xlu0 1
        %1268 = vperm.xlu0 %1267, %v323
        %v1269 = vpop.permute.xlu0 %1268
        %1271 = vset.pattern.permute.xlu0 1
        %1272 = vperm.xlu0 %1271, %v324
        %v1273 = vpop.permute.xlu0 %1272
        %1275 = vset.pattern.permute.xlu0 1
        %1276 = vperm.xlu0 %1275, %v325
        %v1277 = vpop.permute.xlu0 %1276
        %1279 = vset.pattern.permute.xlu0 1
        %1280 = vperm.xlu0 %1279, %v326
        %v1281 = vpop.permute.xlu0 %1280
        %1283 = vset.pattern.permute.xlu0 1
        %1284 = vperm.xlu0 %1283, %v327
        %v1285 = vpop.permute.xlu0 %1284
        %1287 = vset.pattern.permute.xlu0 1
        %1288 = vperm.xlu0 %1287, %v328
        %v1289 = vpop.permute.xlu0 %1288
        %1291 = vset.pattern.permute.xlu0 1
        %1292 = vperm.xlu0 %1291, %v329
        %v1293 = vpop.permute.xlu0 %1292
        %1295 = vset.pattern.permute.xlu0 1
        %1296 = vperm.xlu0 %1295, %v330
        %v1297 = vpop.permute.xlu0 %1296
        %1299 = vset.pattern.permute.xlu0 1
        %1300 = vperm.xlu0 %1299, %v331
        %v1301 = vpop.permute.xlu0 %1300
        %1303 = vset.pattern.permute.xlu0 1
        %1304 = vperm.xlu0 %1303, %v332
        %v1305 = vpop.permute.xlu0 %1304
        %1307 = vset.pattern.permute.xlu0 1
        %1308 = vperm.xlu0 %1307, %v333
        %v1309 = vpop.permute.xlu0 %1308
        %1311 = vset.pattern.permute.xlu0 1
        %1312 = vperm.xlu0 %1311, %v334
        %v1313 = vpop.permute.xlu0 %1312
        %1315 = vset.pattern.permute.xlu0 1
        %1316 = vperm.xlu0 %1315, %v335
        %v1317 = vpop.permute.xlu0 %1316
        %1319 = vset.pattern.permute.xlu0 1
        %1320 = vperm.xlu0 %1319, %v336
        %v1321 = vpop.permute.xlu0 %1320
        %1323 = vset.pattern.permute.xlu0 1
        %1324 = vperm.xlu0 %1323, %v337
        %v1325 = vpop.permute.xlu0 %1324
        %1327 = vset.pattern.permute.xlu0 1
        %1328 = vperm.xlu0 %1327, %v338
        %v1329 = vpop.permute.xlu0 %1328
        %1331 = vset.pattern.permute.xlu0 1
        %1332 = vperm.xlu0 %1331, %v339
        %v1333 = vpop.permute.xlu0 %1332
        %1335 = vset.pattern.permute.xlu0 1
        %1336 = vperm.xlu0 %1335, %v340
        %v1337 = vpop.permute.xlu0 %1336
        %1339 = vset.pattern.permute.xlu0 1
        %1340 = vperm.xlu0 %1339, %v341
        %v1341 = vpop.permute.xlu0 %1340
        %1343 = vset.pattern.permute.xlu0 1
        %1344 = vperm.xlu0 %1343, %v342
        %v1345 = vpop.permute.xlu0 %1344
        %1347 = vset.pattern.permute.xlu0 1
        %1348 = vperm.xlu0 %1347, %v343
        %v1349 = vpop.permute.xlu0 %1348
        %1351 = vset.pattern.permute.xlu0 1
        %1352 = vperm.xlu0 %1351, %v344
        %v1353 = vpop.permute.xlu0 %1352
        %1355 = vset.pattern.permute.xlu0 1
        %1356 = vperm.xlu0 %1355, %v345
        %v1357 = vpop.permute.xlu0 %1356
        %1359 = vset.pattern.permute.xlu0 1
        %1360 = vperm.xlu0 %1359, %v346
        %v1361 = vpop.permute.xlu0 %1360
        %1363 = vset.pattern.permute.xlu0 1
        %1364 = vperm.xlu0 %1363, %v347
        %v1365 = vpop.permute.xlu0 %1364
        %1367 = vset.pattern.permute.xlu0 1
        %1368 = vperm.xlu0 %1367, %v348
        %v1369 = vpop.permute.xlu0 %1368
        %1371 = vset.pattern.permute.xlu0 1
        %1372 = vperm.xlu0 %1371, %v349
        %v1373 = vpop.permute.xlu0 %1372
        %v1375 = vperm.slane %v220, 1
        %v1376 = vmul.f32 %v1121, %v1375
        %v1377 = vmul.f32 %v1125, %v1375
        %v1378 = vmul.f32 %v1129, %v1375
        %v1379 = vmul.f32 %v1133, %v1375
        %v1380 = vmul.f32 %v1137, %v1375
        %v1381 = vmul.f32 %v1141, %v1375
        %v1382 = vmul.f32 %v1145, %v1375
        %v1383 = vmul.f32 %v1149, %v1375
        %v1384 = vmul.f32 %v1153, %v1375
        %v1385 = vmul.f32 %v1157, %v1375
        %v1386 = vmul.f32 %v1161, %v1375
        %v1387 = vmul.f32 %v1165, %v1375
        %v1388 = vmul.f32 %v1169, %v1375
        %v1389 = vmul.f32 %v1173, %v1375
        %v1390 = vmul.f32 %v1177, %v1375
        %v1391 = vmul.f32 %v1181, %v1375
        %v1392 = vmul.f32 %v1185, %v1375
        %v1393 = vmul.f32 %v1189, %v1375
        %v1394 = vmul.f32 %v1193, %v1375
        %v1395 = vmul.f32 %v1197, %v1375
        %v1396 = vmul.f32 %v1201, %v1375
        %v1397 = vmul.f32 %v1205, %v1375
        %v1398 = vmul.f32 %v1209, %v1375
        %v1399 = vmul.f32 %v1213, %v1375
        %v1400 = vmul.f32 %v1217, %v1375
        %v1401 = vmul.f32 %v1221, %v1375
        %v1402 = vmul.f32 %v1225, %v1375
        %v1403 = vmul.f32 %v1229, %v1375
        %v1404 = vmul.f32 %v1233, %v1375
        %v1405 = vmul.f32 %v1237, %v1375
        %v1406 = vmul.f32 %v1241, %v1375
        %v1407 = vmul.f32 %v1245, %v1375
        %v1408 = vmul.f32 %v1249, %v1375
        %v1409 = vmul.f32 %v1253, %v1375
        %v1410 = vmul.f32 %v1257, %v1375
        %v1411 = vmul.f32 %v1261, %v1375
        %v1412 = vmul.f32 %v1265, %v1375
        %v1413 = vmul.f32 %v1269, %v1375
        %v1414 = vmul.f32 %v1273, %v1375
        %v1415 = vmul.f32 %v1277, %v1375
        %v1416 = vmul.f32 %v1281, %v1375
        %v1417 = vmul.f32 %v1285, %v1375
        %v1418 = vmul.f32 %v1289, %v1375
        %v1419 = vmul.f32 %v1293, %v1375
        %v1420 = vmul.f32 %v1297, %v1375
        %v1421 = vmul.f32 %v1301, %v1375
        %v1422 = vmul.f32 %v1305, %v1375
        %v1423 = vmul.f32 %v1309, %v1375
        %v1424 = vmul.f32 %v1313, %v1375
        %v1425 = vmul.f32 %v1317, %v1375
        %v1426 = vmul.f32 %v1321, %v1375
        %v1427 = vmul.f32 %v1325, %v1375
        %v1428 = vmul.f32 %v1329, %v1375
        %v1429 = vmul.f32 %v1333, %v1375
        %v1430 = vmul.f32 %v1337, %v1375
        %v1431 = vmul.f32 %v1341, %v1375
        %v1432 = vmul.f32 %v1345, %v1375
        %v1433 = vmul.f32 %v1349, %v1375
        %v1434 = vmul.f32 %v1353, %v1375
        %v1435 = vmul.f32 %v1357, %v1375
        %v1436 = vmul.f32 %v1361, %v1375
        %v1437 = vmul.f32 %v1365, %v1375
        %v1438 = vmul.f32 %v1369, %v1375
        %v1439 = vmul.f32 %v1373, %v1375
        %v1440 = vadd.f32 %v1055, %v1376
        %v1441 = vadd.f32 %v1056, %v1377
        %v1442 = vadd.f32 %v1057, %v1378
        %v1443 = vadd.f32 %v1058, %v1379
        %v1444 = vadd.f32 %v1059, %v1380
        %v1445 = vadd.f32 %v1060, %v1381
        %v1446 = vadd.f32 %v1061, %v1382
        %v1447 = vadd.f32 %v1062, %v1383
        %v1448 = vadd.f32 %v1063, %v1384
        %v1449 = vadd.f32 %v1064, %v1385
        %v1450 = vadd.f32 %v1065, %v1386
        %v1451 = vadd.f32 %v1066, %v1387
        %v1452 = vadd.f32 %v1067, %v1388
        %v1453 = vadd.f32 %v1068, %v1389
        %v1454 = vadd.f32 %v1069, %v1390
        %v1455 = vadd.f32 %v1070, %v1391
        %v1456 = vadd.f32 %v1071, %v1392
        %v1457 = vadd.f32 %v1072, %v1393
        %v1458 = vadd.f32 %v1073, %v1394
        %v1459 = vadd.f32 %v1074, %v1395
        %v1460 = vadd.f32 %v1075, %v1396
        %v1461 = vadd.f32 %v1076, %v1397
        %v1462 = vadd.f32 %v1077, %v1398
        %v1463 = vadd.f32 %v1078, %v1399
        %v1464 = vadd.f32 %v1079, %v1400
        %v1465 = vadd.f32 %v1080, %v1401
        %v1466 = vadd.f32 %v1081, %v1402
        %v1467 = vadd.f32 %v1082, %v1403
        %v1468 = vadd.f32 %v1083, %v1404
        %v1469 = vadd.f32 %v1084, %v1405
        %v1470 = vadd.f32 %v1085, %v1406
        %v1471 = vadd.f32 %v1086, %v1407
        %v1472 = vadd.f32 %v1087, %v1408
        %v1473 = vadd.f32 %v1088, %v1409
        %v1474 = vadd.f32 %v1089, %v1410
        %v1475 = vadd.f32 %v1090, %v1411
        %v1476 = vadd.f32 %v1091, %v1412
        %v1477 = vadd.f32 %v1092, %v1413
        %v1478 = vadd.f32 %v1093, %v1414
        %v1479 = vadd.f32 %v1094, %v1415
        %v1480 = vadd.f32 %v1095, %v1416
        %v1481 = vadd.f32 %v1096, %v1417
        %v1482 = vadd.f32 %v1097, %v1418
        %v1483 = vadd.f32 %v1098, %v1419
        %v1484 = vadd.f32 %v1099, %v1420
        %v1485 = vadd.f32 %v1100, %v1421
        %v1486 = vadd.f32 %v1101, %v1422
        %v1487 = vadd.f32 %v1102, %v1423
        %v1488 = vadd.f32 %v1103, %v1424
        %v1489 = vadd.f32 %v1104, %v1425
        %v1490 = vadd.f32 %v1105, %v1426
        %v1491 = vadd.f32 %v1106, %v1427
        %v1492 = vadd.f32 %v1107, %v1428
        %v1493 = vadd.f32 %v1108, %v1429
        %v1494 = vadd.f32 %v1109, %v1430
        %v1495 = vadd.f32 %v1110, %v1431
        %v1496 = vadd.f32 %v1111, %v1432
        %v1497 = vadd.f32 %v1112, %v1433
        %v1498 = vadd.f32 %v1113, %v1434
        %v1499 = vadd.f32 %v1114, %v1435
        %v1500 = vadd.f32 %v1115, %v1436
        %v1501 = vadd.f32 %v1116, %v1437
        %v1502 = vadd.f32 %v1117, %v1438
        %v1503 = vadd.f32 %v1118, %v1439
        %1504 = vset.pattern.permute.xlu0 2
        %1505 = vperm.xlu0 %1504, %v286
        %v1506 = vpop.permute.xlu0 %1505
        %1508 = vset.pattern.permute.xlu0 2
        %1509 = vperm.xlu0 %1508, %v287
        %v1510 = vpop.permute.xlu0 %1509
        %1512 = vset.pattern.permute.xlu0 2
        %1513 = vperm.xlu0 %1512, %v288
        %v1514 = vpop.permute.xlu0 %1513
        %1516 = vset.pattern.permute.xlu0 2
        %1517 = vperm.xlu0 %1516, %v289
        %v1518 = vpop.permute.xlu0 %1517
        %1520 = vset.pattern.permute.xlu0 2
        %1521 = vperm.xlu0 %1520, %v290
        %v1522 = vpop.permute.xlu0 %1521
        %1524 = vset.pattern.permute.xlu0 2
        %1525 = vperm.xlu0 %1524, %v291
        %v1526 = vpop.permute.xlu0 %1525
        %1528 = vset.pattern.permute.xlu0 2
        %1529 = vperm.xlu0 %1528, %v292
        %v1530 = vpop.permute.xlu0 %1529
        %1532 = vset.pattern.permute.xlu0 2
        %1533 = vperm.xlu0 %1532, %v293
        %v1534 = vpop.permute.xlu0 %1533
        %1536 = vset.pattern.permute.xlu0 2
        %1537 = vperm.xlu0 %1536, %v294
        %v1538 = vpop.permute.xlu0 %1537
        %1540 = vset.pattern.permute.xlu0 2
        %1541 = vperm.xlu0 %1540, %v295
        %v1542 = vpop.permute.xlu0 %1541
        %1544 = vset.pattern.permute.xlu0 2
        %1545 = vperm.xlu0 %1544, %v296
        %v1546 = vpop.permute.xlu0 %1545
        %1548 = vset.pattern.permute.xlu0 2
        %1549 = vperm.xlu0 %1548, %v297
        %v1550 = vpop.permute.xlu0 %1549
        %1552 = vset.pattern.permute.xlu0 2
        %1553 = vperm.xlu0 %1552, %v298
        %v1554 = vpop.permute.xlu0 %1553
        %1556 = vset.pattern.permute.xlu0 2
        %1557 = vperm.xlu0 %1556, %v299
        %v1558 = vpop.permute.xlu0 %1557
        %1560 = vset.pattern.permute.xlu0 2
        %1561 = vperm.xlu0 %1560, %v300
        %v1562 = vpop.permute.xlu0 %1561
        %1564 = vset.pattern.permute.xlu0 2
        %1565 = vperm.xlu0 %1564, %v301
        %v1566 = vpop.permute.xlu0 %1565
        %1568 = vset.pattern.permute.xlu0 2
        %1569 = vperm.xlu0 %1568, %v302
        %v1570 = vpop.permute.xlu0 %1569
        %1572 = vset.pattern.permute.xlu0 2
        %1573 = vperm.xlu0 %1572, %v303
        %v1574 = vpop.permute.xlu0 %1573
        %1576 = vset.pattern.permute.xlu0 2
        %1577 = vperm.xlu0 %1576, %v304
        %v1578 = vpop.permute.xlu0 %1577
        %1580 = vset.pattern.permute.xlu0 2
        %1581 = vperm.xlu0 %1580, %v305
        %v1582 = vpop.permute.xlu0 %1581
        %1584 = vset.pattern.permute.xlu0 2
        %1585 = vperm.xlu0 %1584, %v306
        %v1586 = vpop.permute.xlu0 %1585
        %1588 = vset.pattern.permute.xlu0 2
        %1589 = vperm.xlu0 %1588, %v307
        %v1590 = vpop.permute.xlu0 %1589
        %1592 = vset.pattern.permute.xlu0 2
        %1593 = vperm.xlu0 %1592, %v308
        %v1594 = vpop.permute.xlu0 %1593
        %1596 = vset.pattern.permute.xlu0 2
        %1597 = vperm.xlu0 %1596, %v309
        %v1598 = vpop.permute.xlu0 %1597
        %1600 = vset.pattern.permute.xlu0 2
        %1601 = vperm.xlu0 %1600, %v310
        %v1602 = vpop.permute.xlu0 %1601
        %1604 = vset.pattern.permute.xlu0 2
        %1605 = vperm.xlu0 %1604, %v311
        %v1606 = vpop.permute.xlu0 %1605
        %1608 = vset.pattern.permute.xlu0 2
        %1609 = vperm.xlu0 %1608, %v312
        %v1610 = vpop.permute.xlu0 %1609
        %1612 = vset.pattern.permute.xlu0 2
        %1613 = vperm.xlu0 %1612, %v313
        %v1614 = vpop.permute.xlu0 %1613
        %1616 = vset.pattern.permute.xlu0 2
        %1617 = vperm.xlu0 %1616, %v314
        %v1618 = vpop.permute.xlu0 %1617
        %1620 = vset.pattern.permute.xlu0 2
        %1621 = vperm.xlu0 %1620, %v315
        %v1622 = vpop.permute.xlu0 %1621
        %1624 = vset.pattern.permute.xlu0 2
        %1625 = vperm.xlu0 %1624, %v316
        %v1626 = vpop.permute.xlu0 %1625
        %1628 = vset.pattern.permute.xlu0 2
        %1629 = vperm.xlu0 %1628, %v317
        %v1630 = vpop.permute.xlu0 %1629
        %1632 = vset.pattern.permute.xlu0 2
        %1633 = vperm.xlu0 %1632, %v318
        %v1634 = vpop.permute.xlu0 %1633
        %1636 = vset.pattern.permute.xlu0 2
        %1637 = vperm.xlu0 %1636, %v319
        %v1638 = vpop.permute.xlu0 %1637
        %1640 = vset.pattern.permute.xlu0 2
        %1641 = vperm.xlu0 %1640, %v320
        %v1642 = vpop.permute.xlu0 %1641
        %1644 = vset.pattern.permute.xlu0 2
        %1645 = vperm.xlu0 %1644, %v321
        %v1646 = vpop.permute.xlu0 %1645
        %1648 = vset.pattern.permute.xlu0 2
        %1649 = vperm.xlu0 %1648, %v322
        %v1650 = vpop.permute.xlu0 %1649
        %1652 = vset.pattern.permute.xlu0 2
        %1653 = vperm.xlu0 %1652, %v323
        %v1654 = vpop.permute.xlu0 %1653
        %1656 = vset.pattern.permute.xlu0 2
        %1657 = vperm.xlu0 %1656, %v324
        %v1658 = vpop.permute.xlu0 %1657
        %1660 = vset.pattern.permute.xlu0 2
        %1661 = vperm.xlu0 %1660, %v325
        %v1662 = vpop.permute.xlu0 %1661
        %1664 = vset.pattern.permute.xlu0 2
        %1665 = vperm.xlu0 %1664, %v326
        %v1666 = vpop.permute.xlu0 %1665
        %1668 = vset.pattern.permute.xlu0 2
        %1669 = vperm.xlu0 %1668, %v327
        %v1670 = vpop.permute.xlu0 %1669
        %1672 = vset.pattern.permute.xlu0 2
        %1673 = vperm.xlu0 %1672, %v328
        %v1674 = vpop.permute.xlu0 %1673
        %1676 = vset.pattern.permute.xlu0 2
        %1677 = vperm.xlu0 %1676, %v329
        %v1678 = vpop.permute.xlu0 %1677
        %1680 = vset.pattern.permute.xlu0 2
        %1681 = vperm.xlu0 %1680, %v330
        %v1682 = vpop.permute.xlu0 %1681
        %1684 = vset.pattern.permute.xlu0 2
        %1685 = vperm.xlu0 %1684, %v331
        %v1686 = vpop.permute.xlu0 %1685
        %1688 = vset.pattern.permute.xlu0 2
        %1689 = vperm.xlu0 %1688, %v332
        %v1690 = vpop.permute.xlu0 %1689
        %1692 = vset.pattern.permute.xlu0 2
        %1693 = vperm.xlu0 %1692, %v333
        %v1694 = vpop.permute.xlu0 %1693
        %1696 = vset.pattern.permute.xlu0 2
        %1697 = vperm.xlu0 %1696, %v334
        %v1698 = vpop.permute.xlu0 %1697
        %1700 = vset.pattern.permute.xlu0 2
        %1701 = vperm.xlu0 %1700, %v335
        %v1702 = vpop.permute.xlu0 %1701
        %1704 = vset.pattern.permute.xlu0 2
        %1705 = vperm.xlu0 %1704, %v336
        %v1706 = vpop.permute.xlu0 %1705
        %1708 = vset.pattern.permute.xlu0 2
        %1709 = vperm.xlu0 %1708, %v337
        %v1710 = vpop.permute.xlu0 %1709
        %1712 = vset.pattern.permute.xlu0 2
        %1713 = vperm.xlu0 %1712, %v338
        %v1714 = vpop.permute.xlu0 %1713
        %1716 = vset.pattern.permute.xlu0 2
        %1717 = vperm.xlu0 %1716, %v339
        %v1718 = vpop.permute.xlu0 %1717
        %1720 = vset.pattern.permute.xlu0 2
        %1721 = vperm.xlu0 %1720, %v340
        %v1722 = vpop.permute.xlu0 %1721
        %1724 = vset.pattern.permute.xlu0 2
        %1725 = vperm.xlu0 %1724, %v341
        %v1726 = vpop.permute.xlu0 %1725
        %1728 = vset.pattern.permute.xlu0 2
        %1729 = vperm.xlu0 %1728, %v342
        %v1730 = vpop.permute.xlu0 %1729
        %1732 = vset.pattern.permute.xlu0 2
        %1733 = vperm.xlu0 %1732, %v343
        %v1734 = vpop.permute.xlu0 %1733
        %1736 = vset.pattern.permute.xlu0 2
        %1737 = vperm.xlu0 %1736, %v344
        %v1738 = vpop.permute.xlu0 %1737
        %1740 = vset.pattern.permute.xlu0 2
        %1741 = vperm.xlu0 %1740, %v345
        %v1742 = vpop.permute.xlu0 %1741
        %1744 = vset.pattern.permute.xlu0 2
        %1745 = vperm.xlu0 %1744, %v346
        %v1746 = vpop.permute.xlu0 %1745
        %1748 = vset.pattern.permute.xlu0 2
        %1749 = vperm.xlu0 %1748, %v347
        %v1750 = vpop.permute.xlu0 %1749
        %1752 = vset.pattern.permute.xlu0 2
        %1753 = vperm.xlu0 %1752, %v348
        %v1754 = vpop.permute.xlu0 %1753
        %1756 = vset.pattern.permute.xlu0 2
        %1757 = vperm.xlu0 %1756, %v349
        %v1758 = vpop.permute.xlu0 %1757
        %v1760 = vperm.slane %v220, 2
        %v1761 = vmul.f32 %v1506, %v1760
        %v1762 = vmul.f32 %v1510, %v1760
        %v1763 = vmul.f32 %v1514, %v1760
        %v1764 = vmul.f32 %v1518, %v1760
        %v1765 = vmul.f32 %v1522, %v1760
        %v1766 = vmul.f32 %v1526, %v1760
        %v1767 = vmul.f32 %v1530, %v1760
        %v1768 = vmul.f32 %v1534, %v1760
        %v1769 = vmul.f32 %v1538, %v1760
        %v1770 = vmul.f32 %v1542, %v1760
        %v1771 = vmul.f32 %v1546, %v1760
        %v1772 = vmul.f32 %v1550, %v1760
        %v1773 = vmul.f32 %v1554, %v1760
        %v1774 = vmul.f32 %v1558, %v1760
        %v1775 = vmul.f32 %v1562, %v1760
        %v1776 = vmul.f32 %v1566, %v1760
        %v1777 = vmul.f32 %v1570, %v1760
        %v1778 = vmul.f32 %v1574, %v1760
        %v1779 = vmul.f32 %v1578, %v1760
        %v1780 = vmul.f32 %v1582, %v1760
        %v1781 = vmul.f32 %v1586, %v1760
        %v1782 = vmul.f32 %v1590, %v1760
        %v1783 = vmul.f32 %v1594, %v1760
        %v1784 = vmul.f32 %v1598, %v1760
        %v1785 = vmul.f32 %v1602, %v1760
        %v1786 = vmul.f32 %v1606, %v1760
        %v1787 = vmul.f32 %v1610, %v1760
        %v1788 = vmul.f32 %v1614, %v1760
        %v1789 = vmul.f32 %v1618, %v1760
        %v1790 = vmul.f32 %v1622, %v1760
        %v1791 = vmul.f32 %v1626, %v1760
        %v1792 = vmul.f32 %v1630, %v1760
        %v1793 = vmul.f32 %v1634, %v1760
        %v1794 = vmul.f32 %v1638, %v1760
        %v1795 = vmul.f32 %v1642, %v1760
        %v1796 = vmul.f32 %v1646, %v1760
        %v1797 = vmul.f32 %v1650, %v1760
        %v1798 = vmul.f32 %v1654, %v1760
        %v1799 = vmul.f32 %v1658, %v1760
        %v1800 = vmul.f32 %v1662, %v1760
        %v1801 = vmul.f32 %v1666, %v1760
        %v1802 = vmul.f32 %v1670, %v1760
        %v1803 = vmul.f32 %v1674, %v1760
        %v1804 = vmul.f32 %v1678, %v1760
        %v1805 = vmul.f32 %v1682, %v1760
        %v1806 = vmul.f32 %v1686, %v1760
        %v1807 = vmul.f32 %v1690, %v1760
        %v1808 = vmul.f32 %v1694, %v1760
        %v1809 = vmul.f32 %v1698, %v1760
        %v1810 = vmul.f32 %v1702, %v1760
        %v1811 = vmul.f32 %v1706, %v1760
        %v1812 = vmul.f32 %v1710, %v1760
        %v1813 = vmul.f32 %v1714, %v1760
        %v1814 = vmul.f32 %v1718, %v1760
        %v1815 = vmul.f32 %v1722, %v1760
        %v1816 = vmul.f32 %v1726, %v1760
        %v1817 = vmul.f32 %v1730, %v1760
        %v1818 = vmul.f32 %v1734, %v1760
        %v1819 = vmul.f32 %v1738, %v1760
        %v1820 = vmul.f32 %v1742, %v1760
        %v1821 = vmul.f32 %v1746, %v1760
        %v1822 = vmul.f32 %v1750, %v1760
        %v1823 = vmul.f32 %v1754, %v1760
        %v1824 = vmul.f32 %v1758, %v1760
        %v1825 = vadd.f32 %v1440, %v1761
        %v1826 = vadd.f32 %v1441, %v1762
        %v1827 = vadd.f32 %v1442, %v1763
        %v1828 = vadd.f32 %v1443, %v1764
        %v1829 = vadd.f32 %v1444, %v1765
        %v1830 = vadd.f32 %v1445, %v1766
        %v1831 = vadd.f32 %v1446, %v1767
        %v1832 = vadd.f32 %v1447, %v1768
        %v1833 = vadd.f32 %v1448, %v1769
        %v1834 = vadd.f32 %v1449, %v1770
        %v1835 = vadd.f32 %v1450, %v1771
        %v1836 = vadd.f32 %v1451, %v1772
        %v1837 = vadd.f32 %v1452, %v1773
        %v1838 = vadd.f32 %v1453, %v1774
        %v1839 = vadd.f32 %v1454, %v1775
        %v1840 = vadd.f32 %v1455, %v1776
        %v1841 = vadd.f32 %v1456, %v1777
        %v1842 = vadd.f32 %v1457, %v1778
        %v1843 = vadd.f32 %v1458, %v1779
        %v1844 = vadd.f32 %v1459, %v1780
        %v1845 = vadd.f32 %v1460, %v1781
        %v1846 = vadd.f32 %v1461, %v1782
        %v1847 = vadd.f32 %v1462, %v1783
        %v1848 = vadd.f32 %v1463, %v1784
        %v1849 = vadd.f32 %v1464, %v1785
        %v1850 = vadd.f32 %v1465, %v1786
        %v1851 = vadd.f32 %v1466, %v1787
        %v1852 = vadd.f32 %v1467, %v1788
        %v1853 = vadd.f32 %v1468, %v1789
        %v1854 = vadd.f32 %v1469, %v1790
        %v1855 = vadd.f32 %v1470, %v1791
        %v1856 = vadd.f32 %v1471, %v1792
        %v1857 = vadd.f32 %v1472, %v1793
        %v1858 = vadd.f32 %v1473, %v1794
        %v1859 = vadd.f32 %v1474, %v1795
        %v1860 = vadd.f32 %v1475, %v1796
        %v1861 = vadd.f32 %v1476, %v1797
        %v1862 = vadd.f32 %v1477, %v1798
        %v1863 = vadd.f32 %v1478, %v1799
        %v1864 = vadd.f32 %v1479, %v1800
        %v1865 = vadd.f32 %v1480, %v1801
        %v1866 = vadd.f32 %v1481, %v1802
        %v1867 = vadd.f32 %v1482, %v1803
        %v1868 = vadd.f32 %v1483, %v1804
        %v1869 = vadd.f32 %v1484, %v1805
        %v1870 = vadd.f32 %v1485, %v1806
        %v1871 = vadd.f32 %v1486, %v1807
        %v1872 = vadd.f32 %v1487, %v1808
        %v1873 = vadd.f32 %v1488, %v1809
        %v1874 = vadd.f32 %v1489, %v1810
        %v1875 = vadd.f32 %v1490, %v1811
        %v1876 = vadd.f32 %v1491, %v1812
        %v1877 = vadd.f32 %v1492, %v1813
        %v1878 = vadd.f32 %v1493, %v1814
        %v1879 = vadd.f32 %v1494, %v1815
        %v1880 = vadd.f32 %v1495, %v1816
        %v1881 = vadd.f32 %v1496, %v1817
        %v1882 = vadd.f32 %v1497, %v1818
        %v1883 = vadd.f32 %v1498, %v1819
        %v1884 = vadd.f32 %v1499, %v1820
        %v1885 = vadd.f32 %v1500, %v1821
        %v1886 = vadd.f32 %v1501, %v1822
        %v1887 = vadd.f32 %v1502, %v1823
        %v1888 = vadd.f32 %v1503, %v1824
        %1889 = vset.pattern.permute.xlu0 3
        %1890 = vperm.xlu0 %1889, %v286
        %v1891 = vpop.permute.xlu0 %1890
        %1893 = vset.pattern.permute.xlu0 3
        %1894 = vperm.xlu0 %1893, %v287
        %v1895 = vpop.permute.xlu0 %1894
        %1897 = vset.pattern.permute.xlu0 3
        %1898 = vperm.xlu0 %1897, %v288
        %v1899 = vpop.permute.xlu0 %1898
        %1901 = vset.pattern.permute.xlu0 3
        %1902 = vperm.xlu0 %1901, %v289
        %v1903 = vpop.permute.xlu0 %1902
        %1905 = vset.pattern.permute.xlu0 3
        %1906 = vperm.xlu0 %1905, %v290
        %v1907 = vpop.permute.xlu0 %1906
        %1909 = vset.pattern.permute.xlu0 3
        %1910 = vperm.xlu0 %1909, %v291
        %v1911 = vpop.permute.xlu0 %1910
        %1913 = vset.pattern.permute.xlu0 3
        %1914 = vperm.xlu0 %1913, %v292
        %v1915 = vpop.permute.xlu0 %1914
        %1917 = vset.pattern.permute.xlu0 3
        %1918 = vperm.xlu0 %1917, %v293
        %v1919 = vpop.permute.xlu0 %1918
        %1921 = vset.pattern.permute.xlu0 3
        %1922 = vperm.xlu0 %1921, %v294
        %v1923 = vpop.permute.xlu0 %1922
        %1925 = vset.pattern.permute.xlu0 3
        %1926 = vperm.xlu0 %1925, %v295
        %v1927 = vpop.permute.xlu0 %1926
        %1929 = vset.pattern.permute.xlu0 3
        %1930 = vperm.xlu0 %1929, %v296
        %v1931 = vpop.permute.xlu0 %1930
        %1933 = vset.pattern.permute.xlu0 3
        %1934 = vperm.xlu0 %1933, %v297
        %v1935 = vpop.permute.xlu0 %1934
        %1937 = vset.pattern.permute.xlu0 3
        %1938 = vperm.xlu0 %1937, %v298
        %v1939 = vpop.permute.xlu0 %1938
        %1941 = vset.pattern.permute.xlu0 3
        %1942 = vperm.xlu0 %1941, %v299
        %v1943 = vpop.permute.xlu0 %1942
        %1945 = vset.pattern.permute.xlu0 3
        %1946 = vperm.xlu0 %1945, %v300
        %v1947 = vpop.permute.xlu0 %1946
        %1949 = vset.pattern.permute.xlu0 3
        %1950 = vperm.xlu0 %1949, %v301
        %v1951 = vpop.permute.xlu0 %1950
        %1953 = vset.pattern.permute.xlu0 3
        %1954 = vperm.xlu0 %1953, %v302
        %v1955 = vpop.permute.xlu0 %1954
        %1957 = vset.pattern.permute.xlu0 3
        %1958 = vperm.xlu0 %1957, %v303
        %v1959 = vpop.permute.xlu0 %1958
        %1961 = vset.pattern.permute.xlu0 3
        %1962 = vperm.xlu0 %1961, %v304
        %v1963 = vpop.permute.xlu0 %1962
        %1965 = vset.pattern.permute.xlu0 3
        %1966 = vperm.xlu0 %1965, %v305
        %v1967 = vpop.permute.xlu0 %1966
        %1969 = vset.pattern.permute.xlu0 3
        %1970 = vperm.xlu0 %1969, %v306
        %v1971 = vpop.permute.xlu0 %1970
        %1973 = vset.pattern.permute.xlu0 3
        %1974 = vperm.xlu0 %1973, %v307
        %v1975 = vpop.permute.xlu0 %1974
        %1977 = vset.pattern.permute.xlu0 3
        %1978 = vperm.xlu0 %1977, %v308
        %v1979 = vpop.permute.xlu0 %1978
        %1981 = vset.pattern.permute.xlu0 3
        %1982 = vperm.xlu0 %1981, %v309
        %v1983 = vpop.permute.xlu0 %1982
        %1985 = vset.pattern.permute.xlu0 3
        %1986 = vperm.xlu0 %1985, %v310
        %v1987 = vpop.permute.xlu0 %1986
        %1989 = vset.pattern.permute.xlu0 3
        %1990 = vperm.xlu0 %1989, %v311
        %v1991 = vpop.permute.xlu0 %1990
        %1993 = vset.pattern.permute.xlu0 3
        %1994 = vperm.xlu0 %1993, %v312
        %v1995 = vpop.permute.xlu0 %1994
        %1997 = vset.pattern.permute.xlu0 3
        %1998 = vperm.xlu0 %1997, %v313
        %v1999 = vpop.permute.xlu0 %1998
        %2001 = vset.pattern.permute.xlu0 3
        %2002 = vperm.xlu0 %2001, %v314
        %v2003 = vpop.permute.xlu0 %2002
        %2005 = vset.pattern.permute.xlu0 3
        %2006 = vperm.xlu0 %2005, %v315
        %v2007 = vpop.permute.xlu0 %2006
        %2009 = vset.pattern.permute.xlu0 3
        %2010 = vperm.xlu0 %2009, %v316
        %v2011 = vpop.permute.xlu0 %2010
        %2013 = vset.pattern.permute.xlu0 3
        %2014 = vperm.xlu0 %2013, %v317
        %v2015 = vpop.permute.xlu0 %2014
        %2017 = vset.pattern.permute.xlu0 3
        %2018 = vperm.xlu0 %2017, %v318
        %v2019 = vpop.permute.xlu0 %2018
        %2021 = vset.pattern.permute.xlu0 3
        %2022 = vperm.xlu0 %2021, %v319
        %v2023 = vpop.permute.xlu0 %2022
        %2025 = vset.pattern.permute.xlu0 3
        %2026 = vperm.xlu0 %2025, %v320
        %v2027 = vpop.permute.xlu0 %2026
        %2029 = vset.pattern.permute.xlu0 3
        %2030 = vperm.xlu0 %2029, %v321
        %v2031 = vpop.permute.xlu0 %2030
        %2033 = vset.pattern.permute.xlu0 3
        %2034 = vperm.xlu0 %2033, %v322
        %v2035 = vpop.permute.xlu0 %2034
        %2037 = vset.pattern.permute.xlu0 3
        %2038 = vperm.xlu0 %2037, %v323
        %v2039 = vpop.permute.xlu0 %2038
        %2041 = vset.pattern.permute.xlu0 3
        %2042 = vperm.xlu0 %2041, %v324
        %v2043 = vpop.permute.xlu0 %2042
        %2045 = vset.pattern.permute.xlu0 3
        %2046 = vperm.xlu0 %2045, %v325
        %v2047 = vpop.permute.xlu0 %2046
        %2049 = vset.pattern.permute.xlu0 3
        %2050 = vperm.xlu0 %2049, %v326
        %v2051 = vpop.permute.xlu0 %2050
        %2053 = vset.pattern.permute.xlu0 3
        %2054 = vperm.xlu0 %2053, %v327
        %v2055 = vpop.permute.xlu0 %2054
        %2057 = vset.pattern.permute.xlu0 3
        %2058 = vperm.xlu0 %2057, %v328
        %v2059 = vpop.permute.xlu0 %2058
        %2061 = vset.pattern.permute.xlu0 3
        %2062 = vperm.xlu0 %2061, %v329
        %v2063 = vpop.permute.xlu0 %2062
        %2065 = vset.pattern.permute.xlu0 3
        %2066 = vperm.xlu0 %2065, %v330
        %v2067 = vpop.permute.xlu0 %2066
        %2069 = vset.pattern.permute.xlu0 3
        %2070 = vperm.xlu0 %2069, %v331
        %v2071 = vpop.permute.xlu0 %2070
        %2073 = vset.pattern.permute.xlu0 3
        %2074 = vperm.xlu0 %2073, %v332
        %v2075 = vpop.permute.xlu0 %2074
        %2077 = vset.pattern.permute.xlu0 3
        %2078 = vperm.xlu0 %2077, %v333
        %v2079 = vpop.permute.xlu0 %2078
        %2081 = vset.pattern.permute.xlu0 3
        %2082 = vperm.xlu0 %2081, %v334
        %v2083 = vpop.permute.xlu0 %2082
        %2085 = vset.pattern.permute.xlu0 3
        %2086 = vperm.xlu0 %2085, %v335
        %v2087 = vpop.permute.xlu0 %2086
        %2089 = vset.pattern.permute.xlu0 3
        %2090 = vperm.xlu0 %2089, %v336
        %v2091 = vpop.permute.xlu0 %2090
        %2093 = vset.pattern.permute.xlu0 3
        %2094 = vperm.xlu0 %2093, %v337
        %v2095 = vpop.permute.xlu0 %2094
        %2097 = vset.pattern.permute.xlu0 3
        %2098 = vperm.xlu0 %2097, %v338
        %v2099 = vpop.permute.xlu0 %2098
        %2101 = vset.pattern.permute.xlu0 3
        %2102 = vperm.xlu0 %2101, %v339
        %v2103 = vpop.permute.xlu0 %2102
        %2105 = vset.pattern.permute.xlu0 3
        %2106 = vperm.xlu0 %2105, %v340
        %v2107 = vpop.permute.xlu0 %2106
        %2109 = vset.pattern.permute.xlu0 3
        %2110 = vperm.xlu0 %2109, %v341
        %v2111 = vpop.permute.xlu0 %2110
        %2113 = vset.pattern.permute.xlu0 3
        %2114 = vperm.xlu0 %2113, %v342
        %v2115 = vpop.permute.xlu0 %2114
        %2117 = vset.pattern.permute.xlu0 3
        %2118 = vperm.xlu0 %2117, %v343
        %v2119 = vpop.permute.xlu0 %2118
        %2121 = vset.pattern.permute.xlu0 3
        %2122 = vperm.xlu0 %2121, %v344
        %v2123 = vpop.permute.xlu0 %2122
        %2125 = vset.pattern.permute.xlu0 3
        %2126 = vperm.xlu0 %2125, %v345
        %v2127 = vpop.permute.xlu0 %2126
        %2129 = vset.pattern.permute.xlu0 3
        %2130 = vperm.xlu0 %2129, %v346
        %v2131 = vpop.permute.xlu0 %2130
        %2133 = vset.pattern.permute.xlu0 3
        %2134 = vperm.xlu0 %2133, %v347
        %v2135 = vpop.permute.xlu0 %2134
        %2137 = vset.pattern.permute.xlu0 3
        %2138 = vperm.xlu0 %2137, %v348
        %v2139 = vpop.permute.xlu0 %2138
        %2141 = vset.pattern.permute.xlu0 3
        %2142 = vperm.xlu0 %2141, %v349
        %v2143 = vpop.permute.xlu0 %2142
        %v2145 = vperm.slane %v220, 3
        %v2146 = vmul.f32 %v1891, %v2145
        %v2147 = vmul.f32 %v1895, %v2145
        %v2148 = vmul.f32 %v1899, %v2145
        %v2149 = vmul.f32 %v1903, %v2145
        %v2150 = vmul.f32 %v1907, %v2145
        %v2151 = vmul.f32 %v1911, %v2145
        %v2152 = vmul.f32 %v1915, %v2145
        %v2153 = vmul.f32 %v1919, %v2145
        %v2154 = vmul.f32 %v1923, %v2145
        %v2155 = vmul.f32 %v1927, %v2145
        %v2156 = vmul.f32 %v1931, %v2145
        %v2157 = vmul.f32 %v1935, %v2145
        %v2158 = vmul.f32 %v1939, %v2145
        %v2159 = vmul.f32 %v1943, %v2145
        %v2160 = vmul.f32 %v1947, %v2145
        %v2161 = vmul.f32 %v1951, %v2145
        %v2162 = vmul.f32 %v1955, %v2145
        %v2163 = vmul.f32 %v1959, %v2145
        %v2164 = vmul.f32 %v1963, %v2145
        %v2165 = vmul.f32 %v1967, %v2145
        %v2166 = vmul.f32 %v1971, %v2145
        %v2167 = vmul.f32 %v1975, %v2145
        %v2168 = vmul.f32 %v1979, %v2145
        %v2169 = vmul.f32 %v1983, %v2145
        %v2170 = vmul.f32 %v1987, %v2145
        %v2171 = vmul.f32 %v1991, %v2145
        %v2172 = vmul.f32 %v1995, %v2145
        %v2173 = vmul.f32 %v1999, %v2145
        %v2174 = vmul.f32 %v2003, %v2145
        %v2175 = vmul.f32 %v2007, %v2145
        %v2176 = vmul.f32 %v2011, %v2145
        %v2177 = vmul.f32 %v2015, %v2145
        %v2178 = vmul.f32 %v2019, %v2145
        %v2179 = vmul.f32 %v2023, %v2145
        %v2180 = vmul.f32 %v2027, %v2145
        %v2181 = vmul.f32 %v2031, %v2145
        %v2182 = vmul.f32 %v2035, %v2145
        %v2183 = vmul.f32 %v2039, %v2145
        %v2184 = vmul.f32 %v2043, %v2145
        %v2185 = vmul.f32 %v2047, %v2145
        %v2186 = vmul.f32 %v2051, %v2145
        %v2187 = vmul.f32 %v2055, %v2145
        %v2188 = vmul.f32 %v2059, %v2145
        %v2189 = vmul.f32 %v2063, %v2145
        %v2190 = vmul.f32 %v2067, %v2145
        %v2191 = vmul.f32 %v2071, %v2145
        %v2192 = vmul.f32 %v2075, %v2145
        %v2193 = vmul.f32 %v2079, %v2145
        %v2194 = vmul.f32 %v2083, %v2145
        %v2195 = vmul.f32 %v2087, %v2145
        %v2196 = vmul.f32 %v2091, %v2145
        %v2197 = vmul.f32 %v2095, %v2145
        %v2198 = vmul.f32 %v2099, %v2145
        %v2199 = vmul.f32 %v2103, %v2145
        %v2200 = vmul.f32 %v2107, %v2145
        %v2201 = vmul.f32 %v2111, %v2145
        %v2202 = vmul.f32 %v2115, %v2145
        %v2203 = vmul.f32 %v2119, %v2145
        %v2204 = vmul.f32 %v2123, %v2145
        %v2205 = vmul.f32 %v2127, %v2145
        %v2206 = vmul.f32 %v2131, %v2145
        %v2207 = vmul.f32 %v2135, %v2145
        %v2208 = vmul.f32 %v2139, %v2145
        %v2209 = vmul.f32 %v2143, %v2145
        %v2210 = vadd.f32 %v1825, %v2146
        %v2211 = vadd.f32 %v1826, %v2147
        %v2212 = vadd.f32 %v1827, %v2148
        %v2213 = vadd.f32 %v1828, %v2149
        %v2214 = vadd.f32 %v1829, %v2150
        %v2215 = vadd.f32 %v1830, %v2151
        %v2216 = vadd.f32 %v1831, %v2152
        %v2217 = vadd.f32 %v1832, %v2153
        %v2218 = vadd.f32 %v1833, %v2154
        %v2219 = vadd.f32 %v1834, %v2155
        %v2220 = vadd.f32 %v1835, %v2156
        %v2221 = vadd.f32 %v1836, %v2157
        %v2222 = vadd.f32 %v1837, %v2158
        %v2223 = vadd.f32 %v1838, %v2159
        %v2224 = vadd.f32 %v1839, %v2160
        %v2225 = vadd.f32 %v1840, %v2161
        %v2226 = vadd.f32 %v1841, %v2162
        %v2227 = vadd.f32 %v1842, %v2163
        %v2228 = vadd.f32 %v1843, %v2164
        %v2229 = vadd.f32 %v1844, %v2165
        %v2230 = vadd.f32 %v1845, %v2166
        %v2231 = vadd.f32 %v1846, %v2167
        %v2232 = vadd.f32 %v1847, %v2168
        %v2233 = vadd.f32 %v1848, %v2169
        %v2234 = vadd.f32 %v1849, %v2170
        %v2235 = vadd.f32 %v1850, %v2171
        %v2236 = vadd.f32 %v1851, %v2172
        %v2237 = vadd.f32 %v1852, %v2173
        %v2238 = vadd.f32 %v1853, %v2174
        %v2239 = vadd.f32 %v1854, %v2175
        %v2240 = vadd.f32 %v1855, %v2176
        %v2241 = vadd.f32 %v1856, %v2177
        %v2242 = vadd.f32 %v1857, %v2178
        %v2243 = vadd.f32 %v1858, %v2179
        %v2244 = vadd.f32 %v1859, %v2180
        %v2245 = vadd.f32 %v1860, %v2181
        %v2246 = vadd.f32 %v1861, %v2182
        %v2247 = vadd.f32 %v1862, %v2183
        %v2248 = vadd.f32 %v1863, %v2184
        %v2249 = vadd.f32 %v1864, %v2185
        %v2250 = vadd.f32 %v1865, %v2186
        %v2251 = vadd.f32 %v1866, %v2187
        %v2252 = vadd.f32 %v1867, %v2188
        %v2253 = vadd.f32 %v1868, %v2189
        %v2254 = vadd.f32 %v1869, %v2190
        %v2255 = vadd.f32 %v1870, %v2191
        %v2256 = vadd.f32 %v1871, %v2192
        %v2257 = vadd.f32 %v1872, %v2193
        %v2258 = vadd.f32 %v1873, %v2194
        %v2259 = vadd.f32 %v1874, %v2195
        %v2260 = vadd.f32 %v1875, %v2196
        %v2261 = vadd.f32 %v1876, %v2197
        %v2262 = vadd.f32 %v1877, %v2198
        %v2263 = vadd.f32 %v1878, %v2199
        %v2264 = vadd.f32 %v1879, %v2200
        %v2265 = vadd.f32 %v1880, %v2201
        %v2266 = vadd.f32 %v1881, %v2202
        %v2267 = vadd.f32 %v1882, %v2203
        %v2268 = vadd.f32 %v1883, %v2204
        %v2269 = vadd.f32 %v1884, %v2205
        %v2270 = vadd.f32 %v1885, %v2206
        %v2271 = vadd.f32 %v1886, %v2207
        %v2272 = vadd.f32 %v1887, %v2208
        %v2273 = vadd.f32 %v1888, %v2209
        %v2274 = vmax.f32 %v2210, 0.0
        %v2275 = vmax.f32 %v2211, 0.0
        %v2276 = vmax.f32 %v2212, 0.0
        %v2277 = vmax.f32 %v2213, 0.0
        %v2278 = vmax.f32 %v2214, 0.0
        %v2279 = vmax.f32 %v2215, 0.0
        %v2280 = vmax.f32 %v2216, 0.0
        %v2281 = vmax.f32 %v2217, 0.0
        %v2282 = vmax.f32 %v2218, 0.0
        %v2283 = vmax.f32 %v2219, 0.0
        %v2284 = vmax.f32 %v2220, 0.0
        %v2285 = vmax.f32 %v2221, 0.0
        %v2286 = vmax.f32 %v2222, 0.0
        %v2287 = vmax.f32 %v2223, 0.0
        %v2288 = vmax.f32 %v2224, 0.0
        %v2289 = vmax.f32 %v2225, 0.0
        %v2290 = vmax.f32 %v2226, 0.0
        %v2291 = vmax.f32 %v2227, 0.0
        %v2292 = vmax.f32 %v2228, 0.0
        %v2293 = vmax.f32 %v2229, 0.0
        %v2294 = vmax.f32 %v2230, 0.0
        %v2295 = vmax.f32 %v2231, 0.0
        %v2296 = vmax.f32 %v2232, 0.0
        %v2297 = vmax.f32 %v2233, 0.0
        %v2298 = vmax.f32 %v2234, 0.0
        %v2299 = vmax.f32 %v2235, 0.0
        %v2300 = vmax.f32 %v2236, 0.0
        %v2301 = vmax.f32 %v2237, 0.0
        %v2302 = vmax.f32 %v2238, 0.0
        %v2303 = vmax.f32 %v2239, 0.0
        %v2304 = vmax.f32 %v2240, 0.0
        %v2305 = vmax.f32 %v2241, 0.0
        %v2306 = vmax.f32 %v2242, 0.0
        %v2307 = vmax.f32 %v2243, 0.0
        %v2308 = vmax.f32 %v2244, 0.0
        %v2309 = vmax.f32 %v2245, 0.0
        %v2310 = vmax.f32 %v2246, 0.0
        %v2311 = vmax.f32 %v2247, 0.0
        %v2312 = vmax.f32 %v2248, 0.0
        %v2313 = vmax.f32 %v2249, 0.0
        %v2314 = vmax.f32 %v2250, 0.0
        %v2315 = vmax.f32 %v2251, 0.0
        %v2316 = vmax.f32 %v2252, 0.0
        %v2317 = vmax.f32 %v2253, 0.0
        %v2318 = vmax.f32 %v2254, 0.0
        %v2319 = vmax.f32 %v2255, 0.0
        %v2320 = vmax.f32 %v2256, 0.0
        %v2321 = vmax.f32 %v2257, 0.0
        %v2322 = vmax.f32 %v2258, 0.0
        %v2323 = vmax.f32 %v2259, 0.0
        %v2324 = vmax.f32 %v2260, 0.0
        %v2325 = vmax.f32 %v2261, 0.0
        %v2326 = vmax.f32 %v2262, 0.0
        %v2327 = vmax.f32 %v2263, 0.0
        %v2328 = vmax.f32 %v2264, 0.0
        %v2329 = vmax.f32 %v2265, 0.0
        %v2330 = vmax.f32 %v2266, 0.0
        %v2331 = vmax.f32 %v2267, 0.0
        %v2332 = vmax.f32 %v2268, 0.0
        %v2333 = vmax.f32 %v2269, 0.0
        %v2334 = vmax.f32 %v2270, 0.0
        %v2335 = vmax.f32 %v2271, 0.0
        %v2336 = vmax.f32 %v2272, 0.0
        %v2337 = vmax.f32 %v2273, 0.0
        %v2338 = vld [vmem:[%s2] sm:$0xff]
        %v2339 = vld [vmem:[%s2 + $0x8] sm:$0xff]
        %v2340 = vld [vmem:[%s2 + $0x10] sm:$0xff]
        %v2341 = vld [vmem:[%s2 + $0x18] sm:$0xff]
        %v2342 = vld [vmem:[%s2 + $0x20] sm:$0xff]
        %v2343 = vld [vmem:[%s2 + $0x28] sm:$0xff]
        %v2344 = vld [vmem:[%s2 + $0x30] sm:$0xff]
        %v2345 = vld [vmem:[%s2 + $0x38] sm:$0xff]
        %v2346 = vld [vmem:[%s2 + $0x40] sm:$0xff]
        %v2347 = vld [vmem:[%s2 + $0x48] sm:$0xff]
        %v2348 = vld [vmem:[%s2 + $0x50] sm:$0xff]
        %v2349 = vld [vmem:[%s2 + $0x58] sm:$0xff]
        %v2350 = vld [vmem:[%s2 + $0x60] sm:$0xff]
        %v2351 = vld [vmem:[%s2 + $0x68] sm:$0xff]
        %v2352 = vld [vmem:[%s2 + $0x70] sm:$0xff]
        %v2353 = vld [vmem:[%s2 + $0x78] sm:$0xff]
        %v2354 = vld [vmem:[%s2 + $0x80] sm:$0xff]
        %v2355 = vld [vmem:[%s2 + $0x88] sm:$0xff]
        %v2356 = vld [vmem:[%s2 + $0x90] sm:$0xff]
        %v2357 = vld [vmem:[%s2 + $0x98] sm:$0xff]
        %v2358 = vld [vmem:[%s2 + $0xa0] sm:$0xff]
        %v2359 = vld [vmem:[%s2 + $0xa8] sm:$0xff]
        %v2360 = vld [vmem:[%s2 + $0xb0] sm:$0xff]
        %v2361 = vld [vmem:[%s2 + $0xb8] sm:$0xff]
        %v2362 = vld [vmem:[%s2 + $0xc0] sm:$0xff]
        %v2363 = vld [vmem:[%s2 + $0xc8] sm:$0xff]
        %v2364 = vld [vmem:[%s2 + $0xd0] sm:$0xff]
        %v2365 = vld [vmem:[%s2 + $0xd8] sm:$0xff]
        %v2366 = vld [vmem:[%s2 + $0xe0] sm:$0xff]
        %v2367 = vld [vmem:[%s2 + $0xe8] sm:$0xff]
        %v2368 = vld [vmem:[%s2 + $0xf0] sm:$0xff]
        %v2369 = vld [vmem:[%s2 + $0xf8] sm:$0xff]
        %v2370 = vld [vmem:[%s2 + $0x100] sm:$0xff]
        %v2371 = vld [vmem:[%s2 + $0x108] sm:$0xff]
        %v2372 = vld [vmem:[%s2 + $0x110] sm:$0xff]
        %v2373 = vld [vmem:[%s2 + $0x118] sm:$0xff]
        %v2374 = vld [vmem:[%s2 + $0x120] sm:$0xff]
        %v2375 = vld [vmem:[%s2 + $0x128] sm:$0xff]
        %v2376 = vld [vmem:[%s2 + $0x130] sm:$0xff]
        %v2377 = vld [vmem:[%s2 + $0x138] sm:$0xff]
        %v2378 = vld [vmem:[%s2 + $0x140] sm:$0xff]
        %v2379 = vld [vmem:[%s2 + $0x148] sm:$0xff]
        %v2380 = vld [vmem:[%s2 + $0x150] sm:$0xff]
        %v2381 = vld [vmem:[%s2 + $0x158] sm:$0xff]
        %v2382 = vld [vmem:[%s2 + $0x160] sm:$0xff]
        %v2383 = vld [vmem:[%s2 + $0x168] sm:$0xff]
        %v2384 = vld [vmem:[%s2 + $0x170] sm:$0xff]
        %v2385 = vld [vmem:[%s2 + $0x178] sm:$0xff]
        %v2386 = vld [vmem:[%s2 + $0x180] sm:$0xff]
        %v2387 = vld [vmem:[%s2 + $0x188] sm:$0xff]
        %v2388 = vld [vmem:[%s2 + $0x190] sm:$0xff]
        %v2389 = vld [vmem:[%s2 + $0x198] sm:$0xff]
        %v2390 = vld [vmem:[%s2 + $0x1a0] sm:$0xff]
        %v2391 = vld [vmem:[%s2 + $0x1a8] sm:$0xff]
        %v2392 = vld [vmem:[%s2 + $0x1b0] sm:$0xff]
        %v2393 = vld [vmem:[%s2 + $0x1b8] sm:$0xff]
        %v2394 = vld [vmem:[%s2 + $0x1c0] sm:$0xff]
        %v2395 = vld [vmem:[%s2 + $0x1c8] sm:$0xff]
        %v2396 = vld [vmem:[%s2 + $0x1d0] sm:$0xff]
        %v2397 = vld [vmem:[%s2 + $0x1d8] sm:$0xff]
        %v2398 = vld [vmem:[%s2 + $0x1e0] sm:$0xff]
        %v2399 = vld [vmem:[%s2 + $0x1e8] sm:$0xff]
        %v2400 = vld [vmem:[%s2 + $0x1f0] sm:$0xff]
        %v2401 = vld [vmem:[%s2 + $0x1f8] sm:$0xff]
        %v2402 = vld [vmem:[%s2 + $0x200] sm:$0xff]
        %v2403 = vld [vmem:[%s2 + $0x208] sm:$0xff]
        %v2404 = vld [vmem:[%s2 + $0x210] sm:$0xff]
        %v2405 = vld [vmem:[%s2 + $0x218] sm:$0xff]
        %v2406 = vld [vmem:[%s2 + $0x220] sm:$0xff]
        %v2407 = vld [vmem:[%s2 + $0x228] sm:$0xff]
        %v2408 = vld [vmem:[%s2 + $0x230] sm:$0xff]
        %v2409 = vld [vmem:[%s2 + $0x238] sm:$0xff]
        %v2410 = vld [vmem:[%s2 + $0x240] sm:$0xff]
        %v2411 = vld [vmem:[%s2 + $0x248] sm:$0xff]
        %v2412 = vld [vmem:[%s2 + $0x250] sm:$0xff]
        %v2413 = vld [vmem:[%s2 + $0x258] sm:$0xff]
        %v2414 = vld [vmem:[%s2 + $0x260] sm:$0xff]
        %v2415 = vld [vmem:[%s2 + $0x268] sm:$0xff]
        %v2416 = vld [vmem:[%s2 + $0x270] sm:$0xff]
        %v2417 = vld [vmem:[%s2 + $0x278] sm:$0xff]
        %v2418 = vld [vmem:[%s2 + $0x280] sm:$0xff]
        %v2419 = vld [vmem:[%s2 + $0x288] sm:$0xff]
        %v2420 = vld [vmem:[%s2 + $0x290] sm:$0xff]
        %v2421 = vld [vmem:[%s2 + $0x298] sm:$0xff]
        %v2422 = vld [vmem:[%s2 + $0x2a0] sm:$0xff]
        %v2423 = vld [vmem:[%s2 + $0x2a8] sm:$0xff]
        %v2424 = vld [vmem:[%s2 + $0x2b0] sm:$0xff]
        %v2425 = vld [vmem:[%s2 + $0x2b8] sm:$0xff]
        %v2426 = vld [vmem:[%s2 + $0x2c0] sm:$0xff]
        %v2427 = vld [vmem:[%s2 + $0x2c8] sm:$0xff]
        %v2428 = vld [vmem:[%s2 + $0x2d0] sm:$0xff]
        %v2429 = vld [vmem:[%s2 + $0x2d8] sm:$0xff]
        %v2430 = vld [vmem:[%s2 + $0x2e0] sm:$0xff]
        %v2431 = vld [vmem:[%s2 + $0x2e8] sm:$0xff]
        %v2432 = vld [vmem:[%s2 + $0x2f0] sm:$0xff]
        %v2433 = vld [vmem:[%s2 + $0x2f8] sm:$0xff]
        %v2434 = vld [vmem:[%s2 + $0x300] sm:$0xff]
        %v2435 = vld [vmem:[%s2 + $0x308] sm:$0xff]
        %v2436 = vld [vmem:[%s2 + $0x310] sm:$0xff]
        %v2437 = vld [vmem:[%s2 + $0x318] sm:$0xff]
        %v2438 = vld [vmem:[%s2 + $0x320] sm:$0xff]
        %v2439 = vld [vmem:[%s2 + $0x328] sm:$0xff]
        %v2440 = vld [vmem:[%s2 + $0x330] sm:$0xff]
        %v2441 = vld [vmem:[%s2 + $0x338] sm:$0xff]
        %v2442 = vld [vmem:[%s2 + $0x340] sm:$0xff]
        %v2443 = vld [vmem:[%s2 + $0x348] sm:$0xff]
        %v2444 = vld [vmem:[%s2 + $0x350] sm:$0xff]
        %v2445 = vld [vmem:[%s2 + $0x358] sm:$0xff]
        %v2446 = vld [vmem:[%s2 + $0x360] sm:$0xff]
        %v2447 = vld [vmem:[%s2 + $0x368] sm:$0xff]
        %v2448 = vld [vmem:[%s2 + $0x370] sm:$0xff]
        %v2449 = vld [vmem:[%s2 + $0x378] sm:$0xff]
        %v2450 = vld [vmem:[%s2 + $0x380] sm:$0xff]
        %v2451 = vld [vmem:[%s2 + $0x388] sm:$0xff]
        %v2452 = vld [vmem:[%s2 + $0x390] sm:$0xff]
        %v2453 = vld [vmem:[%s2 + $0x398] sm:$0xff]
        %v2454 = vld [vmem:[%s2 + $0x3a0] sm:$0xff]
        %v2455 = vld [vmem:[%s2 + $0x3a8] sm:$0xff]
        %v2456 = vld [vmem:[%s2 + $0x3b0] sm:$0xff]
        %v2457 = vld [vmem:[%s2 + $0x3b8] sm:$0xff]
        %v2458 = vld [vmem:[%s2 + $0x3c0] sm:$0xff]
        %v2459 = vld [vmem:[%s2 + $0x3c8] sm:$0xff]
        %v2460 = vld [vmem:[%s2 + $0x3d0] sm:$0xff]
        %v2461 = vld [vmem:[%s2 + $0x3d8] sm:$0xff]
        %v2462 = vld [vmem:[%s2 + $0x3e0] sm:$0xff]
        %v2463 = vld [vmem:[%s2 + $0x3e8] sm:$0xff]
        %v2464 = vld [vmem:[%s2 + $0x3f0] sm:$0xff]
        %v2465 = vld [vmem:[%s2 + $0x3f8] sm:$0xff]
        %v2466 = vpack.c.bf16 %v2275, %v2274
        %v2467 = vpack.c.bf16 %v2277, %v2276
        %v2468 = vpack.c.bf16 %v2279, %v2278
        %v2469 = vpack.c.bf16 %v2281, %v2280
        %v2470 = vpack.c.bf16 %v2283, %v2282
        %v2471 = vpack.c.bf16 %v2285, %v2284
        %v2472 = vpack.c.bf16 %v2287, %v2286
        %v2473 = vpack.c.bf16 %v2289, %v2288
        %v2474 = vpack.c.bf16 %v2291, %v2290
        %v2475 = vpack.c.bf16 %v2293, %v2292
        %v2476 = vpack.c.bf16 %v2295, %v2294
        %v2477 = vpack.c.bf16 %v2297, %v2296
        %v2478 = vpack.c.bf16 %v2299, %v2298
        %v2479 = vpack.c.bf16 %v2301, %v2300
        %v2480 = vpack.c.bf16 %v2303, %v2302
        %v2481 = vpack.c.bf16 %v2305, %v2304
        %v2482 = vpack.c.bf16 %v2307, %v2306
        %v2483 = vpack.c.bf16 %v2309, %v2308
        %v2484 = vpack.c.bf16 %v2311, %v2310
        %v2485 = vpack.c.bf16 %v2313, %v2312
        %v2486 = vpack.c.bf16 %v2315, %v2314
        %v2487 = vpack.c.bf16 %v2317, %v2316
        %v2488 = vpack.c.bf16 %v2319, %v2318
        %v2489 = vpack.c.bf16 %v2321, %v2320
        %v2490 = vpack.c.bf16 %v2323, %v2322
        %v2491 = vpack.c.bf16 %v2325, %v2324
        %v2492 = vpack.c.bf16 %v2327, %v2326
        %v2493 = vpack.c.bf16 %v2329, %v2328
        %v2494 = vpack.c.bf16 %v2331, %v2330
        %v2495 = vpack.c.bf16 %v2333, %v2332
        %v2496 = vpack.c.bf16 %v2335, %v2334
        %v2497 = vpack.c.bf16 %v2337, %v2336
        %2498 = vset.pattern.permute.xlu0 1
        %2499 = vperm.xlu0 %2498, %v221
        %v2500 = vpop.permute.xlu0 %2499
        %2502 = vset.pattern.permute.xlu0 1
        %2503 = vperm.xlu0 %2502, %v222
        %v2504 = vpop.permute.xlu0 %2503
        %2506 = vset.pattern.permute.xlu0 1
        %2507 = vperm.xlu0 %2506, %v223
        %v2508 = vpop.permute.xlu0 %2507
        %2510 = vset.pattern.permute.xlu0 1
        %2511 = vperm.xlu0 %2510, %v224
        %v2512 = vpop.permute.xlu0 %2511
        %2514 = vset.pattern.permute.xlu0 1
        %2515 = vperm.xlu0 %2514, %v225
        %v2516 = vpop.permute.xlu0 %2515
        %2518 = vset.pattern.permute.xlu0 1
        %2519 = vperm.xlu0 %2518, %v226
        %v2520 = vpop.permute.xlu0 %2519
        %2522 = vset.pattern.permute.xlu0 1
        %2523 = vperm.xlu0 %2522, %v227
        %v2524 = vpop.permute.xlu0 %2523
        %2526 = vset.pattern.permute.xlu0 1
        %2527 = vperm.xlu0 %2526, %v228
        %v2528 = vpop.permute.xlu0 %2527
        %2530 = vset.pattern.permute.xlu0 1
        %2531 = vperm.xlu0 %2530, %v229
        %v2532 = vpop.permute.xlu0 %2531
        %2534 = vset.pattern.permute.xlu0 1
        %2535 = vperm.xlu0 %2534, %v230
        %v2536 = vpop.permute.xlu0 %2535
        %2538 = vset.pattern.permute.xlu0 1
        %2539 = vperm.xlu0 %2538, %v231
        %v2540 = vpop.permute.xlu0 %2539
        %2542 = vset.pattern.permute.xlu0 1
        %2543 = vperm.xlu0 %2542, %v232
        %v2544 = vpop.permute.xlu0 %2543
        %2546 = vset.pattern.permute.xlu0 1
        %2547 = vperm.xlu0 %2546, %v233
        %v2548 = vpop.permute.xlu0 %2547
        %2550 = vset.pattern.permute.xlu0 1
        %2551 = vperm.xlu0 %2550, %v234
        %v2552 = vpop.permute.xlu0 %2551
        %2554 = vset.pattern.permute.xlu0 1
        %2555 = vperm.xlu0 %2554, %v235
        %v2556 = vpop.permute.xlu0 %2555
        %2558 = vset.pattern.permute.xlu0 1
        %2559 = vperm.xlu0 %2558, %v236
        %v2560 = vpop.permute.xlu0 %2559
        %2562 = vset.pattern.permute.xlu0 1
        %2563 = vperm.xlu0 %2562, %v237
        %v2564 = vpop.permute.xlu0 %2563
        %2566 = vset.pattern.permute.xlu0 1
        %2567 = vperm.xlu0 %2566, %v238
        %v2568 = vpop.permute.xlu0 %2567
        %2570 = vset.pattern.permute.xlu0 1
        %2571 = vperm.xlu0 %2570, %v239
        %v2572 = vpop.permute.xlu0 %2571
        %2574 = vset.pattern.permute.xlu0 1
        %2575 = vperm.xlu0 %2574, %v240
        %v2576 = vpop.permute.xlu0 %2575
        %2578 = vset.pattern.permute.xlu0 1
        %2579 = vperm.xlu0 %2578, %v241
        %v2580 = vpop.permute.xlu0 %2579
        %2582 = vset.pattern.permute.xlu0 1
        %2583 = vperm.xlu0 %2582, %v242
        %v2584 = vpop.permute.xlu0 %2583
        %2586 = vset.pattern.permute.xlu0 1
        %2587 = vperm.xlu0 %2586, %v243
        %v2588 = vpop.permute.xlu0 %2587
        %2590 = vset.pattern.permute.xlu0 1
        %2591 = vperm.xlu0 %2590, %v244
        %v2592 = vpop.permute.xlu0 %2591
        %2594 = vset.pattern.permute.xlu0 1
        %2595 = vperm.xlu0 %2594, %v245
        %v2596 = vpop.permute.xlu0 %2595
        %2598 = vset.pattern.permute.xlu0 1
        %2599 = vperm.xlu0 %2598, %v246
        %v2600 = vpop.permute.xlu0 %2599
        %2602 = vset.pattern.permute.xlu0 1
        %2603 = vperm.xlu0 %2602, %v247
        %v2604 = vpop.permute.xlu0 %2603
        %2606 = vset.pattern.permute.xlu0 1
        %2607 = vperm.xlu0 %2606, %v248
        %v2608 = vpop.permute.xlu0 %2607
        %2610 = vset.pattern.permute.xlu0 1
        %2611 = vperm.xlu0 %2610, %v249
        %v2612 = vpop.permute.xlu0 %2611
        %2614 = vset.pattern.permute.xlu0 1
        %2615 = vperm.xlu0 %2614, %v250
        %v2616 = vpop.permute.xlu0 %2615
        %2618 = vset.pattern.permute.xlu0 1
        %2619 = vperm.xlu0 %2618, %v251
        %v2620 = vpop.permute.xlu0 %2619
        %2622 = vset.pattern.permute.xlu0 1
        %2623 = vperm.xlu0 %2622, %v252
        %v2624 = vpop.permute.xlu0 %2623
        %2626 = vset.pattern.permute.xlu0 1
        %2627 = vperm.xlu0 %2626, %v253
        %v2628 = vpop.permute.xlu0 %2627
        %2630 = vset.pattern.permute.xlu0 1
        %2631 = vperm.xlu0 %2630, %v254
        %v2632 = vpop.permute.xlu0 %2631
        %2634 = vset.pattern.permute.xlu0 1
        %2635 = vperm.xlu0 %2634, %v255
        %v2636 = vpop.permute.xlu0 %2635
        %2638 = vset.pattern.permute.xlu0 1
        %2639 = vperm.xlu0 %2638, %v256
        %v2640 = vpop.permute.xlu0 %2639
        %2642 = vset.pattern.permute.xlu0 1
        %2643 = vperm.xlu0 %2642, %v257
        %v2644 = vpop.permute.xlu0 %2643
        %2646 = vset.pattern.permute.xlu0 1
        %2647 = vperm.xlu0 %2646, %v258
        %v2648 = vpop.permute.xlu0 %2647
        %2650 = vset.pattern.permute.xlu0 1
        %2651 = vperm.xlu0 %2650, %v259
        %v2652 = vpop.permute.xlu0 %2651
        %2654 = vset.pattern.permute.xlu0 1
        %2655 = vperm.xlu0 %2654, %v260
        %v2656 = vpop.permute.xlu0 %2655
        %2658 = vset.pattern.permute.xlu0 1
        %2659 = vperm.xlu0 %2658, %v261
        %v2660 = vpop.permute.xlu0 %2659
        %2662 = vset.pattern.permute.xlu0 1
        %2663 = vperm.xlu0 %2662, %v262
        %v2664 = vpop.permute.xlu0 %2663
        %2666 = vset.pattern.permute.xlu0 1
        %2667 = vperm.xlu0 %2666, %v263
        %v2668 = vpop.permute.xlu0 %2667
        %2670 = vset.pattern.permute.xlu0 1
        %2671 = vperm.xlu0 %2670, %v264
        %v2672 = vpop.permute.xlu0 %2671
        %2674 = vset.pattern.permute.xlu0 1
        %2675 = vperm.xlu0 %2674, %v265
        %v2676 = vpop.permute.xlu0 %2675
        %2678 = vset.pattern.permute.xlu0 1
        %2679 = vperm.xlu0 %2678, %v266
        %v2680 = vpop.permute.xlu0 %2679
        %2682 = vset.pattern.permute.xlu0 1
        %2683 = vperm.xlu0 %2682, %v267
        %v2684 = vpop.permute.xlu0 %2683
        %2686 = vset.pattern.permute.xlu0 1
        %2687 = vperm.xlu0 %2686, %v268
        %v2688 = vpop.permute.xlu0 %2687
        %2690 = vset.pattern.permute.xlu0 1
        %2691 = vperm.xlu0 %2690, %v269
        %v2692 = vpop.permute.xlu0 %2691
        %2694 = vset.pattern.permute.xlu0 1
        %2695 = vperm.xlu0 %2694, %v270
        %v2696 = vpop.permute.xlu0 %2695
        %2698 = vset.pattern.permute.xlu0 1
        %2699 = vperm.xlu0 %2698, %v271
        %v2700 = vpop.permute.xlu0 %2699
        %2702 = vset.pattern.permute.xlu0 1
        %2703 = vperm.xlu0 %2702, %v272
        %v2704 = vpop.permute.xlu0 %2703
        %2706 = vset.pattern.permute.xlu0 1
        %2707 = vperm.xlu0 %2706, %v273
        %v2708 = vpop.permute.xlu0 %2707
        %2710 = vset.pattern.permute.xlu0 1
        %2711 = vperm.xlu0 %2710, %v274
        %v2712 = vpop.permute.xlu0 %2711
        %2714 = vset.pattern.permute.xlu0 1
        %2715 = vperm.xlu0 %2714, %v275
        %v2716 = vpop.permute.xlu0 %2715
        %2718 = vset.pattern.permute.xlu0 1
        %2719 = vperm.xlu0 %2718, %v276
        %v2720 = vpop.permute.xlu0 %2719
        %2722 = vset.pattern.permute.xlu0 1
        %2723 = vperm.xlu0 %2722, %v277
        %v2724 = vpop.permute.xlu0 %2723
        %2726 = vset.pattern.permute.xlu0 1
        %2727 = vperm.xlu0 %2726, %v278
        %v2728 = vpop.permute.xlu0 %2727
        %2730 = vset.pattern.permute.xlu0 1
        %2731 = vperm.xlu0 %2730, %v279
        %v2732 = vpop.permute.xlu0 %2731
        %2734 = vset.pattern.permute.xlu0 1
        %2735 = vperm.xlu0 %2734, %v280
        %v2736 = vpop.permute.xlu0 %2735
        %2738 = vset.pattern.permute.xlu0 1
        %2739 = vperm.xlu0 %2738, %v281
        %v2740 = vpop.permute.xlu0 %2739
        %2742 = vset.pattern.permute.xlu0 1
        %2743 = vperm.xlu0 %2742, %v282
        %v2744 = vpop.permute.xlu0 %2743
        %2746 = vset.pattern.permute.xlu0 1
        %2747 = vperm.xlu0 %2746, %v283
        %v2748 = vpop.permute.xlu0 %2747
        %2750 = vset.pattern.permute.xlu0 1
        %2751 = vperm.xlu0 %2750, %v284
        %v2752 = vpop.permute.xlu0 %2751
        %v2882 = vunpack.c.l.b16 %v2338
        %v2883 = vunpack.c.h.b16 %v2338
        %v2884 = vunpack.c.l.b16 %v2339
        %v2885 = vunpack.c.h.b16 %v2339
        %v2886 = vunpack.c.l.b16 %v2340
        %v2887 = vunpack.c.h.b16 %v2340
        %v2888 = vunpack.c.l.b16 %v2341
        %v2889 = vunpack.c.h.b16 %v2341
        %v2890 = vunpack.c.l.b16 %v2342
        %v2891 = vunpack.c.h.b16 %v2342
        %v2892 = vunpack.c.l.b16 %v2343
        %v2893 = vunpack.c.h.b16 %v2343
        %v2894 = vunpack.c.l.b16 %v2344
        %v2895 = vunpack.c.h.b16 %v2344
        %v2896 = vunpack.c.l.b16 %v2345
        %v2897 = vunpack.c.h.b16 %v2345
        %v2898 = vunpack.c.l.b16 %v2346
        %v2899 = vunpack.c.h.b16 %v2346
        %v2900 = vunpack.c.l.b16 %v2347
        %v2901 = vunpack.c.h.b16 %v2347
        %v2902 = vunpack.c.l.b16 %v2348
        %v2903 = vunpack.c.h.b16 %v2348
        %v2904 = vunpack.c.l.b16 %v2349
        %v2905 = vunpack.c.h.b16 %v2349
        %v2906 = vunpack.c.l.b16 %v2350
        %v2907 = vunpack.c.h.b16 %v2350
        %v2908 = vunpack.c.l.b16 %v2351
        %v2909 = vunpack.c.h.b16 %v2351
        %v2910 = vunpack.c.l.b16 %v2352
        %v2911 = vunpack.c.h.b16 %v2352
        %v2912 = vunpack.c.l.b16 %v2353
        %v2913 = vunpack.c.h.b16 %v2353
        %v2914 = vunpack.c.l.b16 %v2354
        %v2915 = vunpack.c.h.b16 %v2354
        %v2916 = vunpack.c.l.b16 %v2355
        %v2917 = vunpack.c.h.b16 %v2355
        %v2918 = vunpack.c.l.b16 %v2356
        %v2919 = vunpack.c.h.b16 %v2356
        %v2920 = vunpack.c.l.b16 %v2357
        %v2921 = vunpack.c.h.b16 %v2357
        %v2922 = vunpack.c.l.b16 %v2358
        %v2923 = vunpack.c.h.b16 %v2358
        %v2924 = vunpack.c.l.b16 %v2359
        %v2925 = vunpack.c.h.b16 %v2359
        %v2926 = vunpack.c.l.b16 %v2360
        %v2927 = vunpack.c.h.b16 %v2360
        %v2928 = vunpack.c.l.b16 %v2361
        %v2929 = vunpack.c.h.b16 %v2361
        %v2930 = vunpack.c.l.b16 %v2362
        %v2931 = vunpack.c.h.b16 %v2362
        %v2932 = vunpack.c.l.b16 %v2363
        %v2933 = vunpack.c.h.b16 %v2363
        %v2934 = vunpack.c.l.b16 %v2364
        %v2935 = vunpack.c.h.b16 %v2364
        %v2936 = vunpack.c.l.b16 %v2365
        %v2937 = vunpack.c.h.b16 %v2365
        %v2938 = vunpack.c.l.b16 %v2366
        %v2939 = vunpack.c.h.b16 %v2366
        %v2940 = vunpack.c.l.b16 %v2367
        %v2941 = vunpack.c.h.b16 %v2367
        %v2942 = vunpack.c.l.b16 %v2368
        %v2943 = vunpack.c.h.b16 %v2368
        %v2944 = vunpack.c.l.b16 %v2369
        %v2945 = vunpack.c.h.b16 %v2369
        %v2946 = vunpack.c.l.b16 %v2370
        %v2947 = vunpack.c.h.b16 %v2370
        %v2948 = vunpack.c.l.b16 %v2371
        %v2949 = vunpack.c.h.b16 %v2371
        %v2950 = vunpack.c.l.b16 %v2372
        %v2951 = vunpack.c.h.b16 %v2372
        %v2952 = vunpack.c.l.b16 %v2373
        %v2953 = vunpack.c.h.b16 %v2373
        %v2954 = vunpack.c.l.b16 %v2374
        %v2955 = vunpack.c.h.b16 %v2374
        %v2956 = vunpack.c.l.b16 %v2375
        %v2957 = vunpack.c.h.b16 %v2375
        %v2958 = vunpack.c.l.b16 %v2376
        %v2959 = vunpack.c.h.b16 %v2376
        %v2960 = vunpack.c.l.b16 %v2377
        %v2961 = vunpack.c.h.b16 %v2377
        %v2962 = vunpack.c.l.b16 %v2378
        %v2963 = vunpack.c.h.b16 %v2378
        %v2964 = vunpack.c.l.b16 %v2379
        %v2965 = vunpack.c.h.b16 %v2379
        %v2966 = vunpack.c.l.b16 %v2380
        %v2967 = vunpack.c.h.b16 %v2380
        %v2968 = vunpack.c.l.b16 %v2381
        %v2969 = vunpack.c.h.b16 %v2381
        %v2970 = vunpack.c.l.b16 %v2382
        %v2971 = vunpack.c.h.b16 %v2382
        %v2972 = vunpack.c.l.b16 %v2383
        %v2973 = vunpack.c.h.b16 %v2383
        %v2974 = vunpack.c.l.b16 %v2384
        %v2975 = vunpack.c.h.b16 %v2384
        %v2976 = vunpack.c.l.b16 %v2385
        %v2977 = vunpack.c.h.b16 %v2385
        %v2978 = vunpack.c.l.b16 %v2386
        %v2979 = vunpack.c.h.b16 %v2386
        %v2980 = vunpack.c.l.b16 %v2387
        %v2981 = vunpack.c.h.b16 %v2387
        %v2982 = vunpack.c.l.b16 %v2388
        %v2983 = vunpack.c.h.b16 %v2388
        %v2984 = vunpack.c.l.b16 %v2389
        %v2985 = vunpack.c.h.b16 %v2389
        %v2986 = vunpack.c.l.b16 %v2390
        %v2987 = vunpack.c.h.b16 %v2390
        %v2988 = vunpack.c.l.b16 %v2391
        %v2989 = vunpack.c.h.b16 %v2391
        %v2990 = vunpack.c.l.b16 %v2392
        %v2991 = vunpack.c.h.b16 %v2392
        %v2992 = vunpack.c.l.b16 %v2393
        %v2993 = vunpack.c.h.b16 %v2393
        %v2994 = vunpack.c.l.b16 %v2394
        %v2995 = vunpack.c.h.b16 %v2394
        %v2996 = vunpack.c.l.b16 %v2395
        %v2997 = vunpack.c.h.b16 %v2395
        %v2998 = vunpack.c.l.b16 %v2396
        %v2999 = vunpack.c.h.b16 %v2396
        %v3000 = vunpack.c.l.b16 %v2397
        %v3001 = vunpack.c.h.b16 %v2397
        %v3002 = vunpack.c.l.b16 %v2398
        %v3003 = vunpack.c.h.b16 %v2398
        %v3004 = vunpack.c.l.b16 %v2399
        %v3005 = vunpack.c.h.b16 %v2399
        %v3006 = vunpack.c.l.b16 %v2400
        %v3007 = vunpack.c.h.b16 %v2400
        %v3008 = vunpack.c.l.b16 %v2401
        %v3009 = vunpack.c.h.b16 %v2401
        %v3010 = vunpack.c.l.b16 %v2402
        %v3011 = vunpack.c.h.b16 %v2402
        %v3012 = vunpack.c.l.b16 %v2403
        %v3013 = vunpack.c.h.b16 %v2403
        %v3014 = vunpack.c.l.b16 %v2404
        %v3015 = vunpack.c.h.b16 %v2404
        %v3016 = vunpack.c.l.b16 %v2405
        %v3017 = vunpack.c.h.b16 %v2405
        %v3018 = vunpack.c.l.b16 %v2406
        %v3019 = vunpack.c.h.b16 %v2406
        %v3020 = vunpack.c.l.b16 %v2407
        %v3021 = vunpack.c.h.b16 %v2407
        %v3022 = vunpack.c.l.b16 %v2408
        %v3023 = vunpack.c.h.b16 %v2408
        %v3024 = vunpack.c.l.b16 %v2409
        %v3025 = vunpack.c.h.b16 %v2409
        %v3026 = vunpack.c.l.b16 %v2410
        %v3027 = vunpack.c.h.b16 %v2410
        %v3028 = vunpack.c.l.b16 %v2411
        %v3029 = vunpack.c.h.b16 %v2411
        %v3030 = vunpack.c.l.b16 %v2412
        %v3031 = vunpack.c.h.b16 %v2412
        %v3032 = vunpack.c.l.b16 %v2413
        %v3033 = vunpack.c.h.b16 %v2413
        %v3034 = vunpack.c.l.b16 %v2414
        %v3035 = vunpack.c.h.b16 %v2414
        %v3036 = vunpack.c.l.b16 %v2415
        %v3037 = vunpack.c.h.b16 %v2415
        %v3038 = vunpack.c.l.b16 %v2416
        %v3039 = vunpack.c.h.b16 %v2416
        %v3040 = vunpack.c.l.b16 %v2417
        %v3041 = vunpack.c.h.b16 %v2417
        %v3042 = vunpack.c.l.b16 %v2418
        %v3043 = vunpack.c.h.b16 %v2418
        %v3044 = vunpack.c.l.b16 %v2419
        %v3045 = vunpack.c.h.b16 %v2419
        %v3046 = vunpack.c.l.b16 %v2420
        %v3047 = vunpack.c.h.b16 %v2420
        %v3048 = vunpack.c.l.b16 %v2421
        %v3049 = vunpack.c.h.b16 %v2421
        %v3050 = vunpack.c.l.b16 %v2422
        %v3051 = vunpack.c.h.b16 %v2422
        %v3052 = vunpack.c.l.b16 %v2423
        %v3053 = vunpack.c.h.b16 %v2423
        %v3054 = vunpack.c.l.b16 %v2424
        %v3055 = vunpack.c.h.b16 %v2424
        %v3056 = vunpack.c.l.b16 %v2425
        %v3057 = vunpack.c.h.b16 %v2425
        %v3058 = vunpack.c.l.b16 %v2426
        %v3059 = vunpack.c.h.b16 %v2426
        %v3060 = vunpack.c.l.b16 %v2427
        %v3061 = vunpack.c.h.b16 %v2427
        %v3062 = vunpack.c.l.b16 %v2428
        %v3063 = vunpack.c.h.b16 %v2428
        %v3064 = vunpack.c.l.b16 %v2429
        %v3065 = vunpack.c.h.b16 %v2429
        %v3066 = vunpack.c.l.b16 %v2430
        %v3067 = vunpack.c.h.b16 %v2430
        %v3068 = vunpack.c.l.b16 %v2431
        %v3069 = vunpack.c.h.b16 %v2431
        %v3070 = vunpack.c.l.b16 %v2432
        %v3071 = vunpack.c.h.b16 %v2432
        %v3072 = vunpack.c.l.b16 %v2433
        %v3073 = vunpack.c.h.b16 %v2433
        %v3074 = vunpack.c.l.b16 %v2434
        %v3075 = vunpack.c.h.b16 %v2434
        %v3076 = vunpack.c.l.b16 %v2435
        %v3077 = vunpack.c.h.b16 %v2435
        %v3078 = vunpack.c.l.b16 %v2436
        %v3079 = vunpack.c.h.b16 %v2436
        %v3080 = vunpack.c.l.b16 %v2437
        %v3081 = vunpack.c.h.b16 %v2437
        %v3082 = vunpack.c.l.b16 %v2438
        %v3083 = vunpack.c.h.b16 %v2438
        %v3084 = vunpack.c.l.b16 %v2439
        %v3085 = vunpack.c.h.b16 %v2439
        %v3086 = vunpack.c.l.b16 %v2440
        %v3087 = vunpack.c.h.b16 %v2440
        %v3088 = vunpack.c.l.b16 %v2441
        %v3089 = vunpack.c.h.b16 %v2441
        %v3090 = vunpack.c.l.b16 %v2442
        %v3091 = vunpack.c.h.b16 %v2442
        %v3092 = vunpack.c.l.b16 %v2443
        %v3093 = vunpack.c.h.b16 %v2443
        %v3094 = vunpack.c.l.b16 %v2444
        %v3095 = vunpack.c.h.b16 %v2444
        %v3096 = vunpack.c.l.b16 %v2445
        %v3097 = vunpack.c.h.b16 %v2445
        %v3098 = vunpack.c.l.b16 %v2446
        %v3099 = vunpack.c.h.b16 %v2446
        %v3100 = vunpack.c.l.b16 %v2447
        %v3101 = vunpack.c.h.b16 %v2447
        %v3102 = vunpack.c.l.b16 %v2448
        %v3103 = vunpack.c.h.b16 %v2448
        %v3104 = vunpack.c.l.b16 %v2449
        %v3105 = vunpack.c.h.b16 %v2449
        %v3106 = vunpack.c.l.b16 %v2450
        %v3107 = vunpack.c.h.b16 %v2450
        %v3108 = vunpack.c.l.b16 %v2451
        %v3109 = vunpack.c.h.b16 %v2451
        %v3110 = vunpack.c.l.b16 %v2452
        %v3111 = vunpack.c.h.b16 %v2452
        %v3112 = vunpack.c.l.b16 %v2453
        %v3113 = vunpack.c.h.b16 %v2453
        %v3114 = vunpack.c.l.b16 %v2454
        %v3115 = vunpack.c.h.b16 %v2454
        %v3116 = vunpack.c.l.b16 %v2455
        %v3117 = vunpack.c.h.b16 %v2455
        %v3118 = vunpack.c.l.b16 %v2456
        %v3119 = vunpack.c.h.b16 %v2456
        %v3120 = vunpack.c.l.b16 %v2457
        %v3121 = vunpack.c.h.b16 %v2457
        %v3122 = vunpack.c.l.b16 %v2458
        %v3123 = vunpack.c.h.b16 %v2458
        %v3124 = vunpack.c.l.b16 %v2459
        %v3125 = vunpack.c.h.b16 %v2459
        %v3126 = vunpack.c.l.b16 %v2460
        %v3127 = vunpack.c.h.b16 %v2460
        %v3128 = vunpack.c.l.b16 %v2461
        %v3129 = vunpack.c.h.b16 %v2461
        %v3130 = vunpack.c.l.b16 %v2462
        %v3131 = vunpack.c.h.b16 %v2462
        %v3132 = vunpack.c.l.b16 %v2463
        %v3133 = vunpack.c.h.b16 %v2463
        %v3134 = vunpack.c.l.b16 %v2464
        %v3135 = vunpack.c.h.b16 %v2464
        %v3136 = vunpack.c.l.b16 %v2465
        %v3137 = vunpack.c.h.b16 %v2465
        %v3138 = vpack.c.b16 %v2886, %v2882
        %v3139 = vpack.c.b16 %v2887, %v2883
        %v3140 = vpack.c.b16 %v2888, %v2884
        %v3141 = vpack.c.b16 %v2889, %v2885
        %v3142 = vpack.c.b16 %v2894, %v2890
        %v3143 = vpack.c.b16 %v2895, %v2891
        %v3144 = vpack.c.b16 %v2896, %v2892
        %v3145 = vpack.c.b16 %v2897, %v2893
        %v3146 = vpack.c.b16 %v2902, %v2898
        %v3147 = vpack.c.b16 %v2903, %v2899
        %v3148 = vpack.c.b16 %v2904, %v2900
        %v3149 = vpack.c.b16 %v2905, %v2901
        %v3150 = vpack.c.b16 %v2910, %v2906
        %v3151 = vpack.c.b16 %v2911, %v2907
        %v3152 = vpack.c.b16 %v2912, %v2908
        %v3153 = vpack.c.b16 %v2913, %v2909
        %v3154 = vpack.c.b16 %v2918, %v2914
        %v3155 = vpack.c.b16 %v2919, %v2915
        %v3156 = vpack.c.b16 %v2920, %v2916
        %v3157 = vpack.c.b16 %v2921, %v2917
        %v3158 = vpack.c.b16 %v2926, %v2922
        %v3159 = vpack.c.b16 %v2927, %v2923
        %v3160 = vpack.c.b16 %v2928, %v2924
        %v3161 = vpack.c.b16 %v2929, %v2925
        %v3162 = vpack.c.b16 %v2934, %v2930
        %v3163 = vpack.c.b16 %v2935, %v2931
        %v3164 = vpack.c.b16 %v2936, %v2932
        %v3165 = vpack.c.b16 %v2937, %v2933
        %v3166 = vpack.c.b16 %v2942, %v2938
        %v3167 = vpack.c.b16 %v2943, %v2939
        %v3168 = vpack.c.b16 %v2944, %v2940
        %v3169 = vpack.c.b16 %v2945, %v2941
        %v3170 = vpack.c.b16 %v2950, %v2946
        %v3171 = vpack.c.b16 %v2951, %v2947
        %v3172 = vpack.c.b16 %v2952, %v2948
        %v3173 = vpack.c.b16 %v2953, %v2949
        %v3174 = vpack.c.b16 %v2958, %v2954
        %v3175 = vpack.c.b16 %v2959, %v2955
        %v3176 = vpack.c.b16 %v2960, %v2956
        %v3177 = vpack.c.b16 %v2961, %v2957
        %v3178 = vpack.c.b16 %v2966, %v2962
        %v3179 = vpack.c.b16 %v2967, %v2963
        %v3180 = vpack.c.b16 %v2968, %v2964
        %v3181 = vpack.c.b16 %v2969, %v2965
        %v3182 = vpack.c.b16 %v2974, %v2970
        %v3183 = vpack.c.b16 %v2975, %v2971
        %v3184 = vpack.c.b16 %v2976, %v2972
        %v3185 = vpack.c.b16 %v2977, %v2973
        %v3186 = vpack.c.b16 %v2982, %v2978
        %v3187 = vpack.c.b16 %v2983, %v2979
        %v3188 = vpack.c.b16 %v2984, %v2980
        %v3189 = vpack.c.b16 %v2985, %v2981
        %v3190 = vpack.c.b16 %v2990, %v2986
        %v3191 = vpack.c.b16 %v2991, %v2987
        %v3192 = vpack.c.b16 %v2992, %v2988
        %v3193 = vpack.c.b16 %v2993, %v2989
        %v3194 = vpack.c.b16 %v2998, %v2994
        %v3195 = vpack.c.b16 %v2999, %v2995
        %v3196 = vpack.c.b16 %v3000, %v2996
        %v3197 = vpack.c.b16 %v3001, %v2997
        %v3198 = vpack.c.b16 %v3006, %v3002
        %v3199 = vpack.c.b16 %v3007, %v3003
        %v3200 = vpack.c.b16 %v3008, %v3004
        %v3201 = vpack.c.b16 %v3009, %v3005
        %v3202 = vpack.c.b16 %v3014, %v3010
        %v3203 = vpack.c.b16 %v3015, %v3011
        %v3204 = vpack.c.b16 %v3016, %v3012
        %v3205 = vpack.c.b16 %v3017, %v3013
        %v3206 = vpack.c.b16 %v3022, %v3018
        %v3207 = vpack.c.b16 %v3023, %v3019
        %v3208 = vpack.c.b16 %v3024, %v3020
        %v3209 = vpack.c.b16 %v3025, %v3021
        %v3210 = vpack.c.b16 %v3030, %v3026
        %v3211 = vpack.c.b16 %v3031, %v3027
        %v3212 = vpack.c.b16 %v3032, %v3028
        %v3213 = vpack.c.b16 %v3033, %v3029
        %v3214 = vpack.c.b16 %v3038, %v3034
        %v3215 = vpack.c.b16 %v3039, %v3035
        %v3216 = vpack.c.b16 %v3040, %v3036
        %v3217 = vpack.c.b16 %v3041, %v3037
        %v3218 = vpack.c.b16 %v3046, %v3042
        %v3219 = vpack.c.b16 %v3047, %v3043
        %v3220 = vpack.c.b16 %v3048, %v3044
        %v3221 = vpack.c.b16 %v3049, %v3045
        %v3222 = vpack.c.b16 %v3054, %v3050
        %v3223 = vpack.c.b16 %v3055, %v3051
        %v3224 = vpack.c.b16 %v3056, %v3052
        %v3225 = vpack.c.b16 %v3057, %v3053
        %v3226 = vpack.c.b16 %v3062, %v3058
        %v3227 = vpack.c.b16 %v3063, %v3059
        %v3228 = vpack.c.b16 %v3064, %v3060
        %v3229 = vpack.c.b16 %v3065, %v3061
        %v3230 = vpack.c.b16 %v3070, %v3066
        %v3231 = vpack.c.b16 %v3071, %v3067
        %v3232 = vpack.c.b16 %v3072, %v3068
        %v3233 = vpack.c.b16 %v3073, %v3069
        %v3234 = vpack.c.b16 %v3078, %v3074
        %v3235 = vpack.c.b16 %v3079, %v3075
        %v3236 = vpack.c.b16 %v3080, %v3076
        %v3237 = vpack.c.b16 %v3081, %v3077
        %v3238 = vpack.c.b16 %v3086, %v3082
        %v3239 = vpack.c.b16 %v3087, %v3083
        %v3240 = vpack.c.b16 %v3088, %v3084
        %v3241 = vpack.c.b16 %v3089, %v3085
        %v3242 = vpack.c.b16 %v3094, %v3090
        %v3243 = vpack.c.b16 %v3095, %v3091
        %v3244 = vpack.c.b16 %v3096, %v3092
        %v3245 = vpack.c.b16 %v3097, %v3093
        %v3246 = vpack.c.b16 %v3102, %v3098
        %v3247 = vpack.c.b16 %v3103, %v3099
        %v3248 = vpack.c.b16 %v3104, %v3100
        %v3249 = vpack.c.b16 %v3105, %v3101
        %v3250 = vpack.c.b16 %v3110, %v3106
        %v3251 = vpack.c.b16 %v3111, %v3107
        %v3252 = vpack.c.b16 %v3112, %v3108
        %v3253 = vpack.c.b16 %v3113, %v3109
        %v3254 = vpack.c.b16 %v3118, %v3114
        %v3255 = vpack.c.b16 %v3119, %v3115
        %v3256 = vpack.c.b16 %v3120, %v3116
        %v3257 = vpack.c.b16 %v3121, %v3117
        %v3258 = vpack.c.b16 %v3126, %v3122
        %v3259 = vpack.c.b16 %v3127, %v3123
        %v3260 = vpack.c.b16 %v3128, %v3124
        %v3261 = vpack.c.b16 %v3129, %v3125
        %v3262 = vpack.c.b16 %v3134, %v3130
        %v3263 = vpack.c.b16 %v3135, %v3131
        %v3264 = vpack.c.b16 %v3136, %v3132
        %v3265 = vpack.c.b16 %v3137, %v3133
        %3394 = vmatpush.bf16.msra.mxu0 %v2473
        %3395 = vmatpush.bf16.msra.mxu0 %v2472
        %3396 = vmatpush.bf16.msra.mxu0 %v2471
        %3397 = vmatpush.bf16.msra.mxu0 %v2470
        %3398 = vmatpush.bf16.msra.mxu0 %v2469
        %3399 = vmatpush.bf16.msra.mxu0 %v2468
        %3400 = vmatpush.bf16.msra.mxu0 %v2467
        %3401 = vmatpush.bf16.msra.mxu0 %v2466
        %3402 = vmatmul.bf16.gmra.mxu0 %v3138
        %v3403 = vpop.f32.mrf.mxu0
        %v3404 = vadd.f32 %v2500, %v3403
        %v3405 = vpop.f32.mrf.mxu0
        %v3406 = vadd.f32 %v2504, %v3405
        %3407 = vmatmul.bf16.gmra.mxu0 %v3142
        %v3408 = vpop.f32.mrf.mxu0
        %v3409 = vadd.f32 %v2508, %v3408
        %v3410 = vpop.f32.mrf.mxu0
        %v3411 = vadd.f32 %v2512, %v3410
        %3412 = vmatmul.bf16.gmra.mxu0 %v3146
        %v3413 = vpop.f32.mrf.mxu0
        %v3414 = vadd.f32 %v2516, %v3413
        %v3415 = vpop.f32.mrf.mxu0
        %v3416 = vadd.f32 %v2520, %v3415
        %3417 = vmatmul.bf16.gmra.mxu0 %v3150
        %v3418 = vpop.f32.mrf.mxu0
        %v3419 = vadd.f32 %v2524, %v3418
        %v3420 = vpop.f32.mrf.mxu0
        %v3421 = vadd.f32 %v2528, %v3420
        %3422 = vmatmul.bf16.gmra.mxu0 %v3154
        %v3423 = vpop.f32.mrf.mxu0
        %v3424 = vadd.f32 %v2532, %v3423
        %v3425 = vpop.f32.mrf.mxu0
        %v3426 = vadd.f32 %v2536, %v3425
        %3427 = vmatmul.bf16.gmra.mxu0 %v3158
        %v3428 = vpop.f32.mrf.mxu0
        %v3429 = vadd.f32 %v2540, %v3428
        %v3430 = vpop.f32.mrf.mxu0
        %v3431 = vadd.f32 %v2544, %v3430
        %3432 = vmatmul.bf16.gmra.mxu0 %v3162
        %v3433 = vpop.f32.mrf.mxu0
        %v3434 = vadd.f32 %v2548, %v3433
        %v3435 = vpop.f32.mrf.mxu0
        %v3436 = vadd.f32 %v2552, %v3435
        %3437 = vmatmul.bf16.gmra.mxu0 %v3166
        %v3438 = vpop.f32.mrf.mxu0
        %v3439 = vadd.f32 %v2556, %v3438
        %v3440 = vpop.f32.mrf.mxu0
        %v3441 = vadd.f32 %v2560, %v3440
        %3442 = vmatmul.bf16.gmra.mxu0 %v3170
        %v3443 = vpop.f32.mrf.mxu0
        %v3444 = vadd.f32 %v2564, %v3443
        %v3445 = vpop.f32.mrf.mxu0
        %v3446 = vadd.f32 %v2568, %v3445
        %3447 = vmatmul.bf16.gmra.mxu0 %v3174
        %v3448 = vpop.f32.mrf.mxu0
        %v3449 = vadd.f32 %v2572, %v3448
        %v3450 = vpop.f32.mrf.mxu0
        %v3451 = vadd.f32 %v2576, %v3450
        %3452 = vmatmul.bf16.gmra.mxu0 %v3178
        %v3453 = vpop.f32.mrf.mxu0
        %v3454 = vadd.f32 %v2580, %v3453
        %v3455 = vpop.f32.mrf.mxu0
        %v3456 = vadd.f32 %v2584, %v3455
        %3457 = vmatmul.bf16.gmra.mxu0 %v3182
        %v3458 = vpop.f32.mrf.mxu0
        %v3459 = vadd.f32 %v2588, %v3458
        %v3460 = vpop.f32.mrf.mxu0
        %v3461 = vadd.f32 %v2592, %v3460
        %3462 = vmatmul.bf16.gmra.mxu0 %v3186
        %v3463 = vpop.f32.mrf.mxu0
        %v3464 = vadd.f32 %v2596, %v3463
        %v3465 = vpop.f32.mrf.mxu0
        %v3466 = vadd.f32 %v2600, %v3465
        %3467 = vmatmul.bf16.gmra.mxu0 %v3190
        %v3468 = vpop.f32.mrf.mxu0
        %v3469 = vadd.f32 %v2604, %v3468
        %v3470 = vpop.f32.mrf.mxu0
        %v3471 = vadd.f32 %v2608, %v3470
        %3472 = vmatmul.bf16.gmra.mxu0 %v3194
        %v3473 = vpop.f32.mrf.mxu0
        %v3474 = vadd.f32 %v2612, %v3473
        %v3475 = vpop.f32.mrf.mxu0
        %v3476 = vadd.f32 %v2616, %v3475
        %3477 = vmatmul.bf16.gmra.mxu0 %v3198
        %v3478 = vpop.f32.mrf.mxu0
        %v3479 = vadd.f32 %v2620, %v3478
        %v3480 = vpop.f32.mrf.mxu0
        %v3481 = vadd.f32 %v2624, %v3480
        %3482 = vmatmul.bf16.gmra.mxu0 %v3202
        %v3483 = vpop.f32.mrf.mxu0
        %v3484 = vadd.f32 %v2628, %v3483
        %v3485 = vpop.f32.mrf.mxu0
        %v3486 = vadd.f32 %v2632, %v3485
        %3487 = vmatmul.bf16.gmra.mxu0 %v3206
        %v3488 = vpop.f32.mrf.mxu0
        %v3489 = vadd.f32 %v2636, %v3488
        %v3490 = vpop.f32.mrf.mxu0
        %v3491 = vadd.f32 %v2640, %v3490
        %3492 = vmatmul.bf16.gmra.mxu0 %v3210
        %v3493 = vpop.f32.mrf.mxu0
        %v3494 = vadd.f32 %v2644, %v3493
        %v3495 = vpop.f32.mrf.mxu0
        %v3496 = vadd.f32 %v2648, %v3495
        %3497 = vmatmul.bf16.gmra.mxu0 %v3214
        %v3498 = vpop.f32.mrf.mxu0
        %v3499 = vadd.f32 %v2652, %v3498
        %v3500 = vpop.f32.mrf.mxu0
        %v3501 = vadd.f32 %v2656, %v3500
        %3502 = vmatmul.bf16.gmra.mxu0 %v3218
        %v3503 = vpop.f32.mrf.mxu0
        %v3504 = vadd.f32 %v2660, %v3503
        %v3505 = vpop.f32.mrf.mxu0
        %v3506 = vadd.f32 %v2664, %v3505
        %3507 = vmatmul.bf16.gmra.mxu0 %v3222
        %v3508 = vpop.f32.mrf.mxu0
        %v3509 = vadd.f32 %v2668, %v3508
        %v3510 = vpop.f32.mrf.mxu0
        %v3511 = vadd.f32 %v2672, %v3510
        %3512 = vmatmul.bf16.gmra.mxu0 %v3226
        %v3513 = vpop.f32.mrf.mxu0
        %v3514 = vadd.f32 %v2676, %v3513
        %v3515 = vpop.f32.mrf.mxu0
        %v3516 = vadd.f32 %v2680, %v3515
        %3517 = vmatmul.bf16.gmra.mxu0 %v3230
        %v3518 = vpop.f32.mrf.mxu0
        %v3519 = vadd.f32 %v2684, %v3518
        %v3520 = vpop.f32.mrf.mxu0
        %v3521 = vadd.f32 %v2688, %v3520
        %3522 = vmatmul.bf16.gmra.mxu0 %v3234
        %v3523 = vpop.f32.mrf.mxu0
        %v3524 = vadd.f32 %v2692, %v3523
        %v3525 = vpop.f32.mrf.mxu0
        %v3526 = vadd.f32 %v2696, %v3525
        %3527 = vmatmul.bf16.gmra.mxu0 %v3238
        %v3528 = vpop.f32.mrf.mxu0
        %v3529 = vadd.f32 %v2700, %v3528
        %v3530 = vpop.f32.mrf.mxu0
        %v3531 = vadd.f32 %v2704, %v3530
        %3532 = vmatmul.bf16.gmra.mxu0 %v3242
        %v3533 = vpop.f32.mrf.mxu0
        %v3534 = vadd.f32 %v2708, %v3533
        %v3535 = vpop.f32.mrf.mxu0
        %v3536 = vadd.f32 %v2712, %v3535
        %3537 = vmatmul.bf16.gmra.mxu0 %v3246
        %v3538 = vpop.f32.mrf.mxu0
        %v3539 = vadd.f32 %v2716, %v3538
        %v3540 = vpop.f32.mrf.mxu0
        %v3541 = vadd.f32 %v2720, %v3540
        %3542 = vmatmul.bf16.gmra.mxu0 %v3250
        %v3543 = vpop.f32.mrf.mxu0
        %v3544 = vadd.f32 %v2724, %v3543
        %v3545 = vpop.f32.mrf.mxu0
        %v3546 = vadd.f32 %v2728, %v3545
        %3547 = vmatmul.bf16.gmra.mxu0 %v3254
        %v3548 = vpop.f32.mrf.mxu0
        %v3549 = vadd.f32 %v2732, %v3548
        %v3550 = vpop.f32.mrf.mxu0
        %v3551 = vadd.f32 %v2736, %v3550
        %3552 = vmatmul.bf16.gmra.mxu0 %v3258
        %v3553 = vpop.f32.mrf.mxu0
        %v3554 = vadd.f32 %v2740, %v3553
        %v3555 = vpop.f32.mrf.mxu0
        %v3556 = vadd.f32 %v2744, %v3555
        %3557 = vmatmul.bf16.gmra.mxu0 %v3262
        %v3558 = vpop.f32.mrf.mxu0
        %v3559 = vadd.f32 %v2748, %v3558
        %v3560 = vpop.f32.mrf.mxu0
        %v3561 = vadd.f32 %v2752, %v3560
        %3562 = vdwg.mxu0
        %3563 = vmatpush.bf16.msra.mxu0 %v2481
        %3564 = vmatpush.bf16.msra.mxu0 %v2480
        %3565 = vmatpush.bf16.msra.mxu0 %v2479
        %3566 = vmatpush.bf16.msra.mxu0 %v2478
        %3567 = vmatpush.bf16.msra.mxu0 %v2477
        %3568 = vmatpush.bf16.msra.mxu0 %v2476
        %3569 = vmatpush.bf16.msra.mxu0 %v2475
        %3570 = vmatpush.bf16.msra.mxu0 %v2474
        %3571 = vmatmul.bf16.gmra.mxu0 %v3139
        %v3572 = vpop.f32.mrf.mxu0
        %v3573 = vadd.f32 %v3404, %v3572
        %v3574 = vpop.f32.mrf.mxu0
        %v3575 = vadd.f32 %v3406, %v3574
        %3576 = vmatmul.bf16.gmra.mxu0 %v3143
        %v3577 = vpop.f32.mrf.mxu0
        %v3578 = vadd.f32 %v3409, %v3577
        %v3579 = vpop.f32.mrf.mxu0
        %v3580 = vadd.f32 %v3411, %v3579
        %3581 = vmatmul.bf16.gmra.mxu0 %v3147
        %v3582 = vpop.f32.mrf.mxu0
        %v3583 = vadd.f32 %v3414, %v3582
        %v3584 = vpop.f32.mrf.mxu0
        %v3585 = vadd.f32 %v3416, %v3584
        %3586 = vmatmul.bf16.gmra.mxu0 %v3151
        %v3587 = vpop.f32.mrf.mxu0
        %v3588 = vadd.f32 %v3419, %v3587
        %v3589 = vpop.f32.mrf.mxu0
        %v3590 = vadd.f32 %v3421, %v3589
        %3591 = vmatmul.bf16.gmra.mxu0 %v3155
        %v3592 = vpop.f32.mrf.mxu0
        %v3593 = vadd.f32 %v3424, %v3592
        %v3594 = vpop.f32.mrf.mxu0
        %v3595 = vadd.f32 %v3426, %v3594
        %3596 = vmatmul.bf16.gmra.mxu0 %v3159
        %v3597 = vpop.f32.mrf.mxu0
        %v3598 = vadd.f32 %v3429, %v3597
        %v3599 = vpop.f32.mrf.mxu0
        %v3600 = vadd.f32 %v3431, %v3599
        %3601 = vmatmul.bf16.gmra.mxu0 %v3163
        %v3602 = vpop.f32.mrf.mxu0
        %v3603 = vadd.f32 %v3434, %v3602
        %v3604 = vpop.f32.mrf.mxu0
        %v3605 = vadd.f32 %v3436, %v3604
        %3606 = vmatmul.bf16.gmra.mxu0 %v3167
        %v3607 = vpop.f32.mrf.mxu0
        %v3608 = vadd.f32 %v3439, %v3607
        %v3609 = vpop.f32.mrf.mxu0
        %v3610 = vadd.f32 %v3441, %v3609
        %3611 = vmatmul.bf16.gmra.mxu0 %v3171
        %v3612 = vpop.f32.mrf.mxu0
        %v3613 = vadd.f32 %v3444, %v3612
        %v3614 = vpop.f32.mrf.mxu0
        %v3615 = vadd.f32 %v3446, %v3614
        %3616 = vmatmul.bf16.gmra.mxu0 %v3175
        %v3617 = vpop.f32.mrf.mxu0
        %v3618 = vadd.f32 %v3449, %v3617
        %v3619 = vpop.f32.mrf.mxu0
        %v3620 = vadd.f32 %v3451, %v3619
        %3621 = vmatmul.bf16.gmra.mxu0 %v3179
        %v3622 = vpop.f32.mrf.mxu0
        %v3623 = vadd.f32 %v3454, %v3622
        %v3624 = vpop.f32.mrf.mxu0
        %v3625 = vadd.f32 %v3456, %v3624
        %3626 = vmatmul.bf16.gmra.mxu0 %v3183
        %v3627 = vpop.f32.mrf.mxu0
        %v3628 = vadd.f32 %v3459, %v3627
        %v3629 = vpop.f32.mrf.mxu0
        %v3630 = vadd.f32 %v3461, %v3629
        %3631 = vmatmul.bf16.gmra.mxu0 %v3187
        %v3632 = vpop.f32.mrf.mxu0
        %v3633 = vadd.f32 %v3464, %v3632
        %v3634 = vpop.f32.mrf.mxu0
        %v3635 = vadd.f32 %v3466, %v3634
        %3636 = vmatmul.bf16.gmra.mxu0 %v3191
        %v3637 = vpop.f32.mrf.mxu0
        %v3638 = vadd.f32 %v3469, %v3637
        %v3639 = vpop.f32.mrf.mxu0
        %v3640 = vadd.f32 %v3471, %v3639
        %3641 = vmatmul.bf16.gmra.mxu0 %v3195
        %v3642 = vpop.f32.mrf.mxu0
        %v3643 = vadd.f32 %v3474, %v3642
        %v3644 = vpop.f32.mrf.mxu0
        %v3645 = vadd.f32 %v3476, %v3644
        %3646 = vmatmul.bf16.gmra.mxu0 %v3199
        %v3647 = vpop.f32.mrf.mxu0
        %v3648 = vadd.f32 %v3479, %v3647
        %v3649 = vpop.f32.mrf.mxu0
        %v3650 = vadd.f32 %v3481, %v3649
        %3651 = vmatmul.bf16.gmra.mxu0 %v3203
        %v3652 = vpop.f32.mrf.mxu0
        %v3653 = vadd.f32 %v3484, %v3652
        %v3654 = vpop.f32.mrf.mxu0
        %v3655 = vadd.f32 %v3486, %v3654
        %3656 = vmatmul.bf16.gmra.mxu0 %v3207
        %v3657 = vpop.f32.mrf.mxu0
        %v3658 = vadd.f32 %v3489, %v3657
        %v3659 = vpop.f32.mrf.mxu0
        %v3660 = vadd.f32 %v3491, %v3659
        %3661 = vmatmul.bf16.gmra.mxu0 %v3211
        %v3662 = vpop.f32.mrf.mxu0
        %v3663 = vadd.f32 %v3494, %v3662
        %v3664 = vpop.f32.mrf.mxu0
        %v3665 = vadd.f32 %v3496, %v3664
        %3666 = vmatmul.bf16.gmra.mxu0 %v3215
        %v3667 = vpop.f32.mrf.mxu0
        %v3668 = vadd.f32 %v3499, %v3667
        %v3669 = vpop.f32.mrf.mxu0
        %v3670 = vadd.f32 %v3501, %v3669
        %3671 = vmatmul.bf16.gmra.mxu0 %v3219
        %v3672 = vpop.f32.mrf.mxu0
        %v3673 = vadd.f32 %v3504, %v3672
        %v3674 = vpop.f32.mrf.mxu0
        %v3675 = vadd.f32 %v3506, %v3674
        %3676 = vmatmul.bf16.gmra.mxu0 %v3223
        %v3677 = vpop.f32.mrf.mxu0
        %v3678 = vadd.f32 %v3509, %v3677
        %v3679 = vpop.f32.mrf.mxu0
        %v3680 = vadd.f32 %v3511, %v3679
        %3681 = vmatmul.bf16.gmra.mxu0 %v3227
        %v3682 = vpop.f32.mrf.mxu0
        %v3683 = vadd.f32 %v3514, %v3682
        %v3684 = vpop.f32.mrf.mxu0
        %v3685 = vadd.f32 %v3516, %v3684
        %3686 = vmatmul.bf16.gmra.mxu0 %v3231
        %v3687 = vpop.f32.mrf.mxu0
        %v3688 = vadd.f32 %v3519, %v3687
        %v3689 = vpop.f32.mrf.mxu0
        %v3690 = vadd.f32 %v3521, %v3689
        %3691 = vmatmul.bf16.gmra.mxu0 %v3235
        %v3692 = vpop.f32.mrf.mxu0
        %v3693 = vadd.f32 %v3524, %v3692
        %v3694 = vpop.f32.mrf.mxu0
        %v3695 = vadd.f32 %v3526, %v3694
        %3696 = vmatmul.bf16.gmra.mxu0 %v3239
        %v3697 = vpop.f32.mrf.mxu0
        %v3698 = vadd.f32 %v3529, %v3697
        %v3699 = vpop.f32.mrf.mxu0
        %v3700 = vadd.f32 %v3531, %v3699
        %3701 = vmatmul.bf16.gmra.mxu0 %v3243
        %v3702 = vpop.f32.mrf.mxu0
        %v3703 = vadd.f32 %v3534, %v3702
        %v3704 = vpop.f32.mrf.mxu0
        %v3705 = vadd.f32 %v3536, %v3704
        %3706 = vmatmul.bf16.gmra.mxu0 %v3247
        %v3707 = vpop.f32.mrf.mxu0
        %v3708 = vadd.f32 %v3539, %v3707
        %v3709 = vpop.f32.mrf.mxu0
        %v3710 = vadd.f32 %v3541, %v3709
        %3711 = vmatmul.bf16.gmra.mxu0 %v3251
        %v3712 = vpop.f32.mrf.mxu0
        %v3713 = vadd.f32 %v3544, %v3712
        %v3714 = vpop.f32.mrf.mxu0
        %v3715 = vadd.f32 %v3546, %v3714
        %3716 = vmatmul.bf16.gmra.mxu0 %v3255
        %v3717 = vpop.f32.mrf.mxu0
        %v3718 = vadd.f32 %v3549, %v3717
        %v3719 = vpop.f32.mrf.mxu0
        %v3720 = vadd.f32 %v3551, %v3719
        %3721 = vmatmul.bf16.gmra.mxu0 %v3259
        %v3722 = vpop.f32.mrf.mxu0
        %v3723 = vadd.f32 %v3554, %v3722
        %v3724 = vpop.f32.mrf.mxu0
        %v3725 = vadd.f32 %v3556, %v3724
        %3726 = vmatmul.bf16.gmra.mxu0 %v3263
        %v3727 = vpop.f32.mrf.mxu0
        %v3728 = vadd.f32 %v3559, %v3727
        %v3729 = vpop.f32.mrf.mxu0
        %v3730 = vadd.f32 %v3561, %v3729
        %3731 = vdwg.mxu0
        %3732 = vmatpush.bf16.msra.mxu0 %v2489
        %3733 = vmatpush.bf16.msra.mxu0 %v2488
        %3734 = vmatpush.bf16.msra.mxu0 %v2487
        %3735 = vmatpush.bf16.msra.mxu0 %v2486
        %3736 = vmatpush.bf16.msra.mxu0 %v2485
        %3737 = vmatpush.bf16.msra.mxu0 %v2484
        %3738 = vmatpush.bf16.msra.mxu0 %v2483
        %3739 = vmatpush.bf16.msra.mxu0 %v2482
        %3740 = vmatmul.bf16.gmra.mxu0 %v3140
        %v3741 = vpop.f32.mrf.mxu0
        %v3742 = vadd.f32 %v3573, %v3741
        %v3743 = vpop.f32.mrf.mxu0
        %v3744 = vadd.f32 %v3575, %v3743
        %3745 = vmatmul.bf16.gmra.mxu0 %v3144
        %v3746 = vpop.f32.mrf.mxu0
        %v3747 = vadd.f32 %v3578, %v3746
        %v3748 = vpop.f32.mrf.mxu0
        %v3749 = vadd.f32 %v3580, %v3748
        %3750 = vmatmul.bf16.gmra.mxu0 %v3148
        %v3751 = vpop.f32.mrf.mxu0
        %v3752 = vadd.f32 %v3583, %v3751
        %v3753 = vpop.f32.mrf.mxu0
        %v3754 = vadd.f32 %v3585, %v3753
        %3755 = vmatmul.bf16.gmra.mxu0 %v3152
        %v3756 = vpop.f32.mrf.mxu0
        %v3757 = vadd.f32 %v3588, %v3756
        %v3758 = vpop.f32.mrf.mxu0
        %v3759 = vadd.f32 %v3590, %v3758
        %3760 = vmatmul.bf16.gmra.mxu0 %v3156
        %v3761 = vpop.f32.mrf.mxu0
        %v3762 = vadd.f32 %v3593, %v3761
        %v3763 = vpop.f32.mrf.mxu0
        %v3764 = vadd.f32 %v3595, %v3763
        %3765 = vmatmul.bf16.gmra.mxu0 %v3160
        %v3766 = vpop.f32.mrf.mxu0
        %v3767 = vadd.f32 %v3598, %v3766
        %v3768 = vpop.f32.mrf.mxu0
        %v3769 = vadd.f32 %v3600, %v3768
        %3770 = vmatmul.bf16.gmra.mxu0 %v3164
        %v3771 = vpop.f32.mrf.mxu0
        %v3772 = vadd.f32 %v3603, %v3771
        %v3773 = vpop.f32.mrf.mxu0
        %v3774 = vadd.f32 %v3605, %v3773
        %3775 = vmatmul.bf16.gmra.mxu0 %v3168
        %v3776 = vpop.f32.mrf.mxu0
        %v3777 = vadd.f32 %v3608, %v3776
        %v3778 = vpop.f32.mrf.mxu0
        %v3779 = vadd.f32 %v3610, %v3778
        %3780 = vmatmul.bf16.gmra.mxu0 %v3172
        %v3781 = vpop.f32.mrf.mxu0
        %v3782 = vadd.f32 %v3613, %v3781
        %v3783 = vpop.f32.mrf.mxu0
        %v3784 = vadd.f32 %v3615, %v3783
        %3785 = vmatmul.bf16.gmra.mxu0 %v3176
        %v3786 = vpop.f32.mrf.mxu0
        %v3787 = vadd.f32 %v3618, %v3786
        %v3788 = vpop.f32.mrf.mxu0
        %v3789 = vadd.f32 %v3620, %v3788
        %3790 = vmatmul.bf16.gmra.mxu0 %v3180
        %v3791 = vpop.f32.mrf.mxu0
        %v3792 = vadd.f32 %v3623, %v3791
        %v3793 = vpop.f32.mrf.mxu0
        %v3794 = vadd.f32 %v3625, %v3793
        %3795 = vmatmul.bf16.gmra.mxu0 %v3184
        %v3796 = vpop.f32.mrf.mxu0
        %v3797 = vadd.f32 %v3628, %v3796
        %v3798 = vpop.f32.mrf.mxu0
        %v3799 = vadd.f32 %v3630, %v3798
        %3800 = vmatmul.bf16.gmra.mxu0 %v3188
        %v3801 = vpop.f32.mrf.mxu0
        %v3802 = vadd.f32 %v3633, %v3801
        %v3803 = vpop.f32.mrf.mxu0
        %v3804 = vadd.f32 %v3635, %v3803
        %3805 = vmatmul.bf16.gmra.mxu0 %v3192
        %v3806 = vpop.f32.mrf.mxu0
        %v3807 = vadd.f32 %v3638, %v3806
        %v3808 = vpop.f32.mrf.mxu0
        %v3809 = vadd.f32 %v3640, %v3808
        %3810 = vmatmul.bf16.gmra.mxu0 %v3196
        %v3811 = vpop.f32.mrf.mxu0
        %v3812 = vadd.f32 %v3643, %v3811
        %v3813 = vpop.f32.mrf.mxu0
        %v3814 = vadd.f32 %v3645, %v3813
        %3815 = vmatmul.bf16.gmra.mxu0 %v3200
        %v3816 = vpop.f32.mrf.mxu0
        %v3817 = vadd.f32 %v3648, %v3816
        %v3818 = vpop.f32.mrf.mxu0
        %v3819 = vadd.f32 %v3650, %v3818
        %3820 = vmatmul.bf16.gmra.mxu0 %v3204
        %v3821 = vpop.f32.mrf.mxu0
        %v3822 = vadd.f32 %v3653, %v3821
        %v3823 = vpop.f32.mrf.mxu0
        %v3824 = vadd.f32 %v3655, %v3823
        %3825 = vmatmul.bf16.gmra.mxu0 %v3208
        %v3826 = vpop.f32.mrf.mxu0
        %v3827 = vadd.f32 %v3658, %v3826
        %v3828 = vpop.f32.mrf.mxu0
        %v3829 = vadd.f32 %v3660, %v3828
        %3830 = vmatmul.bf16.gmra.mxu0 %v3212
        %v3831 = vpop.f32.mrf.mxu0
        %v3832 = vadd.f32 %v3663, %v3831
        %v3833 = vpop.f32.mrf.mxu0
        %v3834 = vadd.f32 %v3665, %v3833
        %3835 = vmatmul.bf16.gmra.mxu0 %v3216
        %v3836 = vpop.f32.mrf.mxu0
        %v3837 = vadd.f32 %v3668, %v3836
        %v3838 = vpop.f32.mrf.mxu0
        %v3839 = vadd.f32 %v3670, %v3838
        %3840 = vmatmul.bf16.gmra.mxu0 %v3220
        %v3841 = vpop.f32.mrf.mxu0
        %v3842 = vadd.f32 %v3673, %v3841
        %v3843 = vpop.f32.mrf.mxu0
        %v3844 = vadd.f32 %v3675, %v3843
        %3845 = vmatmul.bf16.gmra.mxu0 %v3224
        %v3846 = vpop.f32.mrf.mxu0
        %v3847 = vadd.f32 %v3678, %v3846
        %v3848 = vpop.f32.mrf.mxu0
        %v3849 = vadd.f32 %v3680, %v3848
        %3850 = vmatmul.bf16.gmra.mxu0 %v3228
        %v3851 = vpop.f32.mrf.mxu0
        %v3852 = vadd.f32 %v3683, %v3851
        %v3853 = vpop.f32.mrf.mxu0
        %v3854 = vadd.f32 %v3685, %v3853
        %3855 = vmatmul.bf16.gmra.mxu0 %v3232
        %v3856 = vpop.f32.mrf.mxu0
        %v3857 = vadd.f32 %v3688, %v3856
        %v3858 = vpop.f32.mrf.mxu0
        %v3859 = vadd.f32 %v3690, %v3858
        %3860 = vmatmul.bf16.gmra.mxu0 %v3236
        %v3861 = vpop.f32.mrf.mxu0
        %v3862 = vadd.f32 %v3693, %v3861
        %v3863 = vpop.f32.mrf.mxu0
        %v3864 = vadd.f32 %v3695, %v3863
        %3865 = vmatmul.bf16.gmra.mxu0 %v3240
        %v3866 = vpop.f32.mrf.mxu0
        %v3867 = vadd.f32 %v3698, %v3866
        %v3868 = vpop.f32.mrf.mxu0
        %v3869 = vadd.f32 %v3700, %v3868
        %3870 = vmatmul.bf16.gmra.mxu0 %v3244
        %v3871 = vpop.f32.mrf.mxu0
        %v3872 = vadd.f32 %v3703, %v3871
        %v3873 = vpop.f32.mrf.mxu0
        %v3874 = vadd.f32 %v3705, %v3873
        %3875 = vmatmul.bf16.gmra.mxu0 %v3248
        %v3876 = vpop.f32.mrf.mxu0
        %v3877 = vadd.f32 %v3708, %v3876
        %v3878 = vpop.f32.mrf.mxu0
        %v3879 = vadd.f32 %v3710, %v3878
        %3880 = vmatmul.bf16.gmra.mxu0 %v3252
        %v3881 = vpop.f32.mrf.mxu0
        %v3882 = vadd.f32 %v3713, %v3881
        %v3883 = vpop.f32.mrf.mxu0
        %v3884 = vadd.f32 %v3715, %v3883
        %3885 = vmatmul.bf16.gmra.mxu0 %v3256
        %v3886 = vpop.f32.mrf.mxu0
        %v3887 = vadd.f32 %v3718, %v3886
        %v3888 = vpop.f32.mrf.mxu0
        %v3889 = vadd.f32 %v3720, %v3888
        %3890 = vmatmul.bf16.gmra.mxu0 %v3260
        %v3891 = vpop.f32.mrf.mxu0
        %v3892 = vadd.f32 %v3723, %v3891
        %v3893 = vpop.f32.mrf.mxu0
        %v3894 = vadd.f32 %v3725, %v3893
        %3895 = vmatmul.bf16.gmra.mxu0 %v3264
        %v3896 = vpop.f32.mrf.mxu0
        %v3897 = vadd.f32 %v3728, %v3896
        %v3898 = vpop.f32.mrf.mxu0
        %v3899 = vadd.f32 %v3730, %v3898
        %3900 = vdwg.mxu0
        %3901 = vmatpush.bf16.msra.mxu0 %v2497
        %3902 = vmatpush.bf16.msra.mxu0 %v2496
        %3903 = vmatpush.bf16.msra.mxu0 %v2495
        %3904 = vmatpush.bf16.msra.mxu0 %v2494
        %3905 = vmatpush.bf16.msra.mxu0 %v2493
        %3906 = vmatpush.bf16.msra.mxu0 %v2492
        %3907 = vmatpush.bf16.msra.mxu0 %v2491
        %3908 = vmatpush.bf16.msra.mxu0 %v2490
        %3909 = vmatmul.bf16.gmra.mxu0 %v3141
        %v3910 = vpop.f32.mrf.mxu0
        %v3911 = vadd.f32 %v3742, %v3910
        %v3912 = vpop.f32.mrf.mxu0
        %v3913 = vadd.f32 %v3744, %v3912
        %3914 = vmatmul.bf16.gmra.mxu0 %v3145
        %v3915 = vpop.f32.mrf.mxu0
        %v3916 = vadd.f32 %v3747, %v3915
        %v3917 = vpop.f32.mrf.mxu0
        %v3918 = vadd.f32 %v3749, %v3917
        %3919 = vmatmul.bf16.gmra.mxu0 %v3149
        %v3920 = vpop.f32.mrf.mxu0
        %v3921 = vadd.f32 %v3752, %v3920
        %v3922 = vpop.f32.mrf.mxu0
        %v3923 = vadd.f32 %v3754, %v3922
        %3924 = vmatmul.bf16.gmra.mxu0 %v3153
        %v3925 = vpop.f32.mrf.mxu0
        %v3926 = vadd.f32 %v3757, %v3925
        %v3927 = vpop.f32.mrf.mxu0
        %v3928 = vadd.f32 %v3759, %v3927
        %3929 = vmatmul.bf16.gmra.mxu0 %v3157
        %v3930 = vpop.f32.mrf.mxu0
        %v3931 = vadd.f32 %v3762, %v3930
        %v3932 = vpop.f32.mrf.mxu0
        %v3933 = vadd.f32 %v3764, %v3932
        %3934 = vmatmul.bf16.gmra.mxu0 %v3161
        %v3935 = vpop.f32.mrf.mxu0
        %v3936 = vadd.f32 %v3767, %v3935
        %v3937 = vpop.f32.mrf.mxu0
        %v3938 = vadd.f32 %v3769, %v3937
        %3939 = vmatmul.bf16.gmra.mxu0 %v3165
        %v3940 = vpop.f32.mrf.mxu0
        %v3941 = vadd.f32 %v3772, %v3940
        %v3942 = vpop.f32.mrf.mxu0
        %v3943 = vadd.f32 %v3774, %v3942
        %3944 = vmatmul.bf16.gmra.mxu0 %v3169
        %v3945 = vpop.f32.mrf.mxu0
        %v3946 = vadd.f32 %v3777, %v3945
        %v3947 = vpop.f32.mrf.mxu0
        %v3948 = vadd.f32 %v3779, %v3947
        %3949 = vmatmul.bf16.gmra.mxu0 %v3173
        %v3950 = vpop.f32.mrf.mxu0
        %v3951 = vadd.f32 %v3782, %v3950
        %v3952 = vpop.f32.mrf.mxu0
        %v3953 = vadd.f32 %v3784, %v3952
        %3954 = vmatmul.bf16.gmra.mxu0 %v3177
        %v3955 = vpop.f32.mrf.mxu0
        %v3956 = vadd.f32 %v3787, %v3955
        %v3957 = vpop.f32.mrf.mxu0
        %v3958 = vadd.f32 %v3789, %v3957
        %3959 = vmatmul.bf16.gmra.mxu0 %v3181
        %v3960 = vpop.f32.mrf.mxu0
        %v3961 = vadd.f32 %v3792, %v3960
        %v3962 = vpop.f32.mrf.mxu0
        %v3963 = vadd.f32 %v3794, %v3962
        %3964 = vmatmul.bf16.gmra.mxu0 %v3185
        %v3965 = vpop.f32.mrf.mxu0
        %v3966 = vadd.f32 %v3797, %v3965
        %v3967 = vpop.f32.mrf.mxu0
        %v3968 = vadd.f32 %v3799, %v3967
        %3969 = vmatmul.bf16.gmra.mxu0 %v3189
        %v3970 = vpop.f32.mrf.mxu0
        %v3971 = vadd.f32 %v3802, %v3970
        %v3972 = vpop.f32.mrf.mxu0
        %v3973 = vadd.f32 %v3804, %v3972
        %3974 = vmatmul.bf16.gmra.mxu0 %v3193
        %v3975 = vpop.f32.mrf.mxu0
        %v3976 = vadd.f32 %v3807, %v3975
        %v3977 = vpop.f32.mrf.mxu0
        %v3978 = vadd.f32 %v3809, %v3977
        %3979 = vmatmul.bf16.gmra.mxu0 %v3197
        %v3980 = vpop.f32.mrf.mxu0
        %v3981 = vadd.f32 %v3812, %v3980
        %v3982 = vpop.f32.mrf.mxu0
        %v3983 = vadd.f32 %v3814, %v3982
        %3984 = vmatmul.bf16.gmra.mxu0 %v3201
        %v3985 = vpop.f32.mrf.mxu0
        %v3986 = vadd.f32 %v3817, %v3985
        %v3987 = vpop.f32.mrf.mxu0
        %v3988 = vadd.f32 %v3819, %v3987
        %3989 = vmatmul.bf16.gmra.mxu0 %v3205
        %v3990 = vpop.f32.mrf.mxu0
        %v3991 = vadd.f32 %v3822, %v3990
        %v3992 = vpop.f32.mrf.mxu0
        %v3993 = vadd.f32 %v3824, %v3992
        %3994 = vmatmul.bf16.gmra.mxu0 %v3209
        %v3995 = vpop.f32.mrf.mxu0
        %v3996 = vadd.f32 %v3827, %v3995
        %v3997 = vpop.f32.mrf.mxu0
        %v3998 = vadd.f32 %v3829, %v3997
        %3999 = vmatmul.bf16.gmra.mxu0 %v3213
        %v4000 = vpop.f32.mrf.mxu0
        %v4001 = vadd.f32 %v3832, %v4000
        %v4002 = vpop.f32.mrf.mxu0
        %v4003 = vadd.f32 %v3834, %v4002
        %4004 = vmatmul.bf16.gmra.mxu0 %v3217
        %v4005 = vpop.f32.mrf.mxu0
        %v4006 = vadd.f32 %v3837, %v4005
        %v4007 = vpop.f32.mrf.mxu0
        %v4008 = vadd.f32 %v3839, %v4007
        %4009 = vmatmul.bf16.gmra.mxu0 %v3221
        %v4010 = vpop.f32.mrf.mxu0
        %v4011 = vadd.f32 %v3842, %v4010
        %v4012 = vpop.f32.mrf.mxu0
        %v4013 = vadd.f32 %v3844, %v4012
        %4014 = vmatmul.bf16.gmra.mxu0 %v3225
        %v4015 = vpop.f32.mrf.mxu0
        %v4016 = vadd.f32 %v3847, %v4015
        %v4017 = vpop.f32.mrf.mxu0
        %v4018 = vadd.f32 %v3849, %v4017
        %4019 = vmatmul.bf16.gmra.mxu0 %v3229
        %v4020 = vpop.f32.mrf.mxu0
        %v4021 = vadd.f32 %v3852, %v4020
        %v4022 = vpop.f32.mrf.mxu0
        %v4023 = vadd.f32 %v3854, %v4022
        %4024 = vmatmul.bf16.gmra.mxu0 %v3233
        %v4025 = vpop.f32.mrf.mxu0
        %v4026 = vadd.f32 %v3857, %v4025
        %v4027 = vpop.f32.mrf.mxu0
        %v4028 = vadd.f32 %v3859, %v4027
        %4029 = vmatmul.bf16.gmra.mxu0 %v3237
        %v4030 = vpop.f32.mrf.mxu0
        %v4031 = vadd.f32 %v3862, %v4030
        %v4032 = vpop.f32.mrf.mxu0
        %v4033 = vadd.f32 %v3864, %v4032
        %4034 = vmatmul.bf16.gmra.mxu0 %v3241
        %v4035 = vpop.f32.mrf.mxu0
        %v4036 = vadd.f32 %v3867, %v4035
        %v4037 = vpop.f32.mrf.mxu0
        %v4038 = vadd.f32 %v3869, %v4037
        %4039 = vmatmul.bf16.gmra.mxu0 %v3245
        %v4040 = vpop.f32.mrf.mxu0
        %v4041 = vadd.f32 %v3872, %v4040
        %v4042 = vpop.f32.mrf.mxu0
        %v4043 = vadd.f32 %v3874, %v4042
        %4044 = vmatmul.bf16.gmra.mxu0 %v3249
        %v4045 = vpop.f32.mrf.mxu0
        %v4046 = vadd.f32 %v3877, %v4045
        %v4047 = vpop.f32.mrf.mxu0
        %v4048 = vadd.f32 %v3879, %v4047
        %4049 = vmatmul.bf16.gmra.mxu0 %v3253
        %v4050 = vpop.f32.mrf.mxu0
        %v4051 = vadd.f32 %v3882, %v4050
        %v4052 = vpop.f32.mrf.mxu0
        %v4053 = vadd.f32 %v3884, %v4052
        %4054 = vmatmul.bf16.gmra.mxu0 %v3257
        %v4055 = vpop.f32.mrf.mxu0
        %v4056 = vadd.f32 %v3887, %v4055
        %v4057 = vpop.f32.mrf.mxu0
        %v4058 = vadd.f32 %v3889, %v4057
        %4059 = vmatmul.bf16.gmra.mxu0 %v3261
        %v4060 = vpop.f32.mrf.mxu0
        %v4061 = vadd.f32 %v3892, %v4060
        %v4062 = vpop.f32.mrf.mxu0
        %v4063 = vadd.f32 %v3894, %v4062
        %4064 = vmatmul.bf16.gmra.mxu0 %v3265
        %v4065 = vpop.f32.mrf.mxu0
        %v4066 = vadd.f32 %v3897, %v4065
        %v4067 = vpop.f32.mrf.mxu0
        %v4068 = vadd.f32 %v3899, %v4067
        %4069 = vdwg.mxu0
        %v4070 = vmax.f32 %v3911, 0.0
        %v4071 = vmax.f32 %v3913, 0.0
        %v4072 = vmax.f32 %v3916, 0.0
        %v4073 = vmax.f32 %v3918, 0.0
        %v4074 = vmax.f32 %v3921, 0.0
        %v4075 = vmax.f32 %v3923, 0.0
        %v4076 = vmax.f32 %v3926, 0.0
        %v4077 = vmax.f32 %v3928, 0.0
        %v4078 = vmax.f32 %v3931, 0.0
        %v4079 = vmax.f32 %v3933, 0.0
        %v4080 = vmax.f32 %v3936, 0.0
        %v4081 = vmax.f32 %v3938, 0.0
        %v4082 = vmax.f32 %v3941, 0.0
        %v4083 = vmax.f32 %v3943, 0.0
        %v4084 = vmax.f32 %v3946, 0.0
        %v4085 = vmax.f32 %v3948, 0.0
        %v4086 = vmax.f32 %v3951, 0.0
        %v4087 = vmax.f32 %v3953, 0.0
        %v4088 = vmax.f32 %v3956, 0.0
        %v4089 = vmax.f32 %v3958, 0.0
        %v4090 = vmax.f32 %v3961, 0.0
        %v4091 = vmax.f32 %v3963, 0.0
        %v4092 = vmax.f32 %v3966, 0.0
        %v4093 = vmax.f32 %v3968, 0.0
        %v4094 = vmax.f32 %v3971, 0.0
        %v4095 = vmax.f32 %v3973, 0.0
        %v4096 = vmax.f32 %v3976, 0.0
        %v4097 = vmax.f32 %v3978, 0.0
        %v4098 = vmax.f32 %v3981, 0.0
        %v4099 = vmax.f32 %v3983, 0.0
        %v4100 = vmax.f32 %v3986, 0.0
        %v4101 = vmax.f32 %v3988, 0.0
        %v4102 = vmax.f32 %v3991, 0.0
        %v4103 = vmax.f32 %v3993, 0.0
        %v4104 = vmax.f32 %v3996, 0.0
        %v4105 = vmax.f32 %v3998, 0.0
        %v4106 = vmax.f32 %v4001, 0.0
        %v4107 = vmax.f32 %v4003, 0.0
        %v4108 = vmax.f32 %v4006, 0.0
        %v4109 = vmax.f32 %v4008, 0.0
        %v4110 = vmax.f32 %v4011, 0.0
        %v4111 = vmax.f32 %v4013, 0.0
        %v4112 = vmax.f32 %v4016, 0.0
        %v4113 = vmax.f32 %v4018, 0.0
        %v4114 = vmax.f32 %v4021, 0.0
        %v4115 = vmax.f32 %v4023, 0.0
        %v4116 = vmax.f32 %v4026, 0.0
        %v4117 = vmax.f32 %v4028, 0.0
        %v4118 = vmax.f32 %v4031, 0.0
        %v4119 = vmax.f32 %v4033, 0.0
        %v4120 = vmax.f32 %v4036, 0.0
        %v4121 = vmax.f32 %v4038, 0.0
        %v4122 = vmax.f32 %v4041, 0.0
        %v4123 = vmax.f32 %v4043, 0.0
        %v4124 = vmax.f32 %v4046, 0.0
        %v4125 = vmax.f32 %v4048, 0.0
        %v4126 = vmax.f32 %v4051, 0.0
        %v4127 = vmax.f32 %v4053, 0.0
        %v4128 = vmax.f32 %v4056, 0.0
        %v4129 = vmax.f32 %v4058, 0.0
        %v4130 = vmax.f32 %v4061, 0.0
        %v4131 = vmax.f32 %v4063, 0.0
        %v4132 = vmax.f32 %v4066, 0.0
        %v4133 = vmax.f32 %v4068, 0.0
        %4134 = vset.pattern.permute.xlu0 2
        %4135 = vperm.xlu0 %4134, %v221
        %v4136 = vpop.permute.xlu0 %4135
        %4138 = vset.pattern.permute.xlu0 2
        %4139 = vperm.xlu0 %4138, %v222
        %v4140 = vpop.permute.xlu0 %4139
        %4142 = vset.pattern.permute.xlu0 2
        %4143 = vperm.xlu0 %4142, %v223
        %v4144 = vpop.permute.xlu0 %4143
        %4146 = vset.pattern.permute.xlu0 2
        %4147 = vperm.xlu0 %4146, %v224
        %v4148 = vpop.permute.xlu0 %4147
        %4150 = vset.pattern.permute.xlu0 2
        %4151 = vperm.xlu0 %4150, %v225
        %v4152 = vpop.permute.xlu0 %4151
        %4154 = vset.pattern.permute.xlu0 2
        %4155 = vperm.xlu0 %4154, %v226
        %v4156 = vpop.permute.xlu0 %4155
        %4158 = vset.pattern.permute.xlu0 2
        %4159 = vperm.xlu0 %4158, %v227
        %v4160 = vpop.permute.xlu0 %4159
        %4162 = vset.pattern.permute.xlu0 2
        %4163 = vperm.xlu0 %4162, %v228
        %v4164 = vpop.permute.xlu0 %4163
        %4166 = vset.pattern.permute.xlu0 2
        %4167 = vperm.xlu0 %4166, %v229
        %v4168 = vpop.permute.xlu0 %4167
        %4170 = vset.pattern.permute.xlu0 2
        %4171 = vperm.xlu0 %4170, %v230
        %v4172 = vpop.permute.xlu0 %4171
        %4174 = vset.pattern.permute.xlu0 2
        %4175 = vperm.xlu0 %4174, %v231
        %v4176 = vpop.permute.xlu0 %4175
        %4178 = vset.pattern.permute.xlu0 2
        %4179 = vperm.xlu0 %4178, %v232
        %v4180 = vpop.permute.xlu0 %4179
        %4182 = vset.pattern.permute.xlu0 2
        %4183 = vperm.xlu0 %4182, %v233
        %v4184 = vpop.permute.xlu0 %4183
        %4186 = vset.pattern.permute.xlu0 2
        %4187 = vperm.xlu0 %4186, %v234
        %v4188 = vpop.permute.xlu0 %4187
        %4190 = vset.pattern.permute.xlu0 2
        %4191 = vperm.xlu0 %4190, %v235
        %v4192 = vpop.permute.xlu0 %4191
        %4194 = vset.pattern.permute.xlu0 2
        %4195 = vperm.xlu0 %4194, %v236
        %v4196 = vpop.permute.xlu0 %4195
        %4198 = vset.pattern.permute.xlu0 2
        %4199 = vperm.xlu0 %4198, %v237
        %v4200 = vpop.permute.xlu0 %4199
        %4202 = vset.pattern.permute.xlu0 2
        %4203 = vperm.xlu0 %4202, %v238
        %v4204 = vpop.permute.xlu0 %4203
        %4206 = vset.pattern.permute.xlu0 2
        %4207 = vperm.xlu0 %4206, %v239
        %v4208 = vpop.permute.xlu0 %4207
        %4210 = vset.pattern.permute.xlu0 2
        %4211 = vperm.xlu0 %4210, %v240
        %v4212 = vpop.permute.xlu0 %4211
        %4214 = vset.pattern.permute.xlu0 2
        %4215 = vperm.xlu0 %4214, %v241
        %v4216 = vpop.permute.xlu0 %4215
        %4218 = vset.pattern.permute.xlu0 2
        %4219 = vperm.xlu0 %4218, %v242
        %v4220 = vpop.permute.xlu0 %4219
        %4222 = vset.pattern.permute.xlu0 2
        %4223 = vperm.xlu0 %4222, %v243
        %v4224 = vpop.permute.xlu0 %4223
        %4226 = vset.pattern.permute.xlu0 2
        %4227 = vperm.xlu0 %4226, %v244
        %v4228 = vpop.permute.xlu0 %4227
        %4230 = vset.pattern.permute.xlu0 2
        %4231 = vperm.xlu0 %4230, %v245
        %v4232 = vpop.permute.xlu0 %4231
        %4234 = vset.pattern.permute.xlu0 2
        %4235 = vperm.xlu0 %4234, %v246
        %v4236 = vpop.permute.xlu0 %4235
        %4238 = vset.pattern.permute.xlu0 2
        %4239 = vperm.xlu0 %4238, %v247
        %v4240 = vpop.permute.xlu0 %4239
        %4242 = vset.pattern.permute.xlu0 2
        %4243 = vperm.xlu0 %4242, %v248
        %v4244 = vpop.permute.xlu0 %4243
        %4246 = vset.pattern.permute.xlu0 2
        %4247 = vperm.xlu0 %4246, %v249
        %v4248 = vpop.permute.xlu0 %4247
        %4250 = vset.pattern.permute.xlu0 2
        %4251 = vperm.xlu0 %4250, %v250
        %v4252 = vpop.permute.xlu0 %4251
        %4254 = vset.pattern.permute.xlu0 2
        %4255 = vperm.xlu0 %4254, %v251
        %v4256 = vpop.permute.xlu0 %4255
        %4258 = vset.pattern.permute.xlu0 2
        %4259 = vperm.xlu0 %4258, %v252
        %v4260 = vpop.permute.xlu0 %4259
        %4262 = vset.pattern.permute.xlu0 2
        %4263 = vperm.xlu0 %4262, %v253
        %v4264 = vpop.permute.xlu0 %4263
        %4266 = vset.pattern.permute.xlu0 2
        %4267 = vperm.xlu0 %4266, %v254
        %v4268 = vpop.permute.xlu0 %4267
        %4270 = vset.pattern.permute.xlu0 2
        %4271 = vperm.xlu0 %4270, %v255
        %v4272 = vpop.permute.xlu0 %4271
        %4274 = vset.pattern.permute.xlu0 2
        %4275 = vperm.xlu0 %4274, %v256
        %v4276 = vpop.permute.xlu0 %4275
        %4278 = vset.pattern.permute.xlu0 2
        %4279 = vperm.xlu0 %4278, %v257
        %v4280 = vpop.permute.xlu0 %4279
        %4282 = vset.pattern.permute.xlu0 2
        %4283 = vperm.xlu0 %4282, %v258
        %v4284 = vpop.permute.xlu0 %4283
        %4286 = vset.pattern.permute.xlu0 2
        %4287 = vperm.xlu0 %4286, %v259
        %v4288 = vpop.permute.xlu0 %4287
        %4290 = vset.pattern.permute.xlu0 2
        %4291 = vperm.xlu0 %4290, %v260
        %v4292 = vpop.permute.xlu0 %4291
        %4294 = vset.pattern.permute.xlu0 2
        %4295 = vperm.xlu0 %4294, %v261
        %v4296 = vpop.permute.xlu0 %4295
        %4298 = vset.pattern.permute.xlu0 2
        %4299 = vperm.xlu0 %4298, %v262
        %v4300 = vpop.permute.xlu0 %4299
        %4302 = vset.pattern.permute.xlu0 2
        %4303 = vperm.xlu0 %4302, %v263
        %v4304 = vpop.permute.xlu0 %4303
        %4306 = vset.pattern.permute.xlu0 2
        %4307 = vperm.xlu0 %4306, %v264
        %v4308 = vpop.permute.xlu0 %4307
        %4310 = vset.pattern.permute.xlu0 2
        %4311 = vperm.xlu0 %4310, %v265
        %v4312 = vpop.permute.xlu0 %4311
        %4314 = vset.pattern.permute.xlu0 2
        %4315 = vperm.xlu0 %4314, %v266
        %v4316 = vpop.permute.xlu0 %4315
        %4318 = vset.pattern.permute.xlu0 2
        %4319 = vperm.xlu0 %4318, %v267
        %v4320 = vpop.permute.xlu0 %4319
        %4322 = vset.pattern.permute.xlu0 2
        %4323 = vperm.xlu0 %4322, %v268
        %v4324 = vpop.permute.xlu0 %4323
        %4326 = vset.pattern.permute.xlu0 2
        %4327 = vperm.xlu0 %4326, %v269
        %v4328 = vpop.permute.xlu0 %4327
        %4330 = vset.pattern.permute.xlu0 2
        %4331 = vperm.xlu0 %4330, %v270
        %v4332 = vpop.permute.xlu0 %4331
        %4334 = vset.pattern.permute.xlu0 2
        %4335 = vperm.xlu0 %4334, %v271
        %v4336 = vpop.permute.xlu0 %4335
        %4338 = vset.pattern.permute.xlu0 2
        %4339 = vperm.xlu0 %4338, %v272
        %v4340 = vpop.permute.xlu0 %4339
        %4342 = vset.pattern.permute.xlu0 2
        %4343 = vperm.xlu0 %4342, %v273
        %v4344 = vpop.permute.xlu0 %4343
        %4346 = vset.pattern.permute.xlu0 2
        %4347 = vperm.xlu0 %4346, %v274
        %v4348 = vpop.permute.xlu0 %4347
        %4350 = vset.pattern.permute.xlu0 2
        %4351 = vperm.xlu0 %4350, %v275
        %v4352 = vpop.permute.xlu0 %4351
        %4354 = vset.pattern.permute.xlu0 2
        %4355 = vperm.xlu0 %4354, %v276
        %v4356 = vpop.permute.xlu0 %4355
        %4358 = vset.pattern.permute.xlu0 2
        %4359 = vperm.xlu0 %4358, %v277
        %v4360 = vpop.permute.xlu0 %4359
        %4362 = vset.pattern.permute.xlu0 2
        %4363 = vperm.xlu0 %4362, %v278
        %v4364 = vpop.permute.xlu0 %4363
        %4366 = vset.pattern.permute.xlu0 2
        %4367 = vperm.xlu0 %4366, %v279
        %v4368 = vpop.permute.xlu0 %4367
        %4370 = vset.pattern.permute.xlu0 2
        %4371 = vperm.xlu0 %4370, %v280
        %v4372 = vpop.permute.xlu0 %4371
        %4374 = vset.pattern.permute.xlu0 2
        %4375 = vperm.xlu0 %4374, %v281
        %v4376 = vpop.permute.xlu0 %4375
        %4378 = vset.pattern.permute.xlu0 2
        %4379 = vperm.xlu0 %4378, %v282
        %v4380 = vpop.permute.xlu0 %4379
        %4382 = vset.pattern.permute.xlu0 2
        %4383 = vperm.xlu0 %4382, %v283
        %v4384 = vpop.permute.xlu0 %4383
        %4386 = vset.pattern.permute.xlu0 2
        %4387 = vperm.xlu0 %4386, %v284
        %v4388 = vpop.permute.xlu0 %4387
        %v4390 = vmul.f32 %v4070, %v4136
        %v4391 = vmul.f32 %v4071, %v4140
        %v4392 = vmul.f32 %v4072, %v4144
        %v4393 = vmul.f32 %v4073, %v4148
        %v4394 = vmul.f32 %v4074, %v4152
        %v4395 = vmul.f32 %v4075, %v4156
        %v4396 = vmul.f32 %v4076, %v4160
        %v4397 = vmul.f32 %v4077, %v4164
        %v4398 = vmul.f32 %v4078, %v4168
        %v4399 = vmul.f32 %v4079, %v4172
        %v4400 = vmul.f32 %v4080, %v4176
        %v4401 = vmul.f32 %v4081, %v4180
        %v4402 = vmul.f32 %v4082, %v4184
        %v4403 = vmul.f32 %v4083, %v4188
        %v4404 = vmul.f32 %v4084, %v4192
        %v4405 = vmul.f32 %v4085, %v4196
        %v4406 = vmul.f32 %v4086, %v4200
        %v4407 = vmul.f32 %v4087, %v4204
        %v4408 = vmul.f32 %v4088, %v4208
        %v4409 = vmul.f32 %v4089, %v4212
        %v4410 = vmul.f32 %v4090, %v4216
        %v4411 = vmul.f32 %v4091, %v4220
        %v4412 = vmul.f32 %v4092, %v4224
        %v4413 = vmul.f32 %v4093, %v4228
        %v4414 = vmul.f32 %v4094, %v4232
        %v4415 = vmul.f32 %v4095, %v4236
        %v4416 = vmul.f32 %v4096, %v4240
        %v4417 = vmul.f32 %v4097, %v4244
        %v4418 = vmul.f32 %v4098, %v4248
        %v4419 = vmul.f32 %v4099, %v4252
        %v4420 = vmul.f32 %v4100, %v4256
        %v4421 = vmul.f32 %v4101, %v4260
        %v4422 = vmul.f32 %v4102, %v4264
        %v4423 = vmul.f32 %v4103, %v4268
        %v4424 = vmul.f32 %v4104, %v4272
        %v4425 = vmul.f32 %v4105, %v4276
        %v4426 = vmul.f32 %v4106, %v4280
        %v4427 = vmul.f32 %v4107, %v4284
        %v4428 = vmul.f32 %v4108, %v4288
        %v4429 = vmul.f32 %v4109, %v4292
        %v4430 = vmul.f32 %v4110, %v4296
        %v4431 = vmul.f32 %v4111, %v4300
        %v4432 = vmul.f32 %v4112, %v4304
        %v4433 = vmul.f32 %v4113, %v4308
        %v4434 = vmul.f32 %v4114, %v4312
        %v4435 = vmul.f32 %v4115, %v4316
        %v4436 = vmul.f32 %v4116, %v4320
        %v4437 = vmul.f32 %v4117, %v4324
        %v4438 = vmul.f32 %v4118, %v4328
        %v4439 = vmul.f32 %v4119, %v4332
        %v4440 = vmul.f32 %v4120, %v4336
        %v4441 = vmul.f32 %v4121, %v4340
        %v4442 = vmul.f32 %v4122, %v4344
        %v4443 = vmul.f32 %v4123, %v4348
        %v4444 = vmul.f32 %v4124, %v4352
        %v4445 = vmul.f32 %v4125, %v4356
        %v4446 = vmul.f32 %v4126, %v4360
        %v4447 = vmul.f32 %v4127, %v4364
        %v4448 = vmul.f32 %v4128, %v4368
        %v4449 = vmul.f32 %v4129, %v4372
        %v4450 = vmul.f32 %v4130, %v4376
        %v4451 = vmul.f32 %v4131, %v4380
        %v4452 = vmul.f32 %v4132, %v4384
        %v4453 = vmul.f32 %v4133, %v4388
        %v4454 = vadd.f32 %v4390, %v4391
        %v4455 = vadd.f32 %v4454, %v4392
        %v4456 = vadd.f32 %v4455, %v4393
        %v4457 = vadd.f32 %v4456, %v4394
        %v4458 = vadd.f32 %v4457, %v4395
        %v4459 = vadd.f32 %v4458, %v4396
        %v4460 = vadd.f32 %v4459, %v4397
        %v4461 = vadd.f32 %v4460, %v4398
        %v4462 = vadd.f32 %v4461, %v4399
        %v4463 = vadd.f32 %v4462, %v4400
        %v4464 = vadd.f32 %v4463, %v4401
        %v4465 = vadd.f32 %v4464, %v4402
        %v4466 = vadd.f32 %v4465, %v4403
        %v4467 = vadd.f32 %v4466, %v4404
        %v4468 = vadd.f32 %v4467, %v4405
        %v4469 = vadd.f32 %v4468, %v4406
        %v4470 = vadd.f32 %v4469, %v4407
        %v4471 = vadd.f32 %v4470, %v4408
        %v4472 = vadd.f32 %v4471, %v4409
        %v4473 = vadd.f32 %v4472, %v4410
        %v4474 = vadd.f32 %v4473, %v4411
        %v4475 = vadd.f32 %v4474, %v4412
        %v4476 = vadd.f32 %v4475, %v4413
        %v4477 = vadd.f32 %v4476, %v4414
        %v4478 = vadd.f32 %v4477, %v4415
        %v4479 = vadd.f32 %v4478, %v4416
        %v4480 = vadd.f32 %v4479, %v4417
        %v4481 = vadd.f32 %v4480, %v4418
        %v4482 = vadd.f32 %v4481, %v4419
        %v4483 = vadd.f32 %v4482, %v4420
        %v4484 = vadd.f32 %v4483, %v4421
        %v4485 = vadd.f32 %v4484, %v4422
        %v4486 = vadd.f32 %v4485, %v4423
        %v4487 = vadd.f32 %v4486, %v4424
        %v4488 = vadd.f32 %v4487, %v4425
        %v4489 = vadd.f32 %v4488, %v4426
        %v4490 = vadd.f32 %v4489, %v4427
        %v4491 = vadd.f32 %v4490, %v4428
        %v4492 = vadd.f32 %v4491, %v4429
        %v4493 = vadd.f32 %v4492, %v4430
        %v4494 = vadd.f32 %v4493, %v4431
        %v4495 = vadd.f32 %v4494, %v4432
        %v4496 = vadd.f32 %v4495, %v4433
        %v4497 = vadd.f32 %v4496, %v4434
        %v4498 = vadd.f32 %v4497, %v4435
        %v4499 = vadd.f32 %v4498, %v4436
        %v4500 = vadd.f32 %v4499, %v4437
        %v4501 = vadd.f32 %v4500, %v4438
        %v4502 = vadd.f32 %v4501, %v4439
        %v4503 = vadd.f32 %v4502, %v4440
        %v4504 = vadd.f32 %v4503, %v4441
        %v4505 = vadd.f32 %v4504, %v4442
        %v4506 = vadd.f32 %v4505, %v4443
        %v4507 = vadd.f32 %v4506, %v4444
        %v4508 = vadd.f32 %v4507, %v4445
        %v4509 = vadd.f32 %v4508, %v4446
        %v4510 = vadd.f32 %v4509, %v4447
        %v4511 = vadd.f32 %v4510, %v4448
        %v4512 = vadd.f32 %v4511, %v4449
        %v4513 = vadd.f32 %v4512, %v4450
        %v4514 = vadd.f32 %v4513, %v4451
        %v4515 = vadd.f32 %v4514, %v4452
        %v4516 = vadd.f32 %v4515, %v4453
        %v4517 = vrot.slane %v4516, 4
        %v4518 = vadd.f32 %v4516, %v4517
        %v4519 = vrot.slane %v4518, 2
        %v4520 = vadd.f32 %v4518, %v4519
        %v4521 = vrot.slane %v4520, 1
        %v4522 = vadd.f32 %v4520, %v4521
        %4524 = vset.pattern.permute.xlu0 3
        %4525 = vperm.xlu0 %4524, %v285
        %v4526 = vpop.permute.xlu0 %4525
        %v4528 = vadd.f32 %v4522, %v4526
        %4529 = vst [vmem:[%s211] sm:$0x1] %v4528
        %s4530 = sand.u32 %s131, 1
        %s4531 = scalar_lea.sflag [#allocation3], %s4530
        %s4532 = sand.u32 %s131, 1
        %s4533 = scalar_lea.vmem [#allocation2], %s4532
        // Predicated region
        $region37: #{tpu_custom_call.1} parent=35 // pred_check
          %p4534 = pneg %p141
        $region38: #{tpu_custom_call.1} parent=35 // pred_check_branch
          %4536 = sbr.rel (%p4534) target = $region40
        $region39: #{tpu_custom_call.1} parent=35 // pred_region
          %4538 = vsyncadd %s4531, 0
          %s4539 = smul.addr %s22, 2
          %s4540 = sadd.s32 %s23, %s4539
          %s4541 = scalar_lea.hbm %s4, %s4540
          %s4543 = sshll.u32 %s4533, 4
          %s4544 = int_to_ptr.vmem [resolvable:$true] %s4543
          %s4545 = sshll.u32 %s4541, 4
          %s4546 = int_to_ptr.hbm [resolvable:$true] %s4545
          %4548 = dma.vmem_to_hbm [thread:$0]  %s4544, 16, %s4546, %s4531
        $region40: #{tpu_custom_call.1} parent=35 // pred_fallthru
          _
      $region36: #{tpu_custom_call.1} parent=5 // pred_fallthru
        _
      %p4549 = scmp.le.s32.totalorder 2, %s13
      // Predicated region
      $region41: #{tpu_custom_call.1} parent=5 // pred_check
        %p4550 = pneg %p4549
      $region42: #{tpu_custom_call.1} parent=5 // pred_check_branch
        %4552 = sbr.rel (%p4550) target = $region44
      $region43: #{tpu_custom_call.1} parent=5 // pred_region
        %s4553 = ssub.s32 %s13, 2
        // Predicated region
        $region45: #{tpu_custom_call.1} parent=43 // pred_check
          %p4554 = pneg %p147
        $region46: #{tpu_custom_call.1} parent=43 // pred_check_branch
          %4556 = sbr.rel (%p4554) target = $region48
        $region47: #{tpu_custom_call.1} parent=43 // pred_region
          %s4557 = sand.u32 %s132, 1
          %s4558 = scalar_lea.sflag [#allocation3], %s4557
          %s4559 = sand.u32 %s132, 1
          %s4560 = scalar_lea.vmem [#allocation2], %s4559
          %4562 = dma.done %s4558, 16
        $region48: #{tpu_custom_call.1} parent=43 // pred_fallthru
          _
      $region44: #{tpu_custom_call.1} parent=5 // pred_fallthru
        _
    $region6: #{tpu_custom_call.1} parent=1 // loop_footer
      %s17 = sadd.s32 1, %s13
    $region7: #{tpu_custom_call.1} parent=1 // loop_footer_branch
      %12 = sbr.rel target = $region3
    $region8: #{tpu_custom_call.1} parent=1 // loop_exit
      _
    %4563 = vsyncpa [#allocation3], 1
    %s4564 = scalar_lea.sflag [#allocation3], 1
    %4565 = vsyncpa %s4564, 1

</llo_original>
